<compile_context>
chip_gen: v7x
topology: tpu7x:2x2x1
jax: 0.10.0
libtpu: 0.0.40
codegen_flags: <defaults>
</compile_context>

<pallas_src>
import functools

import jax
import jax.numpy as jnp
from jax.experimental import pallas as pl
from jax.experimental.pallas import tpu as pltpu


# ---------------------------------------------------------------------------
# Kernels
# ---------------------------------------------------------------------------

def _conv_accum(x_ref, w_ref, row_tile_idx, *, TH, Wo, stride, dilation,
                kH, kW, Cp):
    """Accumulate the kH*kW taps for one (TH*Wo)-row output tile.

    x_ref: (1, Hp, Wp, Cin) f32   whole zero-padded image of this batch elem
    w_ref: (kH, kW, Cin, Cp) bf16 folded weights (Cout zero-padded to Cp)
    returns (TH*Wo, Cp) f32
    """
    Cin = x_ref.shape[-1]
    TM = TH * Wo
    h0 = row_tile_idx * (TH * stride)
    hl = (TH - 1) * stride + 1
    wl = (Wo - 1) * stride + 1
    acc = jnp.zeros((TM, Cp), jnp.float32)
    for kh in range(kH):
        for kw in range(kW):
            tap = x_ref[0,
                        pl.ds(h0 + kh * dilation, hl),
                        pl.ds(kw * dilation, wl),
                        :]
            if stride > 1:
                tap = tap[::stride, ::stride, :]
            tap = tap.reshape(TM, Cin).astype(jnp.bfloat16)
            acc = acc + jnp.dot(tap, w_ref[kh, kw, :, :],
                                preferred_element_type=jnp.float32)
    return acc


def _conv_stats_kernel(x_ref, w_ref, y_ref, stats_ref, *, TH, Wo, stride,
                       dilation, kH, kW, Cp):
    """Conv row tile + per-tile partial channel statistics (BN path, pass 1)."""
    acc = _conv_accum(x_ref, w_ref, pl.program_id(1), TH=TH, Wo=Wo,
                      stride=stride, dilation=dilation, kH=kH, kW=kW, Cp=Cp)
    y_ref[...] = acc.astype(y_ref.dtype)          # bf16 intermediate to HBM
    # Per-tile partial sums in f32 (reduced later in the wrapper). Padded
    # rows / channels are exact zeros (no bias in this pass), so they do not
    # perturb the statistics when dividing by the real element count.
    stats_ref[0, 0:1, :] = jnp.sum(acc, axis=0, keepdims=True)
    stats_ref[0, 1:2, :] = jnp.sum(acc * acc, axis=0, keepdims=True)


def _scale_shift_act_kernel(y_ref, scale_ref, shift_ref, o_ref, *, use_relu):
    """BN finalize: y * scale + shift (+ ReLU).  Pure FMA epilogue."""
    y = y_ref[...].astype(jnp.float32) * scale_ref[...] + shift_ref[...]
    if use_relu:
        y = jnp.maximum(y, 0.0)
    o_ref[...] = y.astype(o_ref.dtype)


def _conv_bias_act_kernel(x_ref, w_ref, b_ref, o_ref, *, TH, Wo, stride,
                          dilation, kH, kW, Cp, use_bias, use_relu):
    """No-BatchNorm path: conv (+ bias) (+ ReLU) in a single pass."""
    acc = _conv_accum(x_ref, w_ref, pl.program_id(1), TH=TH, Wo=Wo,
                      stride=stride, dilation=dilation, kH=kH, kW=kW, Cp=Cp)
    if use_bias:
        acc = acc + b_ref[...]
    if use_relu:
        acc = jnp.maximum(acc, 0.0)
    o_ref[...] = acc.astype(o_ref.dtype)


# ---------------------------------------------------------------------------
# Wrapper
# ---------------------------------------------------------------------------

def _round_up(x, m):
    return (x + m - 1) // m * m


def conv2d_batchnorm_relu(x_nchw, weight, bias, gamma, beta, *,
                          stride=1, padding=1, dilation=1, eps=1e-5,
                          use_bias=True, is_batchnorm=True, use_relu=True,
                          row_tile=512):
    """Pallas implementation of conv2DBatchNormRelu.forward (NCHW in/out)."""
    N, Cin, H, W = x_nchw.shape
    Cout, _, kH, kW = weight.shape
    out_dtype = x_nchw.dtype
    out_bytes = jnp.dtype(out_dtype).itemsize

    Ho = (H + 2 * padding - dilation * (kH - 1) - 1) // stride + 1
    Wo = (W + 2 * padding - dilation * (kW - 1) - 1) // stride + 1
    Cp = _round_up(Cout, 128)                     # lane-dense output channels

    # Row tile = TH full output rows; keep TH*Wo a multiple of 8 (sublanes).
    TH = min(Ho, max(1, row_tile // max(Wo, 1)))
    while (TH * Wo) % 8 != 0:
        TH += 1
    n_h = -(-Ho // TH)                            # cdiv
    Ho_pad = n_h * TH
    TM = TH * Wo
    n_tiles = N * n_h
    rows_pad = n_tiles * TM                       # == N * Ho_pad * Wo
    rows = N * Ho * Wo                            # real per-channel count (BN)

    # ---- wrapper glue (plain JAX, fused by XLA): NCHW->NHWC + zero pad -----
    # NOTE: transposes kept so the module keeps PyTorch's NCHW contract.
    Hp_need = (Ho_pad - 1) * stride + (kH - 1) * dilation + 1
    x = jnp.transpose(x_nchw, (0, 2, 3, 1)).astype(jnp.float32)
    pad_bottom = padding + max(0, Hp_need - (H + 2 * padding))
    x = jnp.pad(x, ((0, 0), (padding, pad_bottom), (padding, padding), (0, 0)))
    Hp, Wp = x.shape[1], x.shape[2]

    # (Cout, Cin, kH, kW) -> (kH, kW, Cin, Cp), bf16 MXU feed.
    w = jnp.transpose(weight, (2, 3, 1, 0)).astype(jnp.bfloat16)
    w = jnp.pad(w, ((0, 0), (0, 0), (0, 0), (0, Cp - Cout)))

    if bias is None:                              # PyTorch bias=False -> None
        use_bias = False
        bias = jnp.zeros((Cout,), jnp.float32)

    x_spec = pl.BlockSpec((1, Hp, Wp, Cin), lambda n, i: (n, 0, 0, 0))
    w_spec = pl.BlockSpec((kH, kW, Cin, Cp), lambda n, i: (0, 0, 0, 0))
    row_out_spec = pl.BlockSpec((TM, Cp), lambda n, i: (n * n_h + i, 0))
    vec_spec_2d = pl.BlockSpec((1, Cp), lambda n, i: (0, 0))

    conv_flops = 2 * rows_pad * kH * kW * Cin * Cp
    conv_in_bytes = x.size * 4 + w.size * 2
    common = dict(TH=TH, Wo=Wo, stride=stride, dilation=dilation,
                  kH=kH, kW=kW, Cp=Cp)
    cparams_conv = pltpu.CompilerParams(
        dimension_semantics=("parallel", "parallel"),
        vmem_limit_bytes=64 * 1024 * 1024)

    if is_batchnorm:
        # Pass 1: conv + per-tile partial sum / sum-of-squares.
        y, stats = pl.pallas_call(
            functools.partial(_conv_stats_kernel, **common),
            grid=(N, n_h),
            in_specs=[x_spec, w_spec],
            out_specs=(row_out_spec,
                       pl.BlockSpec((1, 2, Cp), lambda n, i: (n * n_h + i, 0, 0))),
            out_shape=(jax.ShapeDtypeStruct((rows_pad, Cp), jnp.bfloat16),
                       jax.ShapeDtypeStruct((n_tiles, 2, Cp), jnp.float32)),
            compiler_params=cparams_conv,
            cost_estimate=pl.CostEstimate(
                flops=conv_flops, transcendentals=0,
                bytes_accessed=conv_in_bytes + rows_pad * Cp * 2
                               + n_tiles * 2 * Cp * 4),
        )(x, w)

        # Tiny reduction + scale/shift precompute in f32 XLA.  Per-tile
        # partials reduce the E[y^2]-E[y]^2 cancellation risk somewhat.
        s = jnp.sum(stats, axis=0)                          # (2, Cp)
        mean = s[0] / rows
        var = jnp.maximum(s[1] / rows - mean * mean, 0.0)
        g_p = jnp.pad(gamma.astype(jnp.float32), (0, Cp - Cout),
                      constant_values=1.0)
        bt_p = jnp.pad(beta.astype(jnp.float32), (0, Cp - Cout))
        scale = (g_p * jax.lax.rsqrt(var + eps)).reshape(1, Cp)
        shift = (bt_p - mean * scale[0]).reshape(1, Cp)

        # Pass 2: y * scale + shift (+ ReLU); independent row tiles.
        out_flat = pl.pallas_call(
            functools.partial(_scale_shift_act_kernel, use_relu=use_relu),
            grid=(n_tiles,),
            in_specs=[pl.BlockSpec((TM, Cp), lambda i: (i, 0)),
                      pl.BlockSpec((1, Cp), lambda i: (0, 0)),
                      pl.BlockSpec((1, Cp), lambda i: (0, 0))],
            out_specs=pl.BlockSpec((TM, Cp), lambda i: (i, 0)),
            out_shape=jax.ShapeDtypeStruct((rows_pad, Cp), out_dtype),
            compiler_params=pltpu.CompilerParams(
                dimension_semantics=("parallel",),
                vmem_limit_bytes=64 * 1024 * 1024),
            cost_estimate=pl.CostEstimate(
                flops=2 * rows_pad * Cp, transcendentals=0,
                bytes_accessed=rows_pad * Cp * (2 + out_bytes) + 2 * Cp * 4),
        )(y, scale, shift)
    else:
        b_p = jnp.pad(bias.astype(jnp.float32), (0, Cp - Cout)).reshape(1, Cp)
        out_flat = pl.pallas_call(
            functools.partial(_conv_bias_act_kernel, use_bias=bool(use_bias),
                              use_relu=use_relu, **common),
            grid=(N, n_h),
            in_specs=[x_spec, w_spec, vec_spec_2d],
            out_specs=row_out_spec,
            out_shape=jax.ShapeDtypeStruct((rows_pad, Cp), out_dtype),
            compiler_params=cparams_conv,
            cost_estimate=pl.CostEstimate(
                flops=conv_flops, transcendentals=0,
                bytes_accessed=conv_in_bytes + rows_pad * Cp * out_bytes),
        )(x, w, b_p)

    out = out_flat.reshape(N, Ho_pad, Wo, Cp)[:, :Ho, :, :Cout]
    return jnp.transpose(out, (0, 3, 1, 2)).astype(out_dtype)


# ---------------------------------------------------------------------------
# Reference + test
# ---------------------------------------------------------------------------

def _reference(x_nchw, weight, bias, gamma, beta, *, stride, padding, dilation,
               eps=1e-5, use_bias=True, is_batchnorm=True, use_relu=True):
    # Quantize conv operands to bf16 to match the kernel's MXU feed (f32 acc).
    xq = x_nchw.astype(jnp.bfloat16).astype(jnp.float32)
    wq = weight.astype(jnp.bfloat16).astype(jnp.float32)
    y = jax.lax.conv_general_dilated(
        xq, wq, window_strides=(stride, stride),
        padding=[(padding, padding), (padding, padding)],
        rhs_dilation=(dilation, dilation),
        dimension_numbers=("NCHW", "OIHW", "NCHW"))
    if is_batchnorm:
        # Conv bias cancels exactly under BN; emulate the kernel's bf16
        # intermediate activation (stats differences are negligible).
        y = y.astype(jnp.bfloat16).astype(jnp.float32)
        mean = jnp.mean(y, axis=(0, 2, 3), keepdims=True)
        var = jnp.mean((y - mean) ** 2, axis=(0, 2, 3), keepdims=True)
        y = (y - mean) * jax.lax.rsqrt(var + eps)
        y = y * gamma.reshape(1, -1, 1, 1) + beta.reshape(1, -1, 1, 1)
    elif use_bias and bias is not None:
        y = y + bias.reshape(1, -1, 1, 1)
    if use_relu:
        y = jnp.maximum(y, 0.0)
    return y


if __name__ == "__main__":
    # Module config: conv2DBatchNormRelu(in_channels=4, n_filters=8, k_size=3,
    #                                    stride=1, padding=1, bias=True)
    N, Cin, H, W = 2, 4, 16, 16
    Cout, kH, kW = 8, 3, 3
    stride, padding, dilation = 1, 1, 1

    key = jax.random.PRNGKey(0)
    kx, kw_, kb = jax.random.split(key, 3)
    x = jax.random.normal(kx, (N, Cin, H, W), dtype=jnp.float32)
    weight = 0.1 * jax.random.normal(kw_, (Cout, Cin, kH, kW), dtype=jnp.float32)
    bias = 0.1 * jax.random.normal(kb, (Cout,), dtype=jnp.float32)
    gamma = jnp.ones((Cout,), jnp.float32)   # BatchNorm2d default init
    beta = jnp.zeros((Cout,), jnp.float32)

    # Default module path: Conv + BN + ReLU.
    out = conv2d_batchnorm_relu(x, weight, bias, gamma, beta,
                                stride=stride, padding=padding,
                                dilation=dilation)
    out = jax.block_until_ready(out)
    ref = _reference(x, weight, bias, gamma, beta,
                     stride=stride, padding=padding, dilation=dilation)
    assert out.shape == (N, Cout, H, W), out.shape
    err = float(jnp.max(jnp.abs(out - ref)))
    # Tolerance widened for the bf16 intermediate activation (review-approved).
    assert err < 2e-2, err

    # is_batchnorm=False branch: Conv + bias + ReLU in a single pass.
    out2 = conv2d_batchnorm_relu(x, weight, bias, gamma, beta,
                                 stride=stride, padding=padding,
                                 dilation=dilation, is_batchnorm=False)
    out2 = jax.block_until_ready(out2)
    ref2 = _reference(x, weight, bias, gamma, beta,
                      stride=stride, padding=padding, dilation=dilation,
                      is_batchnorm=False)
    err2 = float(jnp.max(jnp.abs(out2 - ref2)))
    assert err2 < 2e-2, err2

    print("KERNEL_OK")
</pallas_src>

<mosaic_0001>
module attributes {stable_mosaic.version = 11 : i64} {
  func.func @_conv_stats_kernel(%arg0: i32, %arg1: i32, %arg2: memref<1x18x18x4xf32, #tpu.memory_space<vmem>>, %arg3: memref<3x3x4x128xbf16, #tpu.memory_space<vmem>>, %arg4: memref<256x128xbf16, #tpu.memory_space<vmem>>, %arg5: memref<1x2x128xf32, #tpu.memory_space<vmem>>) attributes {dimension_semantics = [#tpu.dimension_semantics<parallel>, #tpu.dimension_semantics<parallel>], iteration_bounds = array<i64: 2, 1>, scalar_prefetch = 0 : i64, scratch_operands = 0 : i64, tpu.core_type = #tpu.core_type<tc>, window_params = [{transform_indices = @transform_0, window_bounds = array<i64: 1, 18, 18, 4>}, {pipeline_mode = #tpu.pipeline_mode<synchronous>, transform_indices = @transform_1, window_bounds = array<i64: 3, 3, 4, 128>}, {transform_indices = @transform_2, window_bounds = array<i64: 256, 128>}, {transform_indices = @transform_3, window_bounds = array<i64: 1, 2, 128>}]} {
    %c16_i32 = arith.constant 16 : i32
    %0 = arith.muli %arg1, %c16_i32 : i32
    %cst = arith.constant 0.000000e+00 : f32
    %1 = vector.broadcast %cst : f32 to vector<256x128xf32>
    %c0_i32 = arith.constant 0 : i32
    %2 = arith.addi %0, %c0_i32 : i32
    %c0 = arith.constant 0 : index
    %3 = arith.index_cast %2 : i32 to index
    %c0_0 = arith.constant 0 : index
    %c0_1 = arith.constant 0 : index
    %4 = vector.load %arg2[%c0, %3, %c0_0, %c0_1] : memref<1x18x18x4xf32, #tpu.memory_space<vmem>>, vector<1x16x16x4xf32>
    %5 = vector.shape_cast %4 : vector<1x16x16x4xf32> to vector<16x16x4xf32>
    %6 = vector.shape_cast %5 : vector<16x16x4xf32> to vector<256x4xf32>
    %7 = arith.truncf %6 : vector<256x4xf32> to vector<256x4xbf16>
    %c0_2 = arith.constant 0 : index
    %c0_3 = arith.constant 0 : index
    %c0_4 = arith.constant 0 : index
    %c0_5 = arith.constant 0 : index
    %8 = vector.load %arg3[%c0_2, %c0_3, %c0_4, %c0_5] : memref<3x3x4x128xbf16, #tpu.memory_space<vmem>>, vector<1x1x4x128xbf16>
    %9 = vector.shape_cast %8 : vector<1x1x4x128xbf16> to vector<4x128xbf16>
    %cst_6 = arith.constant dense<0.000000e+00> : vector<256x128xf32>
    %10 = tpu.matmul %7, %9, %cst_6 {dimension_numbers = #tpu.dot_dimension_numbers<[1], [0], [0], [1], [0, 0, 1, 1], [], []>} : vector<256x4xbf16>, vector<4x128xbf16>, vector<256x128xf32> -> vector<256x128xf32>
    %11 = arith.addf %1, %10 : vector<256x128xf32>
    %c0_i32_7 = arith.constant 0 : i32
    %12 = arith.addi %0, %c0_i32_7 : i32
    %c0_8 = arith.constant 0 : index
    %13 = arith.index_cast %12 : i32 to index
    %c1 = arith.constant 1 : index
    %c0_9 = arith.constant 0 : index
    %14 = vector.load %arg2[%c0_8, %13, %c1, %c0_9] : memref<1x18x18x4xf32, #tpu.memory_space<vmem>>, vector<1x16x16x4xf32>
    %15 = vector.shape_cast %14 : vector<1x16x16x4xf32> to vector<16x16x4xf32>
    %16 = vector.shape_cast %15 : vector<16x16x4xf32> to vector<256x4xf32>
    %17 = arith.truncf %16 : vector<256x4xf32> to vector<256x4xbf16>
    %c0_10 = arith.constant 0 : index
    %c1_11 = arith.constant 1 : index
    %c0_12 = arith.constant 0 : index
    %c0_13 = arith.constant 0 : index
    %18 = vector.load %arg3[%c0_10, %c1_11, %c0_12, %c0_13] : memref<3x3x4x128xbf16, #tpu.memory_space<vmem>>, vector<1x1x4x128xbf16>
    %19 = vector.shape_cast %18 : vector<1x1x4x128xbf16> to vector<4x128xbf16>
    %cst_14 = arith.constant dense<0.000000e+00> : vector<256x128xf32>
    %20 = tpu.matmul %17, %19, %cst_14 {dimension_numbers = #tpu.dot_dimension_numbers<[1], [0], [0], [1], [0, 0, 1, 1], [], []>} : vector<256x4xbf16>, vector<4x128xbf16>, vector<256x128xf32> -> vector<256x128xf32>
    %21 = arith.addf %11, %20 : vector<256x128xf32>
    %c0_i32_15 = arith.constant 0 : i32
    %22 = arith.addi %0, %c0_i32_15 : i32
    %c0_16 = arith.constant 0 : index
    %23 = arith.index_cast %22 : i32 to index
    %c2 = arith.constant 2 : index
    %c0_17 = arith.constant 0 : index
    %24 = vector.load %arg2[%c0_16, %23, %c2, %c0_17] : memref<1x18x18x4xf32, #tpu.memory_space<vmem>>, vector<1x16x16x4xf32>
    %25 = vector.shape_cast %24 : vector<1x16x16x4xf32> to vector<16x16x4xf32>
    %26 = vector.shape_cast %25 : vector<16x16x4xf32> to vector<256x4xf32>
    %27 = arith.truncf %26 : vector<256x4xf32> to vector<256x4xbf16>
    %c0_18 = arith.constant 0 : index
    %c2_19 = arith.constant 2 : index
    %c0_20 = arith.constant 0 : index
    %c0_21 = arith.constant 0 : index
    %28 = vector.load %arg3[%c0_18, %c2_19, %c0_20, %c0_21] : memref<3x3x4x128xbf16, #tpu.memory_space<vmem>>, vector<1x1x4x128xbf16>
    %29 = vector.shape_cast %28 : vector<1x1x4x128xbf16> to vector<4x128xbf16>
    %cst_22 = arith.constant dense<0.000000e+00> : vector<256x128xf32>
    %30 = tpu.matmul %27, %29, %cst_22 {dimension_numbers = #tpu.dot_dimension_numbers<[1], [0], [0], [1], [0, 0, 1, 1], [], []>} : vector<256x4xbf16>, vector<4x128xbf16>, vector<256x128xf32> -> vector<256x128xf32>
    %31 = arith.addf %21, %30 : vector<256x128xf32>
    %c1_i32 = arith.constant 1 : i32
    %32 = arith.addi %0, %c1_i32 : i32
    %c0_23 = arith.constant 0 : index
    %33 = arith.index_cast %32 : i32 to index
    %c0_24 = arith.constant 0 : index
    %c0_25 = arith.constant 0 : index
    %34 = vector.load %arg2[%c0_23, %33, %c0_24, %c0_25] : memref<1x18x18x4xf32, #tpu.memory_space<vmem>>, vector<1x16x16x4xf32>
    %35 = vector.shape_cast %34 : vector<1x16x16x4xf32> to vector<16x16x4xf32>
    %36 = vector.shape_cast %35 : vector<16x16x4xf32> to vector<256x4xf32>
    %37 = arith.truncf %36 : vector<256x4xf32> to vector<256x4xbf16>
    %c1_26 = arith.constant 1 : index
    %c0_27 = arith.constant 0 : index
    %c0_28 = arith.constant 0 : index
    %c0_29 = arith.constant 0 : index
    %38 = vector.load %arg3[%c1_26, %c0_27, %c0_28, %c0_29] : memref<3x3x4x128xbf16, #tpu.memory_space<vmem>>, vector<1x1x4x128xbf16>
    %39 = vector.shape_cast %38 : vector<1x1x4x128xbf16> to vector<4x128xbf16>
    %cst_30 = arith.constant dense<0.000000e+00> : vector<256x128xf32>
    %40 = tpu.matmul %37, %39, %cst_30 {dimension_numbers = #tpu.dot_dimension_numbers<[1], [0], [0], [1], [0, 0, 1, 1], [], []>} : vector<256x4xbf16>, vector<4x128xbf16>, vector<256x128xf32> -> vector<256x128xf32>
    %41 = arith.addf %31, %40 : vector<256x128xf32>
    %c1_i32_31 = arith.constant 1 : i32
    %42 = arith.addi %0, %c1_i32_31 : i32
    %c0_32 = arith.constant 0 : index
    %43 = arith.index_cast %42 : i32 to index
    %c1_33 = arith.constant 1 : index
    %c0_34 = arith.constant 0 : index
    %44 = vector.load %arg2[%c0_32, %43, %c1_33, %c0_34] : memref<1x18x18x4xf32, #tpu.memory_space<vmem>>, vector<1x16x16x4xf32>
    %45 = vector.shape_cast %44 : vector<1x16x16x4xf32> to vector<16x16x4xf32>
    %46 = vector.shape_cast %45 : vector<16x16x4xf32> to vector<256x4xf32>
    %47 = arith.truncf %46 : vector<256x4xf32> to vector<256x4xbf16>
    %c1_35 = arith.constant 1 : index
    %c1_36 = arith.constant 1 : index
    %c0_37 = arith.constant 0 : index
    %c0_38 = arith.constant 0 : index
    %48 = vector.load %arg3[%c1_35, %c1_36, %c0_37, %c0_38] : memref<3x3x4x128xbf16, #tpu.memory_space<vmem>>, vector<1x1x4x128xbf16>
    %49 = vector.shape_cast %48 : vector<1x1x4x128xbf16> to vector<4x128xbf16>
    %cst_39 = arith.constant dense<0.000000e+00> : vector<256x128xf32>
    %50 = tpu.matmul %47, %49, %cst_39 {dimension_numbers = #tpu.dot_dimension_numbers<[1], [0], [0], [1], [0, 0, 1, 1], [], []>} : vector<256x4xbf16>, vector<4x128xbf16>, vector<256x128xf32> -> vector<256x128xf32>
    %51 = arith.addf %41, %50 : vector<256x128xf32>
    %c1_i32_40 = arith.constant 1 : i32
    %52 = arith.addi %0, %c1_i32_40 : i32
    %c0_41 = arith.constant 0 : index
    %53 = arith.index_cast %52 : i32 to index
    %c2_42 = arith.constant 2 : index
    %c0_43 = arith.constant 0 : index
    %54 = vector.load %arg2[%c0_41, %53, %c2_42, %c0_43] : memref<1x18x18x4xf32, #tpu.memory_space<vmem>>, vector<1x16x16x4xf32>
    %55 = vector.shape_cast %54 : vector<1x16x16x4xf32> to vector<16x16x4xf32>
    %56 = vector.shape_cast %55 : vector<16x16x4xf32> to vector<256x4xf32>
    %57 = arith.truncf %56 : vector<256x4xf32> to vector<256x4xbf16>
    %c1_44 = arith.constant 1 : index
    %c2_45 = arith.constant 2 : index
    %c0_46 = arith.constant 0 : index
    %c0_47 = arith.constant 0 : index
    %58 = vector.load %arg3[%c1_44, %c2_45, %c0_46, %c0_47] : memref<3x3x4x128xbf16, #tpu.memory_space<vmem>>, vector<1x1x4x128xbf16>
    %59 = vector.shape_cast %58 : vector<1x1x4x128xbf16> to vector<4x128xbf16>
    %cst_48 = arith.constant dense<0.000000e+00> : vector<256x128xf32>
    %60 = tpu.matmul %57, %59, %cst_48 {dimension_numbers = #tpu.dot_dimension_numbers<[1], [0], [0], [1], [0, 0, 1, 1], [], []>} : vector<256x4xbf16>, vector<4x128xbf16>, vector<256x128xf32> -> vector<256x128xf32>
    %61 = arith.addf %51, %60 : vector<256x128xf32>
    %c2_i32 = arith.constant 2 : i32
    %62 = arith.addi %0, %c2_i32 : i32
    %c0_49 = arith.constant 0 : index
    %63 = arith.index_cast %62 : i32 to index
    %c0_50 = arith.constant 0 : index
    %c0_51 = arith.constant 0 : index
    %64 = vector.load %arg2[%c0_49, %63, %c0_50, %c0_51] : memref<1x18x18x4xf32, #tpu.memory_space<vmem>>, vector<1x16x16x4xf32>
    %65 = vector.shape_cast %64 : vector<1x16x16x4xf32> to vector<16x16x4xf32>
    %66 = vector.shape_cast %65 : vector<16x16x4xf32> to vector<256x4xf32>
    %67 = arith.truncf %66 : vector<256x4xf32> to vector<256x4xbf16>
    %c2_52 = arith.constant 2 : index
    %c0_53 = arith.constant 0 : index
    %c0_54 = arith.constant 0 : index
    %c0_55 = arith.constant 0 : index
    %68 = vector.load %arg3[%c2_52, %c0_53, %c0_54, %c0_55] : memref<3x3x4x128xbf16, #tpu.memory_space<vmem>>, vector<1x1x4x128xbf16>
    %69 = vector.shape_cast %68 : vector<1x1x4x128xbf16> to vector<4x128xbf16>
    %cst_56 = arith.constant dense<0.000000e+00> : vector<256x128xf32>
    %70 = tpu.matmul %67, %69, %cst_56 {dimension_numbers = #tpu.dot_dimension_numbers<[1], [0], [0], [1], [0, 0, 1, 1], [], []>} : vector<256x4xbf16>, vector<4x128xbf16>, vector<256x128xf32> -> vector<256x128xf32>
    %71 = arith.addf %61, %70 : vector<256x128xf32>
    %c2_i32_57 = arith.constant 2 : i32
    %72 = arith.addi %0, %c2_i32_57 : i32
    %c0_58 = arith.constant 0 : index
    %73 = arith.index_cast %72 : i32 to index
    %c1_59 = arith.constant 1 : index
    %c0_60 = arith.constant 0 : index
    %74 = vector.load %arg2[%c0_58, %73, %c1_59, %c0_60] : memref<1x18x18x4xf32, #tpu.memory_space<vmem>>, vector<1x16x16x4xf32>
    %75 = vector.shape_cast %74 : vector<1x16x16x4xf32> to vector<16x16x4xf32>
    %76 = vector.shape_cast %75 : vector<16x16x4xf32> to vector<256x4xf32>
    %77 = arith.truncf %76 : vector<256x4xf32> to vector<256x4xbf16>
    %c2_61 = arith.constant 2 : index
    %c1_62 = arith.constant 1 : index
    %c0_63 = arith.constant 0 : index
    %c0_64 = arith.constant 0 : index
    %78 = vector.load %arg3[%c2_61, %c1_62, %c0_63, %c0_64] : memref<3x3x4x128xbf16, #tpu.memory_space<vmem>>, vector<1x1x4x128xbf16>
    %79 = vector.shape_cast %78 : vector<1x1x4x128xbf16> to vector<4x128xbf16>
    %cst_65 = arith.constant dense<0.000000e+00> : vector<256x128xf32>
    %80 = tpu.matmul %77, %79, %cst_65 {dimension_numbers = #tpu.dot_dimension_numbers<[1], [0], [0], [1], [0, 0, 1, 1], [], []>} : vector<256x4xbf16>, vector<4x128xbf16>, vector<256x128xf32> -> vector<256x128xf32>
    %81 = arith.addf %71, %80 : vector<256x128xf32>
    %c2_i32_66 = arith.constant 2 : i32
    %82 = arith.addi %0, %c2_i32_66 : i32
    %c0_67 = arith.constant 0 : index
    %83 = arith.index_cast %82 : i32 to index
    %c2_68 = arith.constant 2 : index
    %c0_69 = arith.constant 0 : index
    %84 = vector.load %arg2[%c0_67, %83, %c2_68, %c0_69] : memref<1x18x18x4xf32, #tpu.memory_space<vmem>>, vector<1x16x16x4xf32>
    %85 = vector.shape_cast %84 : vector<1x16x16x4xf32> to vector<16x16x4xf32>
    %86 = vector.shape_cast %85 : vector<16x16x4xf32> to vector<256x4xf32>
    %87 = arith.truncf %86 : vector<256x4xf32> to vector<256x4xbf16>
    %c2_70 = arith.constant 2 : index
    %c2_71 = arith.constant 2 : index
    %c0_72 = arith.constant 0 : index
    %c0_73 = arith.constant 0 : index
    %88 = vector.load %arg3[%c2_70, %c2_71, %c0_72, %c0_73] : memref<3x3x4x128xbf16, #tpu.memory_space<vmem>>, vector<1x1x4x128xbf16>
    %89 = vector.shape_cast %88 : vector<1x1x4x128xbf16> to vector<4x128xbf16>
    %cst_74 = arith.constant dense<0.000000e+00> : vector<256x128xf32>
    %90 = tpu.matmul %87, %89, %cst_74 {dimension_numbers = #tpu.dot_dimension_numbers<[1], [0], [0], [1], [0, 0, 1, 1], [], []>} : vector<256x4xbf16>, vector<4x128xbf16>, vector<256x128xf32> -> vector<256x128xf32>
    %91 = arith.addf %81, %90 : vector<256x128xf32>
    %92 = arith.truncf %91 : vector<256x128xf32> to vector<256x128xbf16>
    %c0_75 = arith.constant 0 : index
    %c0_76 = arith.constant 0 : index
    %93 = vector.load %arg4[%c0_75, %c0_76] : memref<256x128xbf16, #tpu.memory_space<vmem>>, vector<256x128xbf16>
    tpu.vector_store %arg4[%c0_75, %c0_76], %92 {strides = array<i32>} : memref<256x128xbf16, #tpu.memory_space<vmem>>, vector<256x128xbf16>,
    %cst_77 = arith.constant dense<0.000000e+00> : vector<128xf32>
    %94 = vector.multi_reduction <add>, %91, %cst_77 [0] : vector<256x128xf32> to vector<128xf32>
    %95 = vector.shape_cast %94 : vector<128xf32> to vector<1x128xf32>
    %c0_78 = arith.constant 0 : index
    %c0_79 = arith.constant 0 : index
    %c0_80 = arith.constant 0 : index
    %96 = vector.load %arg5[%c0_78, %c0_79, %c0_80] : memref<1x2x128xf32, #tpu.memory_space<vmem>>, vector<1x1x128xf32>
    %97 = vector.shape_cast %96 : vector<1x1x128xf32> to vector<1x128xf32>
    %98 = vector.shape_cast %95 : vector<1x128xf32> to vector<1x1x128xf32>
    tpu.vector_store %arg5[%c0_78, %c0_79, %c0_80], %98 {strides = array<i32>} : memref<1x2x128xf32, #tpu.memory_space<vmem>>, vector<1x1x128xf32>,
    %99 = arith.mulf %91, %91 : vector<256x128xf32>
    %cst_81 = arith.constant dense<0.000000e+00> : vector<128xf32>
    %100 = vector.multi_reduction <add>, %99, %cst_81 [0] : vector<256x128xf32> to vector<128xf32>
    %101 = vector.shape_cast %100 : vector<128xf32> to vector<1x128xf32>
    %c0_82 = arith.constant 0 : index
    %c1_83 = arith.constant 1 : index
    %c0_84 = arith.constant 0 : index
    %102 = vector.load %arg5[%c0_82, %c1_83, %c0_84] : memref<1x2x128xf32, #tpu.memory_space<vmem>>, vector<1x1x128xf32>
    %103 = vector.shape_cast %102 : vector<1x1x128xf32> to vector<1x128xf32>
    %104 = vector.shape_cast %101 : vector<1x128xf32> to vector<1x1x128xf32>
    tpu.vector_store %arg5[%c0_82, %c1_83, %c0_84], %104 {strides = array<i32>} : memref<1x2x128xf32, #tpu.memory_space<vmem>>, vector<1x1x128xf32>,
    return
  }
  func.func @transform_0(%arg0: i32, %arg1: i32) -> (i32, i32, i32, i32) {
    %c0_i32 = arith.constant 0 : i32
    %c0_i32_0 = arith.constant 0 : i32
    %c0_i32_1 = arith.constant 0 : i32
    %c0_i32_2 = arith.constant 0 : i32
    return %arg0, %c0_i32, %c0_i32_0, %c0_i32_1 : i32, i32, i32, i32
  }
  func.func @transform_1(%arg0: i32, %arg1: i32) -> (i32, i32, i32, i32) {
    %c0_i32 = arith.constant 0 : i32
    %c0_i32_0 = arith.constant 0 : i32
    %c0_i32_1 = arith.constant 0 : i32
    %c0_i32_2 = arith.constant 0 : i32
    %c0_i32_3 = arith.constant 0 : i32
    return %c0_i32, %c0_i32_0, %c0_i32_1, %c0_i32_2 : i32, i32, i32, i32
  }
  func.func @transform_2(%arg0: i32, %arg1: i32) -> (i32, i32) {
    %c1_i32 = arith.constant 1 : i32
    %0 = arith.muli %arg0, %c1_i32 : i32
    %1 = arith.addi %0, %arg1 : i32
    %c0_i32 = arith.constant 0 : i32
    %c0_i32_0 = arith.constant 0 : i32
    return %1, %c0_i32 : i32, i32
  }
  func.func @transform_3(%arg0: i32, %arg1: i32) -> (i32, i32, i32) {
    %c1_i32 = arith.constant 1 : i32
    %0 = arith.muli %arg0, %c1_i32 : i32
    %1 = arith.addi %0, %arg1 : i32
    %c0_i32 = arith.constant 0 : i32
    %c0_i32_0 = arith.constant 0 : i32
    %c0_i32_1 = arith.constant 0 : i32
    return %1, %c0_i32, %c0_i32_0 : i32, i32, i32
  }
}

</mosaic_0001>

<llo_original>
// kernel: tpu_custom_call.1
$region0: #{tpu_custom_call.1}
  #allocation0 [shape = 'u32[]', space=smem, size = 0x4, offset = 0x4, fixed_abs, tag = 'smem constant byte address 0x4 - core index']
  #allocation1 [shape = 'u32[144,128]{1,0:T(1,128)}', space=vmem, size = 0x12000, scoped, tag = 'internal scratch']
  %s0 = inlined_call_operand.hbm [shape: f32[2,18,18,4], index: 0, kind: input, shape index: {}]
  %s1 = inlined_call_operand.hbm [shape: bf16[3,3,4,128], index: 1, kind: input, shape index: {}]
  %s2 = inlined_call_operand.hbm [shape: bf16[512,128], index: 2, kind: output, shape index: {0}]
  %s3 = inlined_call_operand.hbm [shape: f32[2,2,128], index: 3, kind: output, shape index: {1}]
  %4 = xla_tuple %s2, %s3
  %s5 = sld [smem:[#allocation0]]
  $region57: #{tpu_custom_call.1} parent=0
    _
  %s7 = ssub.s32 1, %s5
  %s8 = scalar_select 0, %s7, %s5
  $region1: #{tpu_custom_call.1} parent=0
    #allocation2 [shape = 'u8[442368]{0}', space=vmem, size = 0x6c000, scoped, tag = 'input window, operand 0']
    #allocation3 [shape = 's32[2]{0}', space=sflag, size = 0x8, scoped, tag = 'scoped memory for tpu_custom_call.1']
    #allocation4 [shape = 's32[2]{0}', space=sflag, size = 0x8, scoped, tag = 'scoped memory for tpu_custom_call.1']
    #allocation5 [shape = 'u8[9216]{0}', space=vmem, size = 0x2400, scoped, tag = 'input window, operand 1, single buffered']
    #allocation6 [shape = 's32[1]{0}', space=sflag, size = 0x4, scoped, tag = 'scoped memory for tpu_custom_call.1']
    #allocation7 [shape = 'u8[131072]{0}', space=vmem, size = 0x20000, scoped, tag = 'output window, operand 0']
    #allocation8 [shape = 'u8[2048]{0}', space=vmem, size = 0x800, scoped, tag = 'output window, operand 1']
    #allocation9 [shape = 's32[2]{0}', space=sflag, size = 0x8, scoped, tag = 'scoped memory for tpu_custom_call.1']
    %9 = vsyncpa [#allocation3], 0
    %s10 = scalar_lea.sflag [#allocation3], 1
    %11 = vsyncpa %s10, 0
    %12 = vsyncpa [#allocation6], 0
    %13 = vsyncpa [#allocation4], 0
    %s14 = scalar_lea.sflag [#allocation4], 1
    %15 = vsyncpa %s14, 0
    %16 = vsyncpa [#allocation9], 0
    %s17 = scalar_lea.sflag [#allocation9], 1
    %18 = vsyncpa %s17, 0
    loop: start=0, step=1, limit=4
    $region2: #{tpu_custom_call.1} parent=1 // loop_pre_header
      _
    $region3: #{tpu_custom_call.1} parent=1 // loop_header
      %s20 = sphi 0, %s24
      %p21 = scmp.ge.s32.totalorder %s20, 4
      %s27 = sphi 0, %s39
      %s28 = sphi 0, %s35
      %s29 = sphi 0, %s27
      %s30 = sphi 0, %s28
      %s31 = sphi 0, %s29
      %s32 = sphi 0, %s30
      %s42 = sphi 0, %s44
      %s45 = sphi 0, %s42
      %s46 = sphi 0, %s45
      %s62 = sphi 0, %s46
      %s66 = sphi 0, %s66
      %s68 = sphi 0, %s66
      %s69 = sphi 0, %s68
      %s83 = sphi 0, %s69
      %s91 = sphi 0, %s93
      %s94 = sphi 0, %s91
      %s95 = sphi 0, %s94
      %s111 = sphi 0, %s95
      %s119 = sphi 0, %s121
      %s122 = sphi 0, %s119
      %s123 = sphi 0, %s122
      %s139 = sphi 0, %s123
    $region4: #{tpu_custom_call.1} parent=1 // loop_header_branch
      %23 = sbr.rel (%p21) target = $region8
    $region5: #{tpu_custom_call.1} parent=1 // loop_body
      %s25 = ssub.s32 %s20, 1
      %s26 = ssub.s32 %s20, 2
      %s33 = sadd.s32 1, %s28
      %p34 = scmp.ge.s32.totalorder %s33, 1
      %s35 = scalar_select %p34, 0, %s33
      %s36 = sadd.s32 1, %s27
      %s37 = scalar_select %p34, %s36, %s27
      %p38 = scmp.ge.s32.totalorder %s37, 2
      %s39 = scalar_select %p38, 0, %s37
      %s40 = ssub.s32 %s27, %s39
      %p41 = scmp.eq.s32.totalorder %s40, 0
      %s43 = sadd.s32 %s42, 1
      %s44 = scalar_select %p41, %s42, %s43
      %p47 = pneg %p41
      %p48 = scmp.eq.s32.totalorder %s20, 1
      %p49 = por %p47, %p48
      %p50 = scmp.ne.s32.totalorder %s42, %s45
      %p51 = scmp.eq.s32.totalorder %s20, 0
      %p52 = por %p50, %p51
      %p53 = scmp.ne.s32.totalorder %s42, %s45
      %p54 = scmp.eq.s32.totalorder %s25, 1
      %p55 = por %p53, %p54
      %p56 = scmp.ne.s32.totalorder %s45, %s46
      %p57 = scmp.eq.s32.totalorder %s25, 0
      %p58 = por %p56, %p57
      %p59 = scmp.ne.s32.totalorder %s45, %s46
      %p60 = scmp.eq.s32.totalorder %s26, 1
      %p61 = por %p59, %p60
      %p63 = scmp.ne.s32.totalorder %s46, %s62
      %p64 = scmp.eq.s32.totalorder %s26, 0
      %p65 = por %p63, %p64
      %s67 = sadd.s32 %s66, 1
      %p70 = scmp.eq.s32.totalorder %s20, 1
      %p71 = scmp.ne.s32.totalorder %s66, %s68
      %p72 = scmp.eq.s32.totalorder %s20, 0
      %p73 = por %p71, %p72
      %p74 = scmp.ne.s32.totalorder %s66, %s68
      %p75 = scmp.eq.s32.totalorder %s25, 1
      %p76 = por %p74, %p75
      %p77 = scmp.ne.s32.totalorder %s68, %s69
      %p78 = scmp.eq.s32.totalorder %s25, 0
      %p79 = por %p77, %p78
      %p80 = scmp.ne.s32.totalorder %s68, %s69
      %p81 = scmp.eq.s32.totalorder %s26, 1
      %p82 = por %p80, %p81
      %p84 = scmp.ne.s32.totalorder %s69, %s83
      %p85 = scmp.eq.s32.totalorder %s26, 0
      %p86 = por %p84, %p85
      %s87 = sadd.s32 %s27, %s28
      %s88 = sadd.s32 %s39, %s35
      %s89 = ssub.s32 %s87, %s88
      %p90 = scmp.eq.s32.totalorder %s89, 0
      %s92 = sadd.s32 %s91, 1
      %s93 = scalar_select %p90, %s91, %s92
      %p96 = pneg %p90
      %p97 = scmp.eq.s32.totalorder %s20, 1
      %p98 = por %p96, %p97
      %p99 = scmp.ne.s32.totalorder %s91, %s94
      %p100 = scmp.eq.s32.totalorder %s20, 0
      %p101 = por %p99, %p100
      %p102 = scmp.ne.s32.totalorder %s91, %s94
      %p103 = scmp.eq.s32.totalorder %s25, 1
      %p104 = por %p102, %p103
      %p105 = scmp.ne.s32.totalorder %s94, %s95
      %p106 = scmp.eq.s32.totalorder %s25, 0
      %p107 = por %p105, %p106
      %p108 = scmp.ne.s32.totalorder %s94, %s95
      %p109 = scmp.eq.s32.totalorder %s26, 1
      %p110 = por %p108, %p109
      %p112 = scmp.ne.s32.totalorder %s95, %s111
      %p113 = scmp.eq.s32.totalorder %s26, 0
      %p114 = por %p112, %p113
      %s115 = sadd.s32 %s27, %s28
      %s116 = sadd.s32 %s39, %s35
      %s117 = ssub.s32 %s115, %s116
      %p118 = scmp.eq.s32.totalorder %s117, 0
      %s120 = sadd.s32 %s119, 1
      %s121 = scalar_select %p118, %s119, %s120
      %p124 = pneg %p118
      %p125 = scmp.eq.s32.totalorder %s20, 1
      %p126 = por %p124, %p125
      %p127 = scmp.ne.s32.totalorder %s119, %s122
      %p128 = scmp.eq.s32.totalorder %s20, 0
      %p129 = por %p127, %p128
      %p130 = scmp.ne.s32.totalorder %s119, %s122
      %p131 = scmp.eq.s32.totalorder %s25, 1
      %p132 = por %p130, %p131
      %p133 = scmp.ne.s32.totalorder %s122, %s123
      %p134 = scmp.eq.s32.totalorder %s25, 0
      %p135 = por %p133, %p134
      %p136 = scmp.ne.s32.totalorder %s122, %s123
      %p137 = scmp.eq.s32.totalorder %s26, 1
      %p138 = por %p136, %p137
      %p140 = scmp.ne.s32.totalorder %s123, %s139
      %p141 = scmp.eq.s32.totalorder %s26, 0
      %p142 = por %p140, %p141
      %p143 = scmp.le.s32.totalorder 1, %s20
      %p144 = scmp.lt.s32.totalorder %s20, 3
      %p145 = pnand %p143, %p144
      %p146 = pneg %p145
      // Predicated region
      $region9: #{tpu_custom_call.1} parent=5 // pred_check
        _
      $region10: #{tpu_custom_call.1} parent=5 // pred_check_branch
        %148 = sbr.rel (%p145) target = $region12
      $region11: #{tpu_custom_call.1} parent=5 // pred_region
        %s149 = ssub.s32 %s20, 1
        // Predicated region
        $region13: #{tpu_custom_call.1} parent=11 // pred_check
          %p150 = pneg %p79
        $region14: #{tpu_custom_call.1} parent=11 // pred_check_branch
          %152 = sbr.rel (%p150) target = $region16
        $region15: #{tpu_custom_call.1} parent=11 // pred_region
          %s154 = ssub.s32 288, 288
          %155 = vsyncadd [#allocation6], %s154
          %s156 = sshll.u32 [#allocation5], 4
          %s157 = int_to_ptr.vmem [resolvable:$true] %s156
          %162 = dma.hbm_to_vmem [thread:$0]  %s1, 288, %s157, [#allocation6], 32, 32, 2
        $region16: #{tpu_custom_call.1} parent=11 // pred_fallthru
          _
      $region12: #{tpu_custom_call.1} parent=5 // pred_fallthru
        _
      %p163 = scmp.lt.s32.totalorder %s20, 2
      // Predicated region
      $region17: #{tpu_custom_call.1} parent=5 // pred_check
        %p164 = pneg %p163
      $region18: #{tpu_custom_call.1} parent=5 // pred_check_branch
        %166 = sbr.rel (%p164) target = $region20
      $region19: #{tpu_custom_call.1} parent=5 // pred_region
        // Predicated region
        $region21: #{tpu_custom_call.1} parent=19 // pred_check
          %p167 = pneg %p52
        $region22: #{tpu_custom_call.1} parent=19 // pred_check_branch
          %169 = sbr.rel (%p167) target = $region24
        $region23: #{tpu_custom_call.1} parent=19 // pred_region
          %s170 = sand.u32 %s42, 1
          %s171 = scalar_lea.sflag [#allocation3], %s170
          %s172 = sand.u32 %s42, 1
          %s173 = smul.addr %s172, 432
          %s174 = scalar_lea.vmem [#allocation2], %s173
          %s176 = ssub.s32 6912, 6912
          %177 = vsyncadd %s171, %s176
          %s178 = smul.addr %s27, 54
          %s179 = smul.addr %s178, 128
          %s180 = scalar_lea.hbm %s0, %s179
          %s181 = sshll.u32 %s174, 4
          %s182 = int_to_ptr.vmem [resolvable:$true] %s181
          %187 = dma.hbm_to_vmem [thread:$0]  %s180, 6912, %s182, %s171, 128, 128, 8
        $region24: #{tpu_custom_call.1} parent=19 // pred_fallthru
          _
      $region20: #{tpu_custom_call.1} parent=5 // pred_fallthru
        _
      %p188 = scmp.le.s32.totalorder 1, %s20
      %p189 = scmp.lt.s32.totalorder %s20, 3
      %p190 = pnand %p188, %p189
      %p191 = pneg %p190
      // Predicated region
      $region25: #{tpu_custom_call.1} parent=5 // pred_check
        _
      $region26: #{tpu_custom_call.1} parent=5 // pred_check_branch
        %193 = sbr.rel (%p190) target = $region28
      $region27: #{tpu_custom_call.1} parent=5 // pred_region
        %s194 = ssub.s32 %s20, 1
        %s195 = sand.u32 %s45, 1
        %s196 = scalar_lea.sflag [#allocation3], %s195
        %s197 = sand.u32 %s45, 1
        %s198 = smul.addr %s197, 432
        %s199 = scalar_lea.vmem [#allocation2], %s198
        // Predicated region
        $region29: #{tpu_custom_call.1} parent=27 // pred_check
          %p200 = pneg %p58
        $region30: #{tpu_custom_call.1} parent=27 // pred_check_branch
          %202 = sbr.rel (%p200) target = $region32
        $region31: #{tpu_custom_call.1} parent=27 // pred_region
          %203 = dma.done %s196, 6912
        $region32: #{tpu_custom_call.1} parent=27 // pred_fallthru
          _
        // Predicated region
        $region33: #{tpu_custom_call.1} parent=27 // pred_check
          %p204 = pneg %p79
        $region34: #{tpu_custom_call.1} parent=27 // pred_check_branch
          %206 = sbr.rel (%p204) target = $region36
        $region35: #{tpu_custom_call.1} parent=27 // pred_region
          %207 = dma.done [#allocation6], 288
        $region36: #{tpu_custom_call.1} parent=27 // pred_fallthru
          _
        %s208 = sand.u32 %s45, 1
        %s209 = scalar_lea.sflag [#allocation3], %s208
        %s210 = sand.u32 %s45, 1
        %s211 = smul.addr %s210, 432
        %s212 = scalar_lea.vmem [#allocation2], %s211
        %p213 = pneg %p58
        %p214 = pneg %p55
        %p215 = pneg %p79
        %p216 = pneg %p76
        %p217 = pneg %p107
        %p218 = pneg %p104
        %s219 = sand.u32 %s94, 1
        %s220 = scalar_lea.sflag [#allocation4], %s219
        %s221 = sand.u32 %s94, 1
        %s222 = smul.addr %s221, 128
        %s223 = scalar_lea.vmem [#allocation7], %s222
        %p224 = pneg %p135
        %p225 = pneg %p132
        %s226 = sand.u32 %s122, 1
        %s227 = scalar_lea.sflag [#allocation9], %s226
        %s228 = sand.u32 %s122, 1
        %s229 = smul.addr %s228, 2
        %s230 = scalar_lea.vmem [#allocation8], %s229
        %s231 = sadd.s32 %s29, %s30
        %s232 = smul.u32 32, %s231
        %s233 = sadd.s32 %s29, %s30
        %s235 = smul.u32 %s30, 16
        %s236 = smul.u32 %s235, 24
        %s237 = scalar_lea.vmem %s199, %s236 [#allocation2]
        %v238 = vld [vmem:[%s237] sm:$0xff]
        %v239 = vld [vmem:[%s237 + $0x8] sm:$0xff]
        %v240 = vld [vmem:[%s237 + $0x18] sm:$0xff]
        %v241 = vld [vmem:[%s237 + $0x20] sm:$0xff]
        %v242 = vld [vmem:[%s237 + $0x30] sm:$0xff]
        %v243 = vld [vmem:[%s237 + $0x38] sm:$0xff]
        %v244 = vld [vmem:[%s237 + $0x48] sm:$0xff]
        %v245 = vld [vmem:[%s237 + $0x50] sm:$0xff]
        %v246 = vld [vmem:[%s237 + $0x60] sm:$0xff]
        %v247 = vld [vmem:[%s237 + $0x68] sm:$0xff]
        %v248 = vld [vmem:[%s237 + $0x78] sm:$0xff]
        %v249 = vld [vmem:[%s237 + $0x80] sm:$0xff]
        %v250 = vld [vmem:[%s237 + $0x90] sm:$0xff]
        %v251 = vld [vmem:[%s237 + $0x98] sm:$0xff]
        %v252 = vld [vmem:[%s237 + $0xa8] sm:$0xff]
        %v253 = vld [vmem:[%s237 + $0xb0] sm:$0xff]
        %v254 = vld [vmem:[%s237 + $0xc0] sm:$0xff]
        %v255 = vld [vmem:[%s237 + $0xc8] sm:$0xff]
        %v256 = vld [vmem:[%s237 + $0xd8] sm:$0xff]
        %v257 = vld [vmem:[%s237 + $0xe0] sm:$0xff]
        %v258 = vld [vmem:[%s237 + $0xf0] sm:$0xff]
        %v259 = vld [vmem:[%s237 + $0xf8] sm:$0xff]
        %v260 = vld [vmem:[%s237 + $0x108] sm:$0xff]
        %v261 = vld [vmem:[%s237 + $0x110] sm:$0xff]
        %v262 = vld [vmem:[%s237 + $0x120] sm:$0xff]
        %v263 = vld [vmem:[%s237 + $0x128] sm:$0xff]
        %v264 = vld [vmem:[%s237 + $0x138] sm:$0xff]
        %v265 = vld [vmem:[%s237 + $0x140] sm:$0xff]
        %v266 = vld [vmem:[%s237 + $0x150] sm:$0xff]
        %v267 = vld [vmem:[%s237 + $0x158] sm:$0xff]
        %v268 = vld [vmem:[%s237 + $0x168] sm:$0xff]
        %v269 = vld [vmem:[%s237 + $0x170] sm:$0xff]
        %v270 = vpack.c.bf16 %v239, %v238
        %v271 = vpack.c.bf16 %v241, %v240
        %v272 = vpack.c.bf16 %v243, %v242
        %v273 = vpack.c.bf16 %v245, %v244
        %v274 = vpack.c.bf16 %v247, %v246
        %v275 = vpack.c.bf16 %v249, %v248
        %v276 = vpack.c.bf16 %v251, %v250
        %v277 = vpack.c.bf16 %v253, %v252
        %v278 = vpack.c.bf16 %v255, %v254
        %v279 = vpack.c.bf16 %v257, %v256
        %v280 = vpack.c.bf16 %v259, %v258
        %v281 = vpack.c.bf16 %v261, %v260
        %v282 = vpack.c.bf16 %v263, %v262
        %v283 = vpack.c.bf16 %v265, %v264
        %v284 = vpack.c.bf16 %v267, %v266
        %v285 = vpack.c.bf16 %v269, %v268
        %v286 = vld [vmem:[#allocation5] sm:$0x3]
        %v287 = vld [vmem:[%s237 + $0x1] sm:$0xff]
        %v288 = vld [vmem:[%s237 + $0x9] sm:$0xff]
        %v289 = vld [vmem:[%s237 + $0x19] sm:$0xff]
        %v290 = vld [vmem:[%s237 + $0x21] sm:$0xff]
        %v291 = vld [vmem:[%s237 + $0x31] sm:$0xff]
        %v292 = vld [vmem:[%s237 + $0x39] sm:$0xff]
        %v293 = vld [vmem:[%s237 + $0x49] sm:$0xff]
        %v294 = vld [vmem:[%s237 + $0x51] sm:$0xff]
        %v295 = vld [vmem:[%s237 + $0x61] sm:$0xff]
        %v296 = vld [vmem:[%s237 + $0x69] sm:$0xff]
        %v297 = vld [vmem:[%s237 + $0x79] sm:$0xff]
        %v298 = vld [vmem:[%s237 + $0x81] sm:$0xff]
        %v299 = vld [vmem:[%s237 + $0x91] sm:$0xff]
        %v300 = vld [vmem:[%s237 + $0x99] sm:$0xff]
        %v301 = vld [vmem:[%s237 + $0xa9] sm:$0xff]
        %v302 = vld [vmem:[%s237 + $0xb1] sm:$0xff]
        %v303 = vld [vmem:[%s237 + $0xc1] sm:$0xff]
        %v304 = vld [vmem:[%s237 + $0xc9] sm:$0xff]
        %v305 = vld [vmem:[%s237 + $0xd9] sm:$0xff]
        %v306 = vld [vmem:[%s237 + $0xe1] sm:$0xff]
        %v307 = vld [vmem:[%s237 + $0xf1] sm:$0xff]
        %v308 = vld [vmem:[%s237 + $0xf9] sm:$0xff]
        %v309 = vld [vmem:[%s237 + $0x109] sm:$0xff]
        %v310 = vld [vmem:[%s237 + $0x111] sm:$0xff]
        %v311 = vld [vmem:[%s237 + $0x121] sm:$0xff]
        %v312 = vld [vmem:[%s237 + $0x129] sm:$0xff]
        %v313 = vld [vmem:[%s237 + $0x139] sm:$0xff]
        %v314 = vld [vmem:[%s237 + $0x141] sm:$0xff]
        %v315 = vld [vmem:[%s237 + $0x151] sm:$0xff]
        %v316 = vld [vmem:[%s237 + $0x159] sm:$0xff]
        %v317 = vld [vmem:[%s237 + $0x169] sm:$0xff]
        %v318 = vld [vmem:[%s237 + $0x171] sm:$0xff]
        %v319 = vpack.c.bf16 %v288, %v287
        %v320 = vpack.c.bf16 %v290, %v289
        %v321 = vpack.c.bf16 %v292, %v291
        %v322 = vpack.c.bf16 %v294, %v293
        %v323 = vpack.c.bf16 %v296, %v295
        %v324 = vpack.c.bf16 %v298, %v297
        %v325 = vpack.c.bf16 %v300, %v299
        %v326 = vpack.c.bf16 %v302, %v301
        %v327 = vpack.c.bf16 %v304, %v303
        %v328 = vpack.c.bf16 %v306, %v305
        %v329 = vpack.c.bf16 %v308, %v307
        %v330 = vpack.c.bf16 %v310, %v309
        %v331 = vpack.c.bf16 %v312, %v311
        %v332 = vpack.c.bf16 %v314, %v313
        %v333 = vpack.c.bf16 %v316, %v315
        %v334 = vpack.c.bf16 %v318, %v317
        %s335 = scalar_lea.vmem [#allocation5], 2
        %v336 = vld [vmem:[%s335] sm:$0x3]
        %vm337 = vcmask 31744
        %v339 = vsel %vm337, %v319, 0
        %v342 = vsel %vm337, %v320, 0
        %v345 = vsel %vm337, %v321, 0
        %v348 = vsel %vm337, %v322, 0
        %v351 = vsel %vm337, %v323, 0
        %v354 = vsel %vm337, %v324, 0
        %v357 = vsel %vm337, %v325, 0
        %v360 = vsel %vm337, %v326, 0
        %v363 = vsel %vm337, %v327, 0
        %v366 = vsel %vm337, %v328, 0
        %v369 = vsel %vm337, %v329, 0
        %v372 = vsel %vm337, %v330, 0
        %v375 = vsel %vm337, %v331, 0
        %v378 = vsel %vm337, %v332, 0
        %v381 = vsel %vm337, %v333, 0
        %v384 = vsel %vm337, %v334, 0
        %vm386 = vcmask 1041408
        %v388 = vsel %vm386, %v336, 0
        %390 = vmatprep.subr.bf16.mxu0 0
        %391 = vmatpush1.bf16.msra.mxu0 %v388
        %392 = vmatprep.subr.bf16.mxu0 0
        %393 = vmatpush1.bf16.msra.mxu0 0
        %394 = vmatprep.subr.bf16.mxu0 0
        %395 = vmatpush1.bf16.msra.mxu0 0
        %396 = vmatprep.subr.bf16.mxu0 0
        %397 = vmatpush1.bf16.msra.mxu0 0
        %398 = vmatprep.subr.bf16.mxu0 0
        %399 = vmatpush1.bf16.msra.mxu0 0
        %400 = vmatprep.subr.bf16.mxu0 0
        %401 = vmatpush1.bf16.msra.mxu0 0
        %402 = vmatprep.subr.bf16.mxu0 0
        %403 = vmatpush1.bf16.msra.mxu0 0
        %404 = vmatprep.subr.bf16.mxu0 0
        %405 = vmatpush1.bf16.msra.mxu0 0
        %406 = vmatprep.subr.bf16.mxu0 0
        %407 = vmatpush1.bf16.msra.mxu0 0
        %408 = vmatprep.subr.bf16.mxu0 0
        %409 = vmatpush1.bf16.msra.mxu0 0
        %410 = vmatprep.subr.bf16.mxu0 0
        %411 = vmatpush1.bf16.msra.mxu0 0
        %412 = vmatprep.subr.bf16.mxu0 0
        %413 = vmatpush1.bf16.msra.mxu0 0
        %414 = vmatprep.subr.bf16.mxu0 0
        %415 = vmatpush1.bf16.msra.mxu0 0
        %416 = vmatprep.subr.bf16.mxu0 0
        %417 = vmatpush1.bf16.msra.mxu0 0
        %418 = vmatprep.subr.bf16.mxu0 0
        %419 = vmatpush1.bf16.msra.mxu0 0
        %420 = vmatprep.subr.bf16.mxu0 0
        %421 = vmatpush1.bf16.msra.mxu0 0
        %422 = vmatprep.mubr.bf16.mxu0 0
        %423 = vmatmul.mubr.bf16.gmra.mrb[0].mxu0 %v339
        %v424 = vpop.f32.mrb[0].mxu0
        %v425 = vadd.f32 0.0, %v424
        %v426 = vpop.f32.mrb[0].mxu0
        %v427 = vpop.f32.mrb[0].mxu0
        %v428 = vadd.f32 0.0, %v427
        %v429 = vpop.f32.mrb[0].mxu0
        %430 = vmatprep.mubr.bf16.mxu0 0
        %431 = vmatmul.mubr.bf16.gmra.mrb[0].mxu0 %v342
        %v432 = vpop.f32.mrb[0].mxu0
        %v433 = vadd.f32 0.0, %v432
        %v434 = vpop.f32.mrb[0].mxu0
        %v435 = vpop.f32.mrb[0].mxu0
        %v436 = vadd.f32 0.0, %v435
        %v437 = vpop.f32.mrb[0].mxu0
        %438 = vmatprep.mubr.bf16.mxu0 0
        %439 = vmatmul.mubr.bf16.gmra.mrb[0].mxu0 %v345
        %v440 = vpop.f32.mrb[0].mxu0
        %v441 = vadd.f32 0.0, %v440
        %v442 = vpop.f32.mrb[0].mxu0
        %v443 = vpop.f32.mrb[0].mxu0
        %v444 = vadd.f32 0.0, %v443
        %v445 = vpop.f32.mrb[0].mxu0
        %446 = vmatprep.mubr.bf16.mxu0 0
        %447 = vmatmul.mubr.bf16.gmra.mrb[0].mxu0 %v348
        %v448 = vpop.f32.mrb[0].mxu0
        %v449 = vadd.f32 0.0, %v448
        %v450 = vpop.f32.mrb[0].mxu0
        %v451 = vpop.f32.mrb[0].mxu0
        %v452 = vadd.f32 0.0, %v451
        %v453 = vpop.f32.mrb[0].mxu0
        %454 = vmatprep.mubr.bf16.mxu0 0
        %455 = vmatmul.mubr.bf16.gmra.mrb[0].mxu0 %v351
        %v456 = vpop.f32.mrb[0].mxu0
        %v457 = vadd.f32 0.0, %v456
        %v458 = vpop.f32.mrb[0].mxu0
        %v459 = vpop.f32.mrb[0].mxu0
        %v460 = vadd.f32 0.0, %v459
        %v461 = vpop.f32.mrb[0].mxu0
        %462 = vmatprep.mubr.bf16.mxu0 0
        %463 = vmatmul.mubr.bf16.gmra.mrb[0].mxu0 %v354
        %v464 = vpop.f32.mrb[0].mxu0
        %v465 = vadd.f32 0.0, %v464
        %v466 = vpop.f32.mrb[0].mxu0
        %v467 = vpop.f32.mrb[0].mxu0
        %v468 = vadd.f32 0.0, %v467
        %v469 = vpop.f32.mrb[0].mxu0
        %470 = vmatprep.mubr.bf16.mxu0 0
        %471 = vmatmul.mubr.bf16.gmra.mrb[0].mxu0 %v357
        %v472 = vpop.f32.mrb[0].mxu0
        %v473 = vadd.f32 0.0, %v472
        %v474 = vpop.f32.mrb[0].mxu0
        %v475 = vpop.f32.mrb[0].mxu0
        %v476 = vadd.f32 0.0, %v475
        %v477 = vpop.f32.mrb[0].mxu0
        %478 = vmatprep.mubr.bf16.mxu0 0
        %479 = vmatmul.mubr.bf16.gmra.mrb[0].mxu0 %v360
        %v480 = vpop.f32.mrb[0].mxu0
        %v481 = vadd.f32 0.0, %v480
        %v482 = vpop.f32.mrb[0].mxu0
        %v483 = vpop.f32.mrb[0].mxu0
        %v484 = vadd.f32 0.0, %v483
        %v485 = vpop.f32.mrb[0].mxu0
        %486 = vmatprep.mubr.bf16.mxu0 0
        %487 = vmatmul.mubr.bf16.gmra.mrb[0].mxu0 %v363
        %v488 = vpop.f32.mrb[0].mxu0
        %v489 = vadd.f32 0.0, %v488
        %v490 = vpop.f32.mrb[0].mxu0
        %v491 = vpop.f32.mrb[0].mxu0
        %v492 = vadd.f32 0.0, %v491
        %v493 = vpop.f32.mrb[0].mxu0
        %494 = vmatprep.mubr.bf16.mxu0 0
        %495 = vmatmul.mubr.bf16.gmra.mrb[0].mxu0 %v366
        %v496 = vpop.f32.mrb[0].mxu0
        %v497 = vadd.f32 0.0, %v496
        %v498 = vpop.f32.mrb[0].mxu0
        %v499 = vpop.f32.mrb[0].mxu0
        %v500 = vadd.f32 0.0, %v499
        %v501 = vpop.f32.mrb[0].mxu0
        %502 = vmatprep.mubr.bf16.mxu0 0
        %503 = vmatmul.mubr.bf16.gmra.mrb[0].mxu0 %v369
        %v504 = vpop.f32.mrb[0].mxu0
        %v505 = vadd.f32 0.0, %v504
        %v506 = vpop.f32.mrb[0].mxu0
        %v507 = vpop.f32.mrb[0].mxu0
        %v508 = vadd.f32 0.0, %v507
        %v509 = vpop.f32.mrb[0].mxu0
        %510 = vmatprep.mubr.bf16.mxu0 0
        %511 = vmatmul.mubr.bf16.gmra.mrb[0].mxu0 %v372
        %v512 = vpop.f32.mrb[0].mxu0
        %v513 = vadd.f32 0.0, %v512
        %v514 = vpop.f32.mrb[0].mxu0
        %v515 = vpop.f32.mrb[0].mxu0
        %v516 = vadd.f32 0.0, %v515
        %v517 = vpop.f32.mrb[0].mxu0
        %518 = vmatprep.mubr.bf16.mxu0 0
        %519 = vmatmul.mubr.bf16.gmra.mrb[0].mxu0 %v375
        %v520 = vpop.f32.mrb[0].mxu0
        %v521 = vadd.f32 0.0, %v520
        %v522 = vpop.f32.mrb[0].mxu0
        %v523 = vpop.f32.mrb[0].mxu0
        %v524 = vadd.f32 0.0, %v523
        %v525 = vpop.f32.mrb[0].mxu0
        %526 = vmatprep.mubr.bf16.mxu0 0
        %527 = vmatmul.mubr.bf16.gmra.mrb[0].mxu0 %v378
        %v528 = vpop.f32.mrb[0].mxu0
        %v529 = vadd.f32 0.0, %v528
        %v530 = vpop.f32.mrb[0].mxu0
        %v531 = vpop.f32.mrb[0].mxu0
        %v532 = vadd.f32 0.0, %v531
        %v533 = vpop.f32.mrb[0].mxu0
        %534 = vmatprep.mubr.bf16.mxu0 0
        %535 = vmatmul.mubr.bf16.gmra.mrb[0].mxu0 %v381
        %v536 = vpop.f32.mrb[0].mxu0
        %v537 = vadd.f32 0.0, %v536
        %v538 = vpop.f32.mrb[0].mxu0
        %v539 = vpop.f32.mrb[0].mxu0
        %v540 = vadd.f32 0.0, %v539
        %v541 = vpop.f32.mrb[0].mxu0
        %542 = vmatprep.mubr.bf16.mxu0 0
        %543 = vmatmul.mubr.bf16.gmra.mrb[0].mxu0 %v384
        %v544 = vpop.f32.mrb[0].mxu0
        %v545 = vadd.f32 0.0, %v544
        %v546 = vpop.f32.mrb[0].mxu0
        %v547 = vpop.f32.mrb[0].mxu0
        %v548 = vadd.f32 0.0, %v547
        %v549 = vpop.f32.mrb[0].mxu0
        %550 = vdwg.mxu0
        %v552 = vsel %vm337, %v270, 0
        %v555 = vsel %vm337, %v271, 0
        %v558 = vsel %vm337, %v272, 0
        %v561 = vsel %vm337, %v273, 0
        %v564 = vsel %vm337, %v274, 0
        %v567 = vsel %vm337, %v275, 0
        %v570 = vsel %vm337, %v276, 0
        %v573 = vsel %vm337, %v277, 0
        %v576 = vsel %vm337, %v278, 0
        %v579 = vsel %vm337, %v279, 0
        %v582 = vsel %vm337, %v280, 0
        %v585 = vsel %vm337, %v281, 0
        %v588 = vsel %vm337, %v282, 0
        %v591 = vsel %vm337, %v283, 0
        %v594 = vsel %vm337, %v284, 0
        %v597 = vsel %vm337, %v285, 0
        %v600 = vsel %vm386, %v286, 0
        %602 = vmatprep.subr.bf16.mxu0 0
        %603 = vmatpush1.bf16.msra.mxu0 %v600
        %604 = vmatprep.subr.bf16.mxu0 0
        %605 = vmatpush1.bf16.msra.mxu0 0
        %606 = vmatprep.subr.bf16.mxu0 0
        %607 = vmatpush1.bf16.msra.mxu0 0
        %608 = vmatprep.subr.bf16.mxu0 0
        %609 = vmatpush1.bf16.msra.mxu0 0
        %610 = vmatprep.subr.bf16.mxu0 0
        %611 = vmatpush1.bf16.msra.mxu0 0
        %612 = vmatprep.subr.bf16.mxu0 0
        %613 = vmatpush1.bf16.msra.mxu0 0
        %614 = vmatprep.subr.bf16.mxu0 0
        %615 = vmatpush1.bf16.msra.mxu0 0
        %616 = vmatprep.subr.bf16.mxu0 0
        %617 = vmatpush1.bf16.msra.mxu0 0
        %618 = vmatprep.subr.bf16.mxu0 0
        %619 = vmatpush1.bf16.msra.mxu0 0
        %620 = vmatprep.subr.bf16.mxu0 0
        %621 = vmatpush1.bf16.msra.mxu0 0
        %622 = vmatprep.subr.bf16.mxu0 0
        %623 = vmatpush1.bf16.msra.mxu0 0
        %624 = vmatprep.subr.bf16.mxu0 0
        %625 = vmatpush1.bf16.msra.mxu0 0
        %626 = vmatprep.subr.bf16.mxu0 0
        %627 = vmatpush1.bf16.msra.mxu0 0
        %628 = vmatprep.subr.bf16.mxu0 0
        %629 = vmatpush1.bf16.msra.mxu0 0
        %630 = vmatprep.subr.bf16.mxu0 0
        %631 = vmatpush1.bf16.msra.mxu0 0
        %632 = vmatprep.subr.bf16.mxu0 0
        %633 = vmatpush1.bf16.msra.mxu0 0
        %634 = vmatprep.mubr.bf16.mxu0 0
        %635 = vmatmul.mubr.bf16.gmra.mrb[0].mxu0 %v552
        %v636 = vpop.f32.mrb[0].mxu0
        %v637 = vadd.f32 %v425, %v636
        %v638 = vpop.f32.mrb[0].mxu0
        %v639 = vpop.f32.mrb[0].mxu0
        %v640 = vadd.f32 %v428, %v639
        %v641 = vpop.f32.mrb[0].mxu0
        %642 = vmatprep.mubr.bf16.mxu0 0
        %643 = vmatmul.mubr.bf16.gmra.mrb[0].mxu0 %v555
        %v644 = vpop.f32.mrb[0].mxu0
        %v645 = vadd.f32 %v433, %v644
        %v646 = vpop.f32.mrb[0].mxu0
        %v647 = vpop.f32.mrb[0].mxu0
        %v648 = vadd.f32 %v436, %v647
        %v649 = vpop.f32.mrb[0].mxu0
        %650 = vmatprep.mubr.bf16.mxu0 0
        %651 = vmatmul.mubr.bf16.gmra.mrb[0].mxu0 %v558
        %v652 = vpop.f32.mrb[0].mxu0
        %v653 = vadd.f32 %v441, %v652
        %v654 = vpop.f32.mrb[0].mxu0
        %v655 = vpop.f32.mrb[0].mxu0
        %v656 = vadd.f32 %v444, %v655
        %v657 = vpop.f32.mrb[0].mxu0
        %658 = vmatprep.mubr.bf16.mxu0 0
        %659 = vmatmul.mubr.bf16.gmra.mrb[0].mxu0 %v561
        %v660 = vpop.f32.mrb[0].mxu0
        %v661 = vadd.f32 %v449, %v660
        %v662 = vpop.f32.mrb[0].mxu0
        %v663 = vpop.f32.mrb[0].mxu0
        %v664 = vadd.f32 %v452, %v663
        %v665 = vpop.f32.mrb[0].mxu0
        %666 = vmatprep.mubr.bf16.mxu0 0
        %667 = vmatmul.mubr.bf16.gmra.mrb[0].mxu0 %v564
        %v668 = vpop.f32.mrb[0].mxu0
        %v669 = vadd.f32 %v457, %v668
        %v670 = vpop.f32.mrb[0].mxu0
        %v671 = vpop.f32.mrb[0].mxu0
        %v672 = vadd.f32 %v460, %v671
        %v673 = vpop.f32.mrb[0].mxu0
        %674 = vmatprep.mubr.bf16.mxu0 0
        %675 = vmatmul.mubr.bf16.gmra.mrb[0].mxu0 %v567
        %v676 = vpop.f32.mrb[0].mxu0
        %v677 = vadd.f32 %v465, %v676
        %v678 = vpop.f32.mrb[0].mxu0
        %v679 = vpop.f32.mrb[0].mxu0
        %v680 = vadd.f32 %v468, %v679
        %v681 = vpop.f32.mrb[0].mxu0
        %682 = vmatprep.mubr.bf16.mxu0 0
        %683 = vmatmul.mubr.bf16.gmra.mrb[0].mxu0 %v570
        %v684 = vpop.f32.mrb[0].mxu0
        %v685 = vadd.f32 %v473, %v684
        %v686 = vpop.f32.mrb[0].mxu0
        %v687 = vpop.f32.mrb[0].mxu0
        %v688 = vadd.f32 %v476, %v687
        %v689 = vpop.f32.mrb[0].mxu0
        %690 = vmatprep.mubr.bf16.mxu0 0
        %691 = vmatmul.mubr.bf16.gmra.mrb[0].mxu0 %v573
        %v692 = vpop.f32.mrb[0].mxu0
        %v693 = vadd.f32 %v481, %v692
        %v694 = vpop.f32.mrb[0].mxu0
        %v695 = vpop.f32.mrb[0].mxu0
        %v696 = vadd.f32 %v484, %v695
        %v697 = vpop.f32.mrb[0].mxu0
        %698 = vmatprep.mubr.bf16.mxu0 0
        %699 = vmatmul.mubr.bf16.gmra.mrb[0].mxu0 %v576
        %v700 = vpop.f32.mrb[0].mxu0
        %v701 = vadd.f32 %v489, %v700
        %v702 = vpop.f32.mrb[0].mxu0
        %v703 = vpop.f32.mrb[0].mxu0
        %v704 = vadd.f32 %v492, %v703
        %v705 = vpop.f32.mrb[0].mxu0
        %706 = vmatprep.mubr.bf16.mxu0 0
        %707 = vmatmul.mubr.bf16.gmra.mrb[0].mxu0 %v579
        %v708 = vpop.f32.mrb[0].mxu0
        %v709 = vadd.f32 %v497, %v708
        %v710 = vpop.f32.mrb[0].mxu0
        %v711 = vpop.f32.mrb[0].mxu0
        %v712 = vadd.f32 %v500, %v711
        %v713 = vpop.f32.mrb[0].mxu0
        %714 = vmatprep.mubr.bf16.mxu0 0
        %715 = vmatmul.mubr.bf16.gmra.mrb[0].mxu0 %v582
        %v716 = vpop.f32.mrb[0].mxu0
        %v717 = vadd.f32 %v505, %v716
        %v718 = vpop.f32.mrb[0].mxu0
        %v719 = vpop.f32.mrb[0].mxu0
        %v720 = vadd.f32 %v508, %v719
        %v721 = vpop.f32.mrb[0].mxu0
        %722 = vmatprep.mubr.bf16.mxu0 0
        %723 = vmatmul.mubr.bf16.gmra.mrb[0].mxu0 %v585
        %v724 = vpop.f32.mrb[0].mxu0
        %v725 = vadd.f32 %v513, %v724
        %v726 = vpop.f32.mrb[0].mxu0
        %v727 = vpop.f32.mrb[0].mxu0
        %v728 = vadd.f32 %v516, %v727
        %v729 = vpop.f32.mrb[0].mxu0
        %730 = vmatprep.mubr.bf16.mxu0 0
        %731 = vmatmul.mubr.bf16.gmra.mrb[0].mxu0 %v588
        %v732 = vpop.f32.mrb[0].mxu0
        %v733 = vadd.f32 %v521, %v732
        %v734 = vpop.f32.mrb[0].mxu0
        %v735 = vpop.f32.mrb[0].mxu0
        %v736 = vadd.f32 %v524, %v735
        %v737 = vpop.f32.mrb[0].mxu0
        %738 = vmatprep.mubr.bf16.mxu0 0
        %739 = vmatmul.mubr.bf16.gmra.mrb[0].mxu0 %v591
        %v740 = vpop.f32.mrb[0].mxu0
        %v741 = vadd.f32 %v529, %v740
        %v742 = vpop.f32.mrb[0].mxu0
        %v743 = vpop.f32.mrb[0].mxu0
        %v744 = vadd.f32 %v532, %v743
        %v745 = vpop.f32.mrb[0].mxu0
        %746 = vmatprep.mubr.bf16.mxu0 0
        %747 = vmatmul.mubr.bf16.gmra.mrb[0].mxu0 %v594
        %v748 = vpop.f32.mrb[0].mxu0
        %v749 = vadd.f32 %v537, %v748
        %v750 = vpop.f32.mrb[0].mxu0
        %v751 = vpop.f32.mrb[0].mxu0
        %v752 = vadd.f32 %v540, %v751
        %v753 = vpop.f32.mrb[0].mxu0
        %754 = vmatprep.mubr.bf16.mxu0 0
        %755 = vmatmul.mubr.bf16.gmra.mrb[0].mxu0 %v597
        %v756 = vpop.f32.mrb[0].mxu0
        %v757 = vadd.f32 %v545, %v756
        %v758 = vpop.f32.mrb[0].mxu0
        %v759 = vpop.f32.mrb[0].mxu0
        %v760 = vadd.f32 %v548, %v759
        %v761 = vpop.f32.mrb[0].mxu0
        %762 = vdwg.mxu0
        %v763 = vld [vmem:[%s237 + $0x2] sm:$0xff]
        %v764 = vld [vmem:[%s237 + $0xa] sm:$0xff]
        %v765 = vld [vmem:[%s237 + $0x1a] sm:$0xff]
        %v766 = vld [vmem:[%s237 + $0x22] sm:$0xff]
        %v767 = vld [vmem:[%s237 + $0x32] sm:$0xff]
        %v768 = vld [vmem:[%s237 + $0x3a] sm:$0xff]
        %v769 = vld [vmem:[%s237 + $0x4a] sm:$0xff]
        %v770 = vld [vmem:[%s237 + $0x52] sm:$0xff]
        %v771 = vld [vmem:[%s237 + $0x62] sm:$0xff]
        %v772 = vld [vmem:[%s237 + $0x6a] sm:$0xff]
        %v773 = vld [vmem:[%s237 + $0x7a] sm:$0xff]
        %v774 = vld [vmem:[%s237 + $0x82] sm:$0xff]
        %v775 = vld [vmem:[%s237 + $0x92] sm:$0xff]
        %v776 = vld [vmem:[%s237 + $0x9a] sm:$0xff]
        %v777 = vld [vmem:[%s237 + $0xaa] sm:$0xff]
        %v778 = vld [vmem:[%s237 + $0xb2] sm:$0xff]
        %v779 = vld [vmem:[%s237 + $0xc2] sm:$0xff]
        %v780 = vld [vmem:[%s237 + $0xca] sm:$0xff]
        %v781 = vld [vmem:[%s237 + $0xda] sm:$0xff]
        %v782 = vld [vmem:[%s237 + $0xe2] sm:$0xff]
        %v783 = vld [vmem:[%s237 + $0xf2] sm:$0xff]
        %v784 = vld [vmem:[%s237 + $0xfa] sm:$0xff]
        %v785 = vld [vmem:[%s237 + $0x10a] sm:$0xff]
        %v786 = vld [vmem:[%s237 + $0x112] sm:$0xff]
        %v787 = vld [vmem:[%s237 + $0x122] sm:$0xff]
        %v788 = vld [vmem:[%s237 + $0x12a] sm:$0xff]
        %v789 = vld [vmem:[%s237 + $0x13a] sm:$0xff]
        %v790 = vld [vmem:[%s237 + $0x142] sm:$0xff]
        %v791 = vld [vmem:[%s237 + $0x152] sm:$0xff]
        %v792 = vld [vmem:[%s237 + $0x15a] sm:$0xff]
        %v793 = vld [vmem:[%s237 + $0x16a] sm:$0xff]
        %v794 = vld [vmem:[%s237 + $0x172] sm:$0xff]
        %v795 = vpack.c.bf16 %v764, %v763
        %v796 = vpack.c.bf16 %v766, %v765
        %v797 = vpack.c.bf16 %v768, %v767
        %v798 = vpack.c.bf16 %v770, %v769
        %v799 = vpack.c.bf16 %v772, %v771
        %v800 = vpack.c.bf16 %v774, %v773
        %v801 = vpack.c.bf16 %v776, %v775
        %v802 = vpack.c.bf16 %v778, %v777
        %v803 = vpack.c.bf16 %v780, %v779
        %v804 = vpack.c.bf16 %v782, %v781
        %v805 = vpack.c.bf16 %v784, %v783
        %v806 = vpack.c.bf16 %v786, %v785
        %v807 = vpack.c.bf16 %v788, %v787
        %v808 = vpack.c.bf16 %v790, %v789
        %v809 = vpack.c.bf16 %v792, %v791
        %v810 = vpack.c.bf16 %v794, %v793
        %s811 = scalar_lea.vmem [#allocation5], 4
        %v812 = vld [vmem:[%s811] sm:$0x3]
        %v814 = vsel %vm337, %v795, 0
        %v817 = vsel %vm337, %v796, 0
        %v820 = vsel %vm337, %v797, 0
        %v823 = vsel %vm337, %v798, 0
        %v826 = vsel %vm337, %v799, 0
        %v829 = vsel %vm337, %v800, 0
        %v832 = vsel %vm337, %v801, 0
        %v835 = vsel %vm337, %v802, 0
        %v838 = vsel %vm337, %v803, 0
        %v841 = vsel %vm337, %v804, 0
        %v844 = vsel %vm337, %v805, 0
        %v847 = vsel %vm337, %v806, 0
        %v850 = vsel %vm337, %v807, 0
        %v853 = vsel %vm337, %v808, 0
        %v856 = vsel %vm337, %v809, 0
        %v859 = vsel %vm337, %v810, 0
        %v862 = vsel %vm386, %v812, 0
        %864 = vmatprep.subr.bf16.mxu0 0
        %865 = vmatpush1.bf16.msra.mxu0 %v862
        %866 = vmatprep.subr.bf16.mxu0 0
        %867 = vmatpush1.bf16.msra.mxu0 0
        %868 = vmatprep.subr.bf16.mxu0 0
        %869 = vmatpush1.bf16.msra.mxu0 0
        %870 = vmatprep.subr.bf16.mxu0 0
        %871 = vmatpush1.bf16.msra.mxu0 0
        %872 = vmatprep.subr.bf16.mxu0 0
        %873 = vmatpush1.bf16.msra.mxu0 0
        %874 = vmatprep.subr.bf16.mxu0 0
        %875 = vmatpush1.bf16.msra.mxu0 0
        %876 = vmatprep.subr.bf16.mxu0 0
        %877 = vmatpush1.bf16.msra.mxu0 0
        %878 = vmatprep.subr.bf16.mxu0 0
        %879 = vmatpush1.bf16.msra.mxu0 0
        %880 = vmatprep.subr.bf16.mxu0 0
        %881 = vmatpush1.bf16.msra.mxu0 0
        %882 = vmatprep.subr.bf16.mxu0 0
        %883 = vmatpush1.bf16.msra.mxu0 0
        %884 = vmatprep.subr.bf16.mxu0 0
        %885 = vmatpush1.bf16.msra.mxu0 0
        %886 = vmatprep.subr.bf16.mxu0 0
        %887 = vmatpush1.bf16.msra.mxu0 0
        %888 = vmatprep.subr.bf16.mxu0 0
        %889 = vmatpush1.bf16.msra.mxu0 0
        %890 = vmatprep.subr.bf16.mxu0 0
        %891 = vmatpush1.bf16.msra.mxu0 0
        %892 = vmatprep.subr.bf16.mxu0 0
        %893 = vmatpush1.bf16.msra.mxu0 0
        %894 = vmatprep.subr.bf16.mxu0 0
        %895 = vmatpush1.bf16.msra.mxu0 0
        %896 = vmatprep.mubr.bf16.mxu0 0
        %897 = vmatmul.mubr.bf16.gmra.mrb[0].mxu0 %v814
        %v898 = vpop.f32.mrb[0].mxu0
        %v899 = vadd.f32 0.0, %v898
        %v900 = vpop.f32.mrb[0].mxu0
        %v901 = vpop.f32.mrb[0].mxu0
        %v902 = vadd.f32 0.0, %v901
        %v903 = vpop.f32.mrb[0].mxu0
        %904 = vmatprep.mubr.bf16.mxu0 0
        %905 = vmatmul.mubr.bf16.gmra.mrb[0].mxu0 %v817
        %v906 = vpop.f32.mrb[0].mxu0
        %v907 = vadd.f32 0.0, %v906
        %v908 = vpop.f32.mrb[0].mxu0
        %v909 = vpop.f32.mrb[0].mxu0
        %v910 = vadd.f32 0.0, %v909
        %v911 = vpop.f32.mrb[0].mxu0
        %912 = vmatprep.mubr.bf16.mxu0 0
        %913 = vmatmul.mubr.bf16.gmra.mrb[0].mxu0 %v820
        %v914 = vpop.f32.mrb[0].mxu0
        %v915 = vadd.f32 0.0, %v914
        %v916 = vpop.f32.mrb[0].mxu0
        %v917 = vpop.f32.mrb[0].mxu0
        %v918 = vadd.f32 0.0, %v917
        %v919 = vpop.f32.mrb[0].mxu0
        %920 = vmatprep.mubr.bf16.mxu0 0
        %921 = vmatmul.mubr.bf16.gmra.mrb[0].mxu0 %v823
        %v922 = vpop.f32.mrb[0].mxu0
        %v923 = vadd.f32 0.0, %v922
        %v924 = vpop.f32.mrb[0].mxu0
        %v925 = vpop.f32.mrb[0].mxu0
        %v926 = vadd.f32 0.0, %v925
        %v927 = vpop.f32.mrb[0].mxu0
        %928 = vmatprep.mubr.bf16.mxu0 0
        %929 = vmatmul.mubr.bf16.gmra.mrb[0].mxu0 %v826
        %v930 = vpop.f32.mrb[0].mxu0
        %v931 = vadd.f32 0.0, %v930
        %v932 = vpop.f32.mrb[0].mxu0
        %v933 = vpop.f32.mrb[0].mxu0
        %v934 = vadd.f32 0.0, %v933
        %v935 = vpop.f32.mrb[0].mxu0
        %936 = vmatprep.mubr.bf16.mxu0 0
        %937 = vmatmul.mubr.bf16.gmra.mrb[0].mxu0 %v829
        %v938 = vpop.f32.mrb[0].mxu0
        %v939 = vadd.f32 0.0, %v938
        %v940 = vpop.f32.mrb[0].mxu0
        %v941 = vpop.f32.mrb[0].mxu0
        %v942 = vadd.f32 0.0, %v941
        %v943 = vpop.f32.mrb[0].mxu0
        %944 = vmatprep.mubr.bf16.mxu0 0
        %945 = vmatmul.mubr.bf16.gmra.mrb[0].mxu0 %v832
        %v946 = vpop.f32.mrb[0].mxu0
        %v947 = vadd.f32 0.0, %v946
        %v948 = vpop.f32.mrb[0].mxu0
        %v949 = vpop.f32.mrb[0].mxu0
        %v950 = vadd.f32 0.0, %v949
        %v951 = vpop.f32.mrb[0].mxu0
        %952 = vmatprep.mubr.bf16.mxu0 0
        %953 = vmatmul.mubr.bf16.gmra.mrb[0].mxu0 %v835
        %v954 = vpop.f32.mrb[0].mxu0
        %v955 = vadd.f32 0.0, %v954
        %v956 = vpop.f32.mrb[0].mxu0
        %v957 = vpop.f32.mrb[0].mxu0
        %v958 = vadd.f32 0.0, %v957
        %v959 = vpop.f32.mrb[0].mxu0
        %960 = vmatprep.mubr.bf16.mxu0 0
        %961 = vmatmul.mubr.bf16.gmra.mrb[0].mxu0 %v838
        %v962 = vpop.f32.mrb[0].mxu0
        %v963 = vadd.f32 0.0, %v962
        %v964 = vpop.f32.mrb[0].mxu0
        %v965 = vpop.f32.mrb[0].mxu0
        %v966 = vadd.f32 0.0, %v965
        %v967 = vpop.f32.mrb[0].mxu0
        %968 = vmatprep.mubr.bf16.mxu0 0
        %969 = vmatmul.mubr.bf16.gmra.mrb[0].mxu0 %v841
        %v970 = vpop.f32.mrb[0].mxu0
        %v971 = vadd.f32 0.0, %v970
        %v972 = vpop.f32.mrb[0].mxu0
        %v973 = vpop.f32.mrb[0].mxu0
        %v974 = vadd.f32 0.0, %v973
        %v975 = vpop.f32.mrb[0].mxu0
        %976 = vmatprep.mubr.bf16.mxu0 0
        %977 = vmatmul.mubr.bf16.gmra.mrb[0].mxu0 %v844
        %v978 = vpop.f32.mrb[0].mxu0
        %v979 = vadd.f32 0.0, %v978
        %v980 = vpop.f32.mrb[0].mxu0
        %v981 = vpop.f32.mrb[0].mxu0
        %v982 = vadd.f32 0.0, %v981
        %v983 = vpop.f32.mrb[0].mxu0
        %984 = vmatprep.mubr.bf16.mxu0 0
        %985 = vmatmul.mubr.bf16.gmra.mrb[0].mxu0 %v847
        %v986 = vpop.f32.mrb[0].mxu0
        %v987 = vadd.f32 0.0, %v986
        %v988 = vpop.f32.mrb[0].mxu0
        %v989 = vpop.f32.mrb[0].mxu0
        %v990 = vadd.f32 0.0, %v989
        %v991 = vpop.f32.mrb[0].mxu0
        %992 = vmatprep.mubr.bf16.mxu0 0
        %993 = vmatmul.mubr.bf16.gmra.mrb[0].mxu0 %v850
        %v994 = vpop.f32.mrb[0].mxu0
        %v995 = vadd.f32 0.0, %v994
        %v996 = vpop.f32.mrb[0].mxu0
        %v997 = vpop.f32.mrb[0].mxu0
        %v998 = vadd.f32 0.0, %v997
        %v999 = vpop.f32.mrb[0].mxu0
        %1000 = vmatprep.mubr.bf16.mxu0 0
        %1001 = vmatmul.mubr.bf16.gmra.mrb[0].mxu0 %v853
        %v1002 = vpop.f32.mrb[0].mxu0
        %v1003 = vadd.f32 0.0, %v1002
        %v1004 = vpop.f32.mrb[0].mxu0
        %v1005 = vpop.f32.mrb[0].mxu0
        %v1006 = vadd.f32 0.0, %v1005
        %v1007 = vpop.f32.mrb[0].mxu0
        %1008 = vmatprep.mubr.bf16.mxu0 0
        %1009 = vmatmul.mubr.bf16.gmra.mrb[0].mxu0 %v856
        %v1010 = vpop.f32.mrb[0].mxu0
        %v1011 = vadd.f32 0.0, %v1010
        %v1012 = vpop.f32.mrb[0].mxu0
        %v1013 = vpop.f32.mrb[0].mxu0
        %v1014 = vadd.f32 0.0, %v1013
        %v1015 = vpop.f32.mrb[0].mxu0
        %1016 = vmatprep.mubr.bf16.mxu0 0
        %1017 = vmatmul.mubr.bf16.gmra.mrb[0].mxu0 %v859
        %v1018 = vpop.f32.mrb[0].mxu0
        %v1019 = vadd.f32 0.0, %v1018
        %v1020 = vpop.f32.mrb[0].mxu0
        %v1021 = vpop.f32.mrb[0].mxu0
        %v1022 = vadd.f32 0.0, %v1021
        %v1023 = vpop.f32.mrb[0].mxu0
        %1024 = vdwg.mxu0
        %v1025 = vadd.f32 %v637, %v899
        %v1026 = vadd.f32 %v640, %v902
        %v1027 = vadd.f32 %v645, %v907
        %v1028 = vadd.f32 %v648, %v910
        %v1029 = vadd.f32 %v653, %v915
        %v1030 = vadd.f32 %v656, %v918
        %v1031 = vadd.f32 %v661, %v923
        %v1032 = vadd.f32 %v664, %v926
        %v1033 = vadd.f32 %v669, %v931
        %v1034 = vadd.f32 %v672, %v934
        %v1035 = vadd.f32 %v677, %v939
        %v1036 = vadd.f32 %v680, %v942
        %v1037 = vadd.f32 %v685, %v947
        %v1038 = vadd.f32 %v688, %v950
        %v1039 = vadd.f32 %v693, %v955
        %v1040 = vadd.f32 %v696, %v958
        %v1041 = vadd.f32 %v701, %v963
        %v1042 = vadd.f32 %v704, %v966
        %v1043 = vadd.f32 %v709, %v971
        %v1044 = vadd.f32 %v712, %v974
        %v1045 = vadd.f32 %v717, %v979
        %v1046 = vadd.f32 %v720, %v982
        %v1047 = vadd.f32 %v725, %v987
        %v1048 = vadd.f32 %v728, %v990
        %v1049 = vadd.f32 %v733, %v995
        %v1050 = vadd.f32 %v736, %v998
        %v1051 = vadd.f32 %v741, %v1003
        %v1052 = vadd.f32 %v744, %v1006
        %v1053 = vadd.f32 %v749, %v1011
        %v1054 = vadd.f32 %v752, %v1014
        %v1055 = vadd.f32 %v757, %v1019
        %v1056 = vadd.f32 %v760, %v1022
        %s1057 = sadd.s32 %s235, 1
        %s1058 = smul.u32 %s1057, 24
        %s1059 = scalar_lea.vmem %s199, %s1058 [#allocation2]
        %v1060 = vld [vmem:[%s1059] sm:$0xff]
        %v1061 = vld [vmem:[%s1059 + $0x8] sm:$0xff]
        %v1062 = vld [vmem:[%s1059 + $0x18] sm:$0xff]
        %v1063 = vld [vmem:[%s1059 + $0x20] sm:$0xff]
        %v1064 = vld [vmem:[%s1059 + $0x30] sm:$0xff]
        %v1065 = vld [vmem:[%s1059 + $0x38] sm:$0xff]
        %v1066 = vld [vmem:[%s1059 + $0x48] sm:$0xff]
        %v1067 = vld [vmem:[%s1059 + $0x50] sm:$0xff]
        %v1068 = vld [vmem:[%s1059 + $0x60] sm:$0xff]
        %v1069 = vld [vmem:[%s1059 + $0x68] sm:$0xff]
        %v1070 = vld [vmem:[%s1059 + $0x78] sm:$0xff]
        %v1071 = vld [vmem:[%s1059 + $0x80] sm:$0xff]
        %v1072 = vld [vmem:[%s1059 + $0x90] sm:$0xff]
        %v1073 = vld [vmem:[%s1059 + $0x98] sm:$0xff]
        %v1074 = vld [vmem:[%s1059 + $0xa8] sm:$0xff]
        %v1075 = vld [vmem:[%s1059 + $0xb0] sm:$0xff]
        %v1076 = vld [vmem:[%s1059 + $0xc0] sm:$0xff]
        %v1077 = vld [vmem:[%s1059 + $0xc8] sm:$0xff]
        %v1078 = vld [vmem:[%s1059 + $0xd8] sm:$0xff]
        %v1079 = vld [vmem:[%s1059 + $0xe0] sm:$0xff]
        %v1080 = vld [vmem:[%s1059 + $0xf0] sm:$0xff]
        %v1081 = vld [vmem:[%s1059 + $0xf8] sm:$0xff]
        %v1082 = vld [vmem:[%s1059 + $0x108] sm:$0xff]
        %v1083 = vld [vmem:[%s1059 + $0x110] sm:$0xff]
        %v1084 = vld [vmem:[%s1059 + $0x120] sm:$0xff]
        %v1085 = vld [vmem:[%s1059 + $0x128] sm:$0xff]
        %v1086 = vld [vmem:[%s1059 + $0x138] sm:$0xff]
        %v1087 = vld [vmem:[%s1059 + $0x140] sm:$0xff]
        %v1088 = vld [vmem:[%s1059 + $0x150] sm:$0xff]
        %v1089 = vld [vmem:[%s1059 + $0x158] sm:$0xff]
        %v1090 = vld [vmem:[%s1059 + $0x168] sm:$0xff]
        %v1091 = vld [vmem:[%s1059 + $0x170] sm:$0xff]
        %v1092 = vpack.c.bf16 %v1061, %v1060
        %v1093 = vpack.c.bf16 %v1063, %v1062
        %v1094 = vpack.c.bf16 %v1065, %v1064
        %v1095 = vpack.c.bf16 %v1067, %v1066
        %v1096 = vpack.c.bf16 %v1069, %v1068
        %v1097 = vpack.c.bf16 %v1071, %v1070
        %v1098 = vpack.c.bf16 %v1073, %v1072
        %v1099 = vpack.c.bf16 %v1075, %v1074
        %v1100 = vpack.c.bf16 %v1077, %v1076
        %v1101 = vpack.c.bf16 %v1079, %v1078
        %v1102 = vpack.c.bf16 %v1081, %v1080
        %v1103 = vpack.c.bf16 %v1083, %v1082
        %v1104 = vpack.c.bf16 %v1085, %v1084
        %v1105 = vpack.c.bf16 %v1087, %v1086
        %v1106 = vpack.c.bf16 %v1089, %v1088
        %v1107 = vpack.c.bf16 %v1091, %v1090
        %s1108 = scalar_lea.vmem [#allocation5], 6
        %v1109 = vld [vmem:[%s1108] sm:$0x3]
        %v1111 = vsel %vm337, %v1092, 0
        %v1114 = vsel %vm337, %v1093, 0
        %v1117 = vsel %vm337, %v1094, 0
        %v1120 = vsel %vm337, %v1095, 0
        %v1123 = vsel %vm337, %v1096, 0
        %v1126 = vsel %vm337, %v1097, 0
        %v1129 = vsel %vm337, %v1098, 0
        %v1132 = vsel %vm337, %v1099, 0
        %v1135 = vsel %vm337, %v1100, 0
        %v1138 = vsel %vm337, %v1101, 0
        %v1141 = vsel %vm337, %v1102, 0
        %v1144 = vsel %vm337, %v1103, 0
        %v1147 = vsel %vm337, %v1104, 0
        %v1150 = vsel %vm337, %v1105, 0
        %v1153 = vsel %vm337, %v1106, 0
        %v1156 = vsel %vm337, %v1107, 0
        %v1159 = vsel %vm386, %v1109, 0
        %1161 = vmatprep.subr.bf16.mxu0 0
        %1162 = vmatpush1.bf16.msra.mxu0 %v1159
        %1163 = vmatprep.subr.bf16.mxu0 0
        %1164 = vmatpush1.bf16.msra.mxu0 0
        %1165 = vmatprep.subr.bf16.mxu0 0
        %1166 = vmatpush1.bf16.msra.mxu0 0
        %1167 = vmatprep.subr.bf16.mxu0 0
        %1168 = vmatpush1.bf16.msra.mxu0 0
        %1169 = vmatprep.subr.bf16.mxu0 0
        %1170 = vmatpush1.bf16.msra.mxu0 0
        %1171 = vmatprep.subr.bf16.mxu0 0
        %1172 = vmatpush1.bf16.msra.mxu0 0
        %1173 = vmatprep.subr.bf16.mxu0 0
        %1174 = vmatpush1.bf16.msra.mxu0 0
        %1175 = vmatprep.subr.bf16.mxu0 0
        %1176 = vmatpush1.bf16.msra.mxu0 0
        %1177 = vmatprep.subr.bf16.mxu0 0
        %1178 = vmatpush1.bf16.msra.mxu0 0
        %1179 = vmatprep.subr.bf16.mxu0 0
        %1180 = vmatpush1.bf16.msra.mxu0 0
        %1181 = vmatprep.subr.bf16.mxu0 0
        %1182 = vmatpush1.bf16.msra.mxu0 0
        %1183 = vmatprep.subr.bf16.mxu0 0
        %1184 = vmatpush1.bf16.msra.mxu0 0
        %1185 = vmatprep.subr.bf16.mxu0 0
        %1186 = vmatpush1.bf16.msra.mxu0 0
        %1187 = vmatprep.subr.bf16.mxu0 0
        %1188 = vmatpush1.bf16.msra.mxu0 0
        %1189 = vmatprep.subr.bf16.mxu0 0
        %1190 = vmatpush1.bf16.msra.mxu0 0
        %1191 = vmatprep.subr.bf16.mxu0 0
        %1192 = vmatpush1.bf16.msra.mxu0 0
        %1193 = vmatprep.mubr.bf16.mxu0 0
        %1194 = vmatmul.mubr.bf16.gmra.mrb[0].mxu0 %v1111
        %v1195 = vpop.f32.mrb[0].mxu0
        %v1196 = vadd.f32 0.0, %v1195
        %v1197 = vpop.f32.mrb[0].mxu0
        %v1198 = vpop.f32.mrb[0].mxu0
        %v1199 = vadd.f32 0.0, %v1198
        %v1200 = vpop.f32.mrb[0].mxu0
        %1201 = vmatprep.mubr.bf16.mxu0 0
        %1202 = vmatmul.mubr.bf16.gmra.mrb[0].mxu0 %v1114
        %v1203 = vpop.f32.mrb[0].mxu0
        %v1204 = vadd.f32 0.0, %v1203
        %v1205 = vpop.f32.mrb[0].mxu0
        %v1206 = vpop.f32.mrb[0].mxu0
        %v1207 = vadd.f32 0.0, %v1206
        %v1208 = vpop.f32.mrb[0].mxu0
        %1209 = vmatprep.mubr.bf16.mxu0 0
        %1210 = vmatmul.mubr.bf16.gmra.mrb[0].mxu0 %v1117
        %v1211 = vpop.f32.mrb[0].mxu0
        %v1212 = vadd.f32 0.0, %v1211
        %v1213 = vpop.f32.mrb[0].mxu0
        %v1214 = vpop.f32.mrb[0].mxu0
        %v1215 = vadd.f32 0.0, %v1214
        %v1216 = vpop.f32.mrb[0].mxu0
        %1217 = vmatprep.mubr.bf16.mxu0 0
        %1218 = vmatmul.mubr.bf16.gmra.mrb[0].mxu0 %v1120
        %v1219 = vpop.f32.mrb[0].mxu0
        %v1220 = vadd.f32 0.0, %v1219
        %v1221 = vpop.f32.mrb[0].mxu0
        %v1222 = vpop.f32.mrb[0].mxu0
        %v1223 = vadd.f32 0.0, %v1222
        %v1224 = vpop.f32.mrb[0].mxu0
        %1225 = vmatprep.mubr.bf16.mxu0 0
        %1226 = vmatmul.mubr.bf16.gmra.mrb[0].mxu0 %v1123
        %v1227 = vpop.f32.mrb[0].mxu0
        %v1228 = vadd.f32 0.0, %v1227
        %v1229 = vpop.f32.mrb[0].mxu0
        %v1230 = vpop.f32.mrb[0].mxu0
        %v1231 = vadd.f32 0.0, %v1230
        %v1232 = vpop.f32.mrb[0].mxu0
        %1233 = vmatprep.mubr.bf16.mxu0 0
        %1234 = vmatmul.mubr.bf16.gmra.mrb[0].mxu0 %v1126
        %v1235 = vpop.f32.mrb[0].mxu0
        %v1236 = vadd.f32 0.0, %v1235
        %v1237 = vpop.f32.mrb[0].mxu0
        %v1238 = vpop.f32.mrb[0].mxu0
        %v1239 = vadd.f32 0.0, %v1238
        %v1240 = vpop.f32.mrb[0].mxu0
        %1241 = vmatprep.mubr.bf16.mxu0 0
        %1242 = vmatmul.mubr.bf16.gmra.mrb[0].mxu0 %v1129
        %v1243 = vpop.f32.mrb[0].mxu0
        %v1244 = vadd.f32 0.0, %v1243
        %v1245 = vpop.f32.mrb[0].mxu0
        %v1246 = vpop.f32.mrb[0].mxu0
        %v1247 = vadd.f32 0.0, %v1246
        %v1248 = vpop.f32.mrb[0].mxu0
        %1249 = vmatprep.mubr.bf16.mxu0 0
        %1250 = vmatmul.mubr.bf16.gmra.mrb[0].mxu0 %v1132
        %v1251 = vpop.f32.mrb[0].mxu0
        %v1252 = vadd.f32 0.0, %v1251
        %v1253 = vpop.f32.mrb[0].mxu0
        %v1254 = vpop.f32.mrb[0].mxu0
        %v1255 = vadd.f32 0.0, %v1254
        %v1256 = vpop.f32.mrb[0].mxu0
        %1257 = vmatprep.mubr.bf16.mxu0 0
        %1258 = vmatmul.mubr.bf16.gmra.mrb[0].mxu0 %v1135
        %v1259 = vpop.f32.mrb[0].mxu0
        %v1260 = vadd.f32 0.0, %v1259
        %v1261 = vpop.f32.mrb[0].mxu0
        %v1262 = vpop.f32.mrb[0].mxu0
        %v1263 = vadd.f32 0.0, %v1262
        %v1264 = vpop.f32.mrb[0].mxu0
        %1265 = vmatprep.mubr.bf16.mxu0 0
        %1266 = vmatmul.mubr.bf16.gmra.mrb[0].mxu0 %v1138
        %v1267 = vpop.f32.mrb[0].mxu0
        %v1268 = vadd.f32 0.0, %v1267
        %v1269 = vpop.f32.mrb[0].mxu0
        %v1270 = vpop.f32.mrb[0].mxu0
        %v1271 = vadd.f32 0.0, %v1270
        %v1272 = vpop.f32.mrb[0].mxu0
        %1273 = vmatprep.mubr.bf16.mxu0 0
        %1274 = vmatmul.mubr.bf16.gmra.mrb[0].mxu0 %v1141
        %v1275 = vpop.f32.mrb[0].mxu0
        %v1276 = vadd.f32 0.0, %v1275
        %v1277 = vpop.f32.mrb[0].mxu0
        %v1278 = vpop.f32.mrb[0].mxu0
        %v1279 = vadd.f32 0.0, %v1278
        %v1280 = vpop.f32.mrb[0].mxu0
        %1281 = vmatprep.mubr.bf16.mxu0 0
        %1282 = vmatmul.mubr.bf16.gmra.mrb[0].mxu0 %v1144
        %v1283 = vpop.f32.mrb[0].mxu0
        %v1284 = vadd.f32 0.0, %v1283
        %v1285 = vpop.f32.mrb[0].mxu0
        %v1286 = vpop.f32.mrb[0].mxu0
        %v1287 = vadd.f32 0.0, %v1286
        %v1288 = vpop.f32.mrb[0].mxu0
        %1289 = vmatprep.mubr.bf16.mxu0 0
        %1290 = vmatmul.mubr.bf16.gmra.mrb[0].mxu0 %v1147
        %v1291 = vpop.f32.mrb[0].mxu0
        %v1292 = vadd.f32 0.0, %v1291
        %v1293 = vpop.f32.mrb[0].mxu0
        %v1294 = vpop.f32.mrb[0].mxu0
        %v1295 = vadd.f32 0.0, %v1294
        %v1296 = vpop.f32.mrb[0].mxu0
        %1297 = vmatprep.mubr.bf16.mxu0 0
        %1298 = vmatmul.mubr.bf16.gmra.mrb[0].mxu0 %v1150
        %v1299 = vpop.f32.mrb[0].mxu0
        %v1300 = vadd.f32 0.0, %v1299
        %v1301 = vpop.f32.mrb[0].mxu0
        %v1302 = vpop.f32.mrb[0].mxu0
        %v1303 = vadd.f32 0.0, %v1302
        %v1304 = vpop.f32.mrb[0].mxu0
        %1305 = vmatprep.mubr.bf16.mxu0 0
        %1306 = vmatmul.mubr.bf16.gmra.mrb[0].mxu0 %v1153
        %v1307 = vpop.f32.mrb[0].mxu0
        %v1308 = vadd.f32 0.0, %v1307
        %v1309 = vpop.f32.mrb[0].mxu0
        %v1310 = vpop.f32.mrb[0].mxu0
        %v1311 = vadd.f32 0.0, %v1310
        %v1312 = vpop.f32.mrb[0].mxu0
        %1313 = vmatprep.mubr.bf16.mxu0 0
        %1314 = vmatmul.mubr.bf16.gmra.mrb[0].mxu0 %v1156
        %v1315 = vpop.f32.mrb[0].mxu0
        %v1316 = vadd.f32 0.0, %v1315
        %v1317 = vpop.f32.mrb[0].mxu0
        %v1318 = vpop.f32.mrb[0].mxu0
        %v1319 = vadd.f32 0.0, %v1318
        %v1320 = vpop.f32.mrb[0].mxu0
        %1321 = vdwg.mxu0
        %v1322 = vadd.f32 %v1025, %v1196
        %v1323 = vadd.f32 %v1026, %v1199
        %v1324 = vadd.f32 %v1027, %v1204
        %v1325 = vadd.f32 %v1028, %v1207
        %v1326 = vadd.f32 %v1029, %v1212
        %v1327 = vadd.f32 %v1030, %v1215
        %v1328 = vadd.f32 %v1031, %v1220
        %v1329 = vadd.f32 %v1032, %v1223
        %v1330 = vadd.f32 %v1033, %v1228
        %v1331 = vadd.f32 %v1034, %v1231
        %v1332 = vadd.f32 %v1035, %v1236
        %v1333 = vadd.f32 %v1036, %v1239
        %v1334 = vadd.f32 %v1037, %v1244
        %v1335 = vadd.f32 %v1038, %v1247
        %v1336 = vadd.f32 %v1039, %v1252
        %v1337 = vadd.f32 %v1040, %v1255
        %v1338 = vadd.f32 %v1041, %v1260
        %v1339 = vadd.f32 %v1042, %v1263
        %v1340 = vadd.f32 %v1043, %v1268
        %v1341 = vadd.f32 %v1044, %v1271
        %v1342 = vadd.f32 %v1045, %v1276
        %v1343 = vadd.f32 %v1046, %v1279
        %v1344 = vadd.f32 %v1047, %v1284
        %v1345 = vadd.f32 %v1048, %v1287
        %v1346 = vadd.f32 %v1049, %v1292
        %v1347 = vadd.f32 %v1050, %v1295
        %v1348 = vadd.f32 %v1051, %v1300
        %v1349 = vadd.f32 %v1052, %v1303
        %v1350 = vadd.f32 %v1053, %v1308
        %v1351 = vadd.f32 %v1054, %v1311
        %v1352 = vadd.f32 %v1055, %v1316
        %v1353 = vadd.f32 %v1056, %v1319
        %v1354 = vld [vmem:[%s1059 + $0x1] sm:$0xff]
        %v1355 = vld [vmem:[%s1059 + $0x9] sm:$0xff]
        %v1356 = vld [vmem:[%s1059 + $0x19] sm:$0xff]
        %v1357 = vld [vmem:[%s1059 + $0x21] sm:$0xff]
        %v1358 = vld [vmem:[%s1059 + $0x31] sm:$0xff]
        %v1359 = vld [vmem:[%s1059 + $0x39] sm:$0xff]
        %v1360 = vld [vmem:[%s1059 + $0x49] sm:$0xff]
        %v1361 = vld [vmem:[%s1059 + $0x51] sm:$0xff]
        %v1362 = vld [vmem:[%s1059 + $0x61] sm:$0xff]
        %v1363 = vld [vmem:[%s1059 + $0x69] sm:$0xff]
        %v1364 = vld [vmem:[%s1059 + $0x79] sm:$0xff]
        %v1365 = vld [vmem:[%s1059 + $0x81] sm:$0xff]
        %v1366 = vld [vmem:[%s1059 + $0x91] sm:$0xff]
        %v1367 = vld [vmem:[%s1059 + $0x99] sm:$0xff]
        %v1368 = vld [vmem:[%s1059 + $0xa9] sm:$0xff]
        %v1369 = vld [vmem:[%s1059 + $0xb1] sm:$0xff]
        %v1370 = vld [vmem:[%s1059 + $0xc1] sm:$0xff]
        %v1371 = vld [vmem:[%s1059 + $0xc9] sm:$0xff]
        %v1372 = vld [vmem:[%s1059 + $0xd9] sm:$0xff]
        %v1373 = vld [vmem:[%s1059 + $0xe1] sm:$0xff]
        %v1374 = vld [vmem:[%s1059 + $0xf1] sm:$0xff]
        %v1375 = vld [vmem:[%s1059 + $0xf9] sm:$0xff]
        %v1376 = vld [vmem:[%s1059 + $0x109] sm:$0xff]
        %v1377 = vld [vmem:[%s1059 + $0x111] sm:$0xff]
        %v1378 = vld [vmem:[%s1059 + $0x121] sm:$0xff]
        %v1379 = vld [vmem:[%s1059 + $0x129] sm:$0xff]
        %v1380 = vld [vmem:[%s1059 + $0x139] sm:$0xff]
        %v1381 = vld [vmem:[%s1059 + $0x141] sm:$0xff]
        %v1382 = vld [vmem:[%s1059 + $0x151] sm:$0xff]
        %v1383 = vld [vmem:[%s1059 + $0x159] sm:$0xff]
        %v1384 = vld [vmem:[%s1059 + $0x169] sm:$0xff]
        %v1385 = vld [vmem:[%s1059 + $0x171] sm:$0xff]
        %v1386 = vpack.c.bf16 %v1355, %v1354
        %v1387 = vpack.c.bf16 %v1357, %v1356
        %v1388 = vpack.c.bf16 %v1359, %v1358
        %v1389 = vpack.c.bf16 %v1361, %v1360
        %v1390 = vpack.c.bf16 %v1363, %v1362
        %v1391 = vpack.c.bf16 %v1365, %v1364
        %v1392 = vpack.c.bf16 %v1367, %v1366
        %v1393 = vpack.c.bf16 %v1369, %v1368
        %v1394 = vpack.c.bf16 %v1371, %v1370
        %v1395 = vpack.c.bf16 %v1373, %v1372
        %v1396 = vpack.c.bf16 %v1375, %v1374
        %v1397 = vpack.c.bf16 %v1377, %v1376
        %v1398 = vpack.c.bf16 %v1379, %v1378
        %v1399 = vpack.c.bf16 %v1381, %v1380
        %v1400 = vpack.c.bf16 %v1383, %v1382
        %v1401 = vpack.c.bf16 %v1385, %v1384
        %s1402 = scalar_lea.vmem [#allocation5], 8
        %v1403 = vld [vmem:[%s1402] sm:$0x3]
        %v1405 = vsel %vm337, %v1386, 0
        %v1408 = vsel %vm337, %v1387, 0
        %v1411 = vsel %vm337, %v1388, 0
        %v1414 = vsel %vm337, %v1389, 0
        %v1417 = vsel %vm337, %v1390, 0
        %v1420 = vsel %vm337, %v1391, 0
        %v1423 = vsel %vm337, %v1392, 0
        %v1426 = vsel %vm337, %v1393, 0
        %v1429 = vsel %vm337, %v1394, 0
        %v1432 = vsel %vm337, %v1395, 0
        %v1435 = vsel %vm337, %v1396, 0
        %v1438 = vsel %vm337, %v1397, 0
        %v1441 = vsel %vm337, %v1398, 0
        %v1444 = vsel %vm337, %v1399, 0
        %v1447 = vsel %vm337, %v1400, 0
        %v1450 = vsel %vm337, %v1401, 0
        %v1453 = vsel %vm386, %v1403, 0
        %1455 = vmatprep.subr.bf16.mxu0 0
        %1456 = vmatpush1.bf16.msra.mxu0 %v1453
        %1457 = vmatprep.subr.bf16.mxu0 0
        %1458 = vmatpush1.bf16.msra.mxu0 0
        %1459 = vmatprep.subr.bf16.mxu0 0
        %1460 = vmatpush1.bf16.msra.mxu0 0
        %1461 = vmatprep.subr.bf16.mxu0 0
        %1462 = vmatpush1.bf16.msra.mxu0 0
        %1463 = vmatprep.subr.bf16.mxu0 0
        %1464 = vmatpush1.bf16.msra.mxu0 0
        %1465 = vmatprep.subr.bf16.mxu0 0
        %1466 = vmatpush1.bf16.msra.mxu0 0
        %1467 = vmatprep.subr.bf16.mxu0 0
        %1468 = vmatpush1.bf16.msra.mxu0 0
        %1469 = vmatprep.subr.bf16.mxu0 0
        %1470 = vmatpush1.bf16.msra.mxu0 0
        %1471 = vmatprep.subr.bf16.mxu0 0
        %1472 = vmatpush1.bf16.msra.mxu0 0
        %1473 = vmatprep.subr.bf16.mxu0 0
        %1474 = vmatpush1.bf16.msra.mxu0 0
        %1475 = vmatprep.subr.bf16.mxu0 0
        %1476 = vmatpush1.bf16.msra.mxu0 0
        %1477 = vmatprep.subr.bf16.mxu0 0
        %1478 = vmatpush1.bf16.msra.mxu0 0
        %1479 = vmatprep.subr.bf16.mxu0 0
        %1480 = vmatpush1.bf16.msra.mxu0 0
        %1481 = vmatprep.subr.bf16.mxu0 0
        %1482 = vmatpush1.bf16.msra.mxu0 0
        %1483 = vmatprep.subr.bf16.mxu0 0
        %1484 = vmatpush1.bf16.msra.mxu0 0
        %1485 = vmatprep.subr.bf16.mxu0 0
        %1486 = vmatpush1.bf16.msra.mxu0 0
        %1487 = vmatprep.mubr.bf16.mxu0 0
        %1488 = vmatmul.mubr.bf16.gmra.mrb[0].mxu0 %v1405
        %v1489 = vpop.f32.mrb[0].mxu0
        %v1490 = vadd.f32 0.0, %v1489
        %v1491 = vpop.f32.mrb[0].mxu0
        %v1492 = vpop.f32.mrb[0].mxu0
        %v1493 = vadd.f32 0.0, %v1492
        %v1494 = vpop.f32.mrb[0].mxu0
        %1495 = vmatprep.mubr.bf16.mxu0 0
        %1496 = vmatmul.mubr.bf16.gmra.mrb[0].mxu0 %v1408
        %v1497 = vpop.f32.mrb[0].mxu0
        %v1498 = vadd.f32 0.0, %v1497
        %v1499 = vpop.f32.mrb[0].mxu0
        %v1500 = vpop.f32.mrb[0].mxu0
        %v1501 = vadd.f32 0.0, %v1500
        %v1502 = vpop.f32.mrb[0].mxu0
        %1503 = vmatprep.mubr.bf16.mxu0 0
        %1504 = vmatmul.mubr.bf16.gmra.mrb[0].mxu0 %v1411
        %v1505 = vpop.f32.mrb[0].mxu0
        %v1506 = vadd.f32 0.0, %v1505
        %v1507 = vpop.f32.mrb[0].mxu0
        %v1508 = vpop.f32.mrb[0].mxu0
        %v1509 = vadd.f32 0.0, %v1508
        %v1510 = vpop.f32.mrb[0].mxu0
        %1511 = vmatprep.mubr.bf16.mxu0 0
        %1512 = vmatmul.mubr.bf16.gmra.mrb[0].mxu0 %v1414
        %v1513 = vpop.f32.mrb[0].mxu0
        %v1514 = vadd.f32 0.0, %v1513
        %v1515 = vpop.f32.mrb[0].mxu0
        %v1516 = vpop.f32.mrb[0].mxu0
        %v1517 = vadd.f32 0.0, %v1516
        %v1518 = vpop.f32.mrb[0].mxu0
        %1519 = vmatprep.mubr.bf16.mxu0 0
        %1520 = vmatmul.mubr.bf16.gmra.mrb[0].mxu0 %v1417
        %v1521 = vpop.f32.mrb[0].mxu0
        %v1522 = vadd.f32 0.0, %v1521
        %v1523 = vpop.f32.mrb[0].mxu0
        %v1524 = vpop.f32.mrb[0].mxu0
        %v1525 = vadd.f32 0.0, %v1524
        %v1526 = vpop.f32.mrb[0].mxu0
        %1527 = vmatprep.mubr.bf16.mxu0 0
        %1528 = vmatmul.mubr.bf16.gmra.mrb[0].mxu0 %v1420
        %v1529 = vpop.f32.mrb[0].mxu0
        %v1530 = vadd.f32 0.0, %v1529
        %v1531 = vpop.f32.mrb[0].mxu0
        %v1532 = vpop.f32.mrb[0].mxu0
        %v1533 = vadd.f32 0.0, %v1532
        %v1534 = vpop.f32.mrb[0].mxu0
        %1535 = vmatprep.mubr.bf16.mxu0 0
        %1536 = vmatmul.mubr.bf16.gmra.mrb[0].mxu0 %v1423
        %v1537 = vpop.f32.mrb[0].mxu0
        %v1538 = vadd.f32 0.0, %v1537
        %v1539 = vpop.f32.mrb[0].mxu0
        %v1540 = vpop.f32.mrb[0].mxu0
        %v1541 = vadd.f32 0.0, %v1540
        %v1542 = vpop.f32.mrb[0].mxu0
        %1543 = vmatprep.mubr.bf16.mxu0 0
        %1544 = vmatmul.mubr.bf16.gmra.mrb[0].mxu0 %v1426
        %v1545 = vpop.f32.mrb[0].mxu0
        %v1546 = vadd.f32 0.0, %v1545
        %v1547 = vpop.f32.mrb[0].mxu0
        %v1548 = vpop.f32.mrb[0].mxu0
        %v1549 = vadd.f32 0.0, %v1548
        %v1550 = vpop.f32.mrb[0].mxu0
        %1551 = vmatprep.mubr.bf16.mxu0 0
        %1552 = vmatmul.mubr.bf16.gmra.mrb[0].mxu0 %v1429
        %v1553 = vpop.f32.mrb[0].mxu0
        %v1554 = vadd.f32 0.0, %v1553
        %v1555 = vpop.f32.mrb[0].mxu0
        %v1556 = vpop.f32.mrb[0].mxu0
        %v1557 = vadd.f32 0.0, %v1556
        %v1558 = vpop.f32.mrb[0].mxu0
        %1559 = vmatprep.mubr.bf16.mxu0 0
        %1560 = vmatmul.mubr.bf16.gmra.mrb[0].mxu0 %v1432
        %v1561 = vpop.f32.mrb[0].mxu0
        %v1562 = vadd.f32 0.0, %v1561
        %v1563 = vpop.f32.mrb[0].mxu0
        %v1564 = vpop.f32.mrb[0].mxu0
        %v1565 = vadd.f32 0.0, %v1564
        %v1566 = vpop.f32.mrb[0].mxu0
        %1567 = vmatprep.mubr.bf16.mxu0 0
        %1568 = vmatmul.mubr.bf16.gmra.mrb[0].mxu0 %v1435
        %v1569 = vpop.f32.mrb[0].mxu0
        %v1570 = vadd.f32 0.0, %v1569
        %v1571 = vpop.f32.mrb[0].mxu0
        %v1572 = vpop.f32.mrb[0].mxu0
        %v1573 = vadd.f32 0.0, %v1572
        %v1574 = vpop.f32.mrb[0].mxu0
        %1575 = vmatprep.mubr.bf16.mxu0 0
        %1576 = vmatmul.mubr.bf16.gmra.mrb[0].mxu0 %v1438
        %v1577 = vpop.f32.mrb[0].mxu0
        %v1578 = vadd.f32 0.0, %v1577
        %v1579 = vpop.f32.mrb[0].mxu0
        %v1580 = vpop.f32.mrb[0].mxu0
        %v1581 = vadd.f32 0.0, %v1580
        %v1582 = vpop.f32.mrb[0].mxu0
        %1583 = vmatprep.mubr.bf16.mxu0 0
        %1584 = vmatmul.mubr.bf16.gmra.mrb[0].mxu0 %v1441
        %v1585 = vpop.f32.mrb[0].mxu0
        %v1586 = vadd.f32 0.0, %v1585
        %v1587 = vpop.f32.mrb[0].mxu0
        %v1588 = vpop.f32.mrb[0].mxu0
        %v1589 = vadd.f32 0.0, %v1588
        %v1590 = vpop.f32.mrb[0].mxu0
        %1591 = vmatprep.mubr.bf16.mxu0 0
        %1592 = vmatmul.mubr.bf16.gmra.mrb[0].mxu0 %v1444
        %v1593 = vpop.f32.mrb[0].mxu0
        %v1594 = vadd.f32 0.0, %v1593
        %v1595 = vpop.f32.mrb[0].mxu0
        %v1596 = vpop.f32.mrb[0].mxu0
        %v1597 = vadd.f32 0.0, %v1596
        %v1598 = vpop.f32.mrb[0].mxu0
        %1599 = vmatprep.mubr.bf16.mxu0 0
        %1600 = vmatmul.mubr.bf16.gmra.mrb[0].mxu0 %v1447
        %v1601 = vpop.f32.mrb[0].mxu0
        %v1602 = vadd.f32 0.0, %v1601
        %v1603 = vpop.f32.mrb[0].mxu0
        %v1604 = vpop.f32.mrb[0].mxu0
        %v1605 = vadd.f32 0.0, %v1604
        %v1606 = vpop.f32.mrb[0].mxu0
        %1607 = vmatprep.mubr.bf16.mxu0 0
        %1608 = vmatmul.mubr.bf16.gmra.mrb[0].mxu0 %v1450
        %v1609 = vpop.f32.mrb[0].mxu0
        %v1610 = vadd.f32 0.0, %v1609
        %v1611 = vpop.f32.mrb[0].mxu0
        %v1612 = vpop.f32.mrb[0].mxu0
        %v1613 = vadd.f32 0.0, %v1612
        %v1614 = vpop.f32.mrb[0].mxu0
        %1615 = vdwg.mxu0
        %v1616 = vadd.f32 %v1322, %v1490
        %v1617 = vadd.f32 %v1323, %v1493
        %v1618 = vadd.f32 %v1324, %v1498
        %v1619 = vadd.f32 %v1325, %v1501
        %v1620 = vadd.f32 %v1326, %v1506
        %v1621 = vadd.f32 %v1327, %v1509
        %v1622 = vadd.f32 %v1328, %v1514
        %v1623 = vadd.f32 %v1329, %v1517
        %v1624 = vadd.f32 %v1330, %v1522
        %v1625 = vadd.f32 %v1331, %v1525
        %v1626 = vadd.f32 %v1332, %v1530
        %v1627 = vadd.f32 %v1333, %v1533
        %v1628 = vadd.f32 %v1334, %v1538
        %v1629 = vadd.f32 %v1335, %v1541
        %v1630 = vadd.f32 %v1336, %v1546
        %v1631 = vadd.f32 %v1337, %v1549
        %v1632 = vadd.f32 %v1338, %v1554
        %v1633 = vadd.f32 %v1339, %v1557
        %v1634 = vadd.f32 %v1340, %v1562
        %v1635 = vadd.f32 %v1341, %v1565
        %v1636 = vadd.f32 %v1342, %v1570
        %v1637 = vadd.f32 %v1343, %v1573
        %v1638 = vadd.f32 %v1344, %v1578
        %v1639 = vadd.f32 %v1345, %v1581
        %v1640 = vadd.f32 %v1346, %v1586
        %v1641 = vadd.f32 %v1347, %v1589
        %v1642 = vadd.f32 %v1348, %v1594
        %v1643 = vadd.f32 %v1349, %v1597
        %v1644 = vadd.f32 %v1350, %v1602
        %v1645 = vadd.f32 %v1351, %v1605
        %v1646 = vadd.f32 %v1352, %v1610
        %v1647 = vadd.f32 %v1353, %v1613
        %v1648 = vld [vmem:[%s1059 + $0x2] sm:$0xff]
        %v1649 = vld [vmem:[%s1059 + $0xa] sm:$0xff]
        %v1650 = vld [vmem:[%s1059 + $0x1a] sm:$0xff]
        %v1651 = vld [vmem:[%s1059 + $0x22] sm:$0xff]
        %v1652 = vld [vmem:[%s1059 + $0x32] sm:$0xff]
        %v1653 = vld [vmem:[%s1059 + $0x3a] sm:$0xff]
        %v1654 = vld [vmem:[%s1059 + $0x4a] sm:$0xff]
        %v1655 = vld [vmem:[%s1059 + $0x52] sm:$0xff]
        %v1656 = vld [vmem:[%s1059 + $0x62] sm:$0xff]
        %v1657 = vld [vmem:[%s1059 + $0x6a] sm:$0xff]
        %v1658 = vld [vmem:[%s1059 + $0x7a] sm:$0xff]
        %v1659 = vld [vmem:[%s1059 + $0x82] sm:$0xff]
        %v1660 = vld [vmem:[%s1059 + $0x92] sm:$0xff]
        %v1661 = vld [vmem:[%s1059 + $0x9a] sm:$0xff]
        %v1662 = vld [vmem:[%s1059 + $0xaa] sm:$0xff]
        %v1663 = vld [vmem:[%s1059 + $0xb2] sm:$0xff]
        %v1664 = vld [vmem:[%s1059 + $0xc2] sm:$0xff]
        %v1665 = vld [vmem:[%s1059 + $0xca] sm:$0xff]
        %v1666 = vld [vmem:[%s1059 + $0xda] sm:$0xff]
        %v1667 = vld [vmem:[%s1059 + $0xe2] sm:$0xff]
        %v1668 = vld [vmem:[%s1059 + $0xf2] sm:$0xff]
        %v1669 = vld [vmem:[%s1059 + $0xfa] sm:$0xff]
        %v1670 = vld [vmem:[%s1059 + $0x10a] sm:$0xff]
        %v1671 = vld [vmem:[%s1059 + $0x112] sm:$0xff]
        %v1672 = vld [vmem:[%s1059 + $0x122] sm:$0xff]
        %v1673 = vld [vmem:[%s1059 + $0x12a] sm:$0xff]
        %v1674 = vld [vmem:[%s1059 + $0x13a] sm:$0xff]
        %v1675 = vld [vmem:[%s1059 + $0x142] sm:$0xff]
        %v1676 = vld [vmem:[%s1059 + $0x152] sm:$0xff]
        %v1677 = vld [vmem:[%s1059 + $0x15a] sm:$0xff]
        %v1678 = vld [vmem:[%s1059 + $0x16a] sm:$0xff]
        %v1679 = vld [vmem:[%s1059 + $0x172] sm:$0xff]
        %v1680 = vpack.c.bf16 %v1649, %v1648
        %v1681 = vpack.c.bf16 %v1651, %v1650
        %v1682 = vpack.c.bf16 %v1653, %v1652
        %v1683 = vpack.c.bf16 %v1655, %v1654
        %v1684 = vpack.c.bf16 %v1657, %v1656
        %v1685 = vpack.c.bf16 %v1659, %v1658
        %v1686 = vpack.c.bf16 %v1661, %v1660
        %v1687 = vpack.c.bf16 %v1663, %v1662
        %v1688 = vpack.c.bf16 %v1665, %v1664
        %v1689 = vpack.c.bf16 %v1667, %v1666
        %v1690 = vpack.c.bf16 %v1669, %v1668
        %v1691 = vpack.c.bf16 %v1671, %v1670
        %v1692 = vpack.c.bf16 %v1673, %v1672
        %v1693 = vpack.c.bf16 %v1675, %v1674
        %v1694 = vpack.c.bf16 %v1677, %v1676
        %v1695 = vpack.c.bf16 %v1679, %v1678
        %s1696 = scalar_lea.vmem [#allocation5], 10
        %v1697 = vld [vmem:[%s1696] sm:$0x3]
        %v1699 = vsel %vm337, %v1680, 0
        %v1702 = vsel %vm337, %v1681, 0
        %v1705 = vsel %vm337, %v1682, 0
        %v1708 = vsel %vm337, %v1683, 0
        %v1711 = vsel %vm337, %v1684, 0
        %v1714 = vsel %vm337, %v1685, 0
        %v1717 = vsel %vm337, %v1686, 0
        %v1720 = vsel %vm337, %v1687, 0
        %v1723 = vsel %vm337, %v1688, 0
        %v1726 = vsel %vm337, %v1689, 0
        %v1729 = vsel %vm337, %v1690, 0
        %v1732 = vsel %vm337, %v1691, 0
        %v1735 = vsel %vm337, %v1692, 0
        %v1738 = vsel %vm337, %v1693, 0
        %v1741 = vsel %vm337, %v1694, 0
        %v1744 = vsel %vm337, %v1695, 0
        %v1747 = vsel %vm386, %v1697, 0
        %1749 = vmatprep.subr.bf16.mxu0 0
        %1750 = vmatpush1.bf16.msra.mxu0 %v1747
        %1751 = vmatprep.subr.bf16.mxu0 0
        %1752 = vmatpush1.bf16.msra.mxu0 0
        %1753 = vmatprep.subr.bf16.mxu0 0
        %1754 = vmatpush1.bf16.msra.mxu0 0
        %1755 = vmatprep.subr.bf16.mxu0 0
        %1756 = vmatpush1.bf16.msra.mxu0 0
        %1757 = vmatprep.subr.bf16.mxu0 0
        %1758 = vmatpush1.bf16.msra.mxu0 0
        %1759 = vmatprep.subr.bf16.mxu0 0
        %1760 = vmatpush1.bf16.msra.mxu0 0
        %1761 = vmatprep.subr.bf16.mxu0 0
        %1762 = vmatpush1.bf16.msra.mxu0 0
        %1763 = vmatprep.subr.bf16.mxu0 0
        %1764 = vmatpush1.bf16.msra.mxu0 0
        %1765 = vmatprep.subr.bf16.mxu0 0
        %1766 = vmatpush1.bf16.msra.mxu0 0
        %1767 = vmatprep.subr.bf16.mxu0 0
        %1768 = vmatpush1.bf16.msra.mxu0 0
        %1769 = vmatprep.subr.bf16.mxu0 0
        %1770 = vmatpush1.bf16.msra.mxu0 0
        %1771 = vmatprep.subr.bf16.mxu0 0
        %1772 = vmatpush1.bf16.msra.mxu0 0
        %1773 = vmatprep.subr.bf16.mxu0 0
        %1774 = vmatpush1.bf16.msra.mxu0 0
        %1775 = vmatprep.subr.bf16.mxu0 0
        %1776 = vmatpush1.bf16.msra.mxu0 0
        %1777 = vmatprep.subr.bf16.mxu0 0
        %1778 = vmatpush1.bf16.msra.mxu0 0
        %1779 = vmatprep.subr.bf16.mxu0 0
        %1780 = vmatpush1.bf16.msra.mxu0 0
        %1781 = vmatprep.mubr.bf16.mxu0 0
        %1782 = vmatmul.mubr.bf16.gmra.mrb[0].mxu0 %v1699
        %v1783 = vpop.f32.mrb[0].mxu0
        %v1784 = vadd.f32 0.0, %v1783
        %v1785 = vpop.f32.mrb[0].mxu0
        %v1786 = vpop.f32.mrb[0].mxu0
        %v1787 = vadd.f32 0.0, %v1786
        %v1788 = vpop.f32.mrb[0].mxu0
        %1789 = vmatprep.mubr.bf16.mxu0 0
        %1790 = vmatmul.mubr.bf16.gmra.mrb[0].mxu0 %v1702
        %v1791 = vpop.f32.mrb[0].mxu0
        %v1792 = vadd.f32 0.0, %v1791
        %v1793 = vpop.f32.mrb[0].mxu0
        %v1794 = vpop.f32.mrb[0].mxu0
        %v1795 = vadd.f32 0.0, %v1794
        %v1796 = vpop.f32.mrb[0].mxu0
        %1797 = vmatprep.mubr.bf16.mxu0 0
        %1798 = vmatmul.mubr.bf16.gmra.mrb[0].mxu0 %v1705
        %v1799 = vpop.f32.mrb[0].mxu0
        %v1800 = vadd.f32 0.0, %v1799
        %v1801 = vpop.f32.mrb[0].mxu0
        %v1802 = vpop.f32.mrb[0].mxu0
        %v1803 = vadd.f32 0.0, %v1802
        %v1804 = vpop.f32.mrb[0].mxu0
        %1805 = vmatprep.mubr.bf16.mxu0 0
        %1806 = vmatmul.mubr.bf16.gmra.mrb[0].mxu0 %v1708
        %v1807 = vpop.f32.mrb[0].mxu0
        %v1808 = vadd.f32 0.0, %v1807
        %v1809 = vpop.f32.mrb[0].mxu0
        %v1810 = vpop.f32.mrb[0].mxu0
        %v1811 = vadd.f32 0.0, %v1810
        %v1812 = vpop.f32.mrb[0].mxu0
        %1813 = vmatprep.mubr.bf16.mxu0 0
        %1814 = vmatmul.mubr.bf16.gmra.mrb[0].mxu0 %v1711
        %v1815 = vpop.f32.mrb[0].mxu0
        %v1816 = vadd.f32 0.0, %v1815
        %v1817 = vpop.f32.mrb[0].mxu0
        %v1818 = vpop.f32.mrb[0].mxu0
        %v1819 = vadd.f32 0.0, %v1818
        %v1820 = vpop.f32.mrb[0].mxu0
        %1821 = vmatprep.mubr.bf16.mxu0 0
        %1822 = vmatmul.mubr.bf16.gmra.mrb[0].mxu0 %v1714
        %v1823 = vpop.f32.mrb[0].mxu0
        %v1824 = vadd.f32 0.0, %v1823
        %v1825 = vpop.f32.mrb[0].mxu0
        %v1826 = vpop.f32.mrb[0].mxu0
        %v1827 = vadd.f32 0.0, %v1826
        %v1828 = vpop.f32.mrb[0].mxu0
        %1829 = vmatprep.mubr.bf16.mxu0 0
        %1830 = vmatmul.mubr.bf16.gmra.mrb[0].mxu0 %v1717
        %v1831 = vpop.f32.mrb[0].mxu0
        %v1832 = vadd.f32 0.0, %v1831
        %v1833 = vpop.f32.mrb[0].mxu0
        %v1834 = vpop.f32.mrb[0].mxu0
        %v1835 = vadd.f32 0.0, %v1834
        %v1836 = vpop.f32.mrb[0].mxu0
        %1837 = vmatprep.mubr.bf16.mxu0 0
        %1838 = vmatmul.mubr.bf16.gmra.mrb[0].mxu0 %v1720
        %v1839 = vpop.f32.mrb[0].mxu0
        %v1840 = vadd.f32 0.0, %v1839
        %v1841 = vpop.f32.mrb[0].mxu0
        %v1842 = vpop.f32.mrb[0].mxu0
        %v1843 = vadd.f32 0.0, %v1842
        %v1844 = vpop.f32.mrb[0].mxu0
        %1845 = vmatprep.mubr.bf16.mxu0 0
        %1846 = vmatmul.mubr.bf16.gmra.mrb[0].mxu0 %v1723
        %v1847 = vpop.f32.mrb[0].mxu0
        %v1848 = vadd.f32 0.0, %v1847
        %v1849 = vpop.f32.mrb[0].mxu0
        %v1850 = vpop.f32.mrb[0].mxu0
        %v1851 = vadd.f32 0.0, %v1850
        %v1852 = vpop.f32.mrb[0].mxu0
        %1853 = vmatprep.mubr.bf16.mxu0 0
        %1854 = vmatmul.mubr.bf16.gmra.mrb[0].mxu0 %v1726
        %v1855 = vpop.f32.mrb[0].mxu0
        %v1856 = vadd.f32 0.0, %v1855
        %v1857 = vpop.f32.mrb[0].mxu0
        %v1858 = vpop.f32.mrb[0].mxu0
        %v1859 = vadd.f32 0.0, %v1858
        %v1860 = vpop.f32.mrb[0].mxu0
        %1861 = vmatprep.mubr.bf16.mxu0 0
        %1862 = vmatmul.mubr.bf16.gmra.mrb[0].mxu0 %v1729
        %v1863 = vpop.f32.mrb[0].mxu0
        %v1864 = vadd.f32 0.0, %v1863
        %v1865 = vpop.f32.mrb[0].mxu0
        %v1866 = vpop.f32.mrb[0].mxu0
        %v1867 = vadd.f32 0.0, %v1866
        %v1868 = vpop.f32.mrb[0].mxu0
        %1869 = vmatprep.mubr.bf16.mxu0 0
        %1870 = vmatmul.mubr.bf16.gmra.mrb[0].mxu0 %v1732
        %v1871 = vpop.f32.mrb[0].mxu0
        %v1872 = vadd.f32 0.0, %v1871
        %v1873 = vpop.f32.mrb[0].mxu0
        %v1874 = vpop.f32.mrb[0].mxu0
        %v1875 = vadd.f32 0.0, %v1874
        %v1876 = vpop.f32.mrb[0].mxu0
        %1877 = vmatprep.mubr.bf16.mxu0 0
        %1878 = vmatmul.mubr.bf16.gmra.mrb[0].mxu0 %v1735
        %v1879 = vpop.f32.mrb[0].mxu0
        %v1880 = vadd.f32 0.0, %v1879
        %v1881 = vpop.f32.mrb[0].mxu0
        %v1882 = vpop.f32.mrb[0].mxu0
        %v1883 = vadd.f32 0.0, %v1882
        %v1884 = vpop.f32.mrb[0].mxu0
        %1885 = vmatprep.mubr.bf16.mxu0 0
        %1886 = vmatmul.mubr.bf16.gmra.mrb[0].mxu0 %v1738
        %v1887 = vpop.f32.mrb[0].mxu0
        %v1888 = vadd.f32 0.0, %v1887
        %v1889 = vpop.f32.mrb[0].mxu0
        %v1890 = vpop.f32.mrb[0].mxu0
        %v1891 = vadd.f32 0.0, %v1890
        %v1892 = vpop.f32.mrb[0].mxu0
        %1893 = vmatprep.mubr.bf16.mxu0 0
        %1894 = vmatmul.mubr.bf16.gmra.mrb[0].mxu0 %v1741
        %v1895 = vpop.f32.mrb[0].mxu0
        %v1896 = vadd.f32 0.0, %v1895
        %v1897 = vpop.f32.mrb[0].mxu0
        %v1898 = vpop.f32.mrb[0].mxu0
        %v1899 = vadd.f32 0.0, %v1898
        %v1900 = vpop.f32.mrb[0].mxu0
        %1901 = vmatprep.mubr.bf16.mxu0 0
        %1902 = vmatmul.mubr.bf16.gmra.mrb[0].mxu0 %v1744
        %v1903 = vpop.f32.mrb[0].mxu0
        %v1904 = vadd.f32 0.0, %v1903
        %v1905 = vpop.f32.mrb[0].mxu0
        %v1906 = vpop.f32.mrb[0].mxu0
        %v1907 = vadd.f32 0.0, %v1906
        %v1908 = vpop.f32.mrb[0].mxu0
        %1909 = vdwg.mxu0
        %v1910 = vadd.f32 %v1616, %v1784
        %v1911 = vadd.f32 %v1617, %v1787
        %v1912 = vadd.f32 %v1618, %v1792
        %v1913 = vadd.f32 %v1619, %v1795
        %v1914 = vadd.f32 %v1620, %v1800
        %v1915 = vadd.f32 %v1621, %v1803
        %v1916 = vadd.f32 %v1622, %v1808
        %v1917 = vadd.f32 %v1623, %v1811
        %v1918 = vadd.f32 %v1624, %v1816
        %v1919 = vadd.f32 %v1625, %v1819
        %v1920 = vadd.f32 %v1626, %v1824
        %v1921 = vadd.f32 %v1627, %v1827
        %v1922 = vadd.f32 %v1628, %v1832
        %v1923 = vadd.f32 %v1629, %v1835
        %v1924 = vadd.f32 %v1630, %v1840
        %v1925 = vadd.f32 %v1631, %v1843
        %v1926 = vadd.f32 %v1632, %v1848
        %v1927 = vadd.f32 %v1633, %v1851
        %v1928 = vadd.f32 %v1634, %v1856
        %v1929 = vadd.f32 %v1635, %v1859
        %v1930 = vadd.f32 %v1636, %v1864
        %v1931 = vadd.f32 %v1637, %v1867
        %v1932 = vadd.f32 %v1638, %v1872
        %v1933 = vadd.f32 %v1639, %v1875
        %v1934 = vadd.f32 %v1640, %v1880
        %v1935 = vadd.f32 %v1641, %v1883
        %v1936 = vadd.f32 %v1642, %v1888
        %v1937 = vadd.f32 %v1643, %v1891
        %v1938 = vadd.f32 %v1644, %v1896
        %v1939 = vadd.f32 %v1645, %v1899
        %v1940 = vadd.f32 %v1646, %v1904
        %v1941 = vadd.f32 %v1647, %v1907
        %s1942 = sadd.s32 %s235, 2
        %s1943 = smul.u32 %s1942, 24
        %s1944 = scalar_lea.vmem %s199, %s1943 [#allocation2]
        %v1945 = vld [vmem:[%s1944] sm:$0xff]
        %v1946 = vld [vmem:[%s1944 + $0x8] sm:$0xff]
        %v1947 = vld [vmem:[%s1944 + $0x18] sm:$0xff]
        %v1948 = vld [vmem:[%s1944 + $0x20] sm:$0xff]
        %v1949 = vld [vmem:[%s1944 + $0x30] sm:$0xff]
        %v1950 = vld [vmem:[%s1944 + $0x38] sm:$0xff]
        %v1951 = vld [vmem:[%s1944 + $0x48] sm:$0xff]
        %v1952 = vld [vmem:[%s1944 + $0x50] sm:$0xff]
        %v1953 = vld [vmem:[%s1944 + $0x60] sm:$0xff]
        %v1954 = vld [vmem:[%s1944 + $0x68] sm:$0xff]
        %v1955 = vld [vmem:[%s1944 + $0x78] sm:$0xff]
        %v1956 = vld [vmem:[%s1944 + $0x80] sm:$0xff]
        %v1957 = vld [vmem:[%s1944 + $0x90] sm:$0xff]
        %v1958 = vld [vmem:[%s1944 + $0x98] sm:$0xff]
        %v1959 = vld [vmem:[%s1944 + $0xa8] sm:$0xff]
        %v1960 = vld [vmem:[%s1944 + $0xb0] sm:$0xff]
        %v1961 = vld [vmem:[%s1944 + $0xc0] sm:$0xff]
        %v1962 = vld [vmem:[%s1944 + $0xc8] sm:$0xff]
        %v1963 = vld [vmem:[%s1944 + $0xd8] sm:$0xff]
        %v1964 = vld [vmem:[%s1944 + $0xe0] sm:$0xff]
        %v1965 = vld [vmem:[%s1944 + $0xf0] sm:$0xff]
        %v1966 = vld [vmem:[%s1944 + $0xf8] sm:$0xff]
        %v1967 = vld [vmem:[%s1944 + $0x108] sm:$0xff]
        %v1968 = vld [vmem:[%s1944 + $0x110] sm:$0xff]
        %v1969 = vld [vmem:[%s1944 + $0x120] sm:$0xff]
        %v1970 = vld [vmem:[%s1944 + $0x128] sm:$0xff]
        %v1971 = vld [vmem:[%s1944 + $0x138] sm:$0xff]
        %v1972 = vld [vmem:[%s1944 + $0x140] sm:$0xff]
        %v1973 = vld [vmem:[%s1944 + $0x150] sm:$0xff]
        %v1974 = vld [vmem:[%s1944 + $0x158] sm:$0xff]
        %v1975 = vld [vmem:[%s1944 + $0x168] sm:$0xff]
        %v1976 = vld [vmem:[%s1944 + $0x170] sm:$0xff]
        %v1977 = vpack.c.bf16 %v1946, %v1945
        %v1978 = vpack.c.bf16 %v1948, %v1947
        %v1979 = vpack.c.bf16 %v1950, %v1949
        %v1980 = vpack.c.bf16 %v1952, %v1951
        %v1981 = vpack.c.bf16 %v1954, %v1953
        %v1982 = vpack.c.bf16 %v1956, %v1955
        %v1983 = vpack.c.bf16 %v1958, %v1957
        %v1984 = vpack.c.bf16 %v1960, %v1959
        %v1985 = vpack.c.bf16 %v1962, %v1961
        %v1986 = vpack.c.bf16 %v1964, %v1963
        %v1987 = vpack.c.bf16 %v1966, %v1965
        %v1988 = vpack.c.bf16 %v1968, %v1967
        %v1989 = vpack.c.bf16 %v1970, %v1969
        %v1990 = vpack.c.bf16 %v1972, %v1971
        %v1991 = vpack.c.bf16 %v1974, %v1973
        %v1992 = vpack.c.bf16 %v1976, %v1975
        %s1993 = scalar_lea.vmem [#allocation5], 12
        %v1994 = vld [vmem:[%s1993] sm:$0x3]
        %v1996 = vsel %vm337, %v1977, 0
        %v1999 = vsel %vm337, %v1978, 0
        %v2002 = vsel %vm337, %v1979, 0
        %v2005 = vsel %vm337, %v1980, 0
        %v2008 = vsel %vm337, %v1981, 0
        %v2011 = vsel %vm337, %v1982, 0
        %v2014 = vsel %vm337, %v1983, 0
        %v2017 = vsel %vm337, %v1984, 0
        %v2020 = vsel %vm337, %v1985, 0
        %v2023 = vsel %vm337, %v1986, 0
        %v2026 = vsel %vm337, %v1987, 0
        %v2029 = vsel %vm337, %v1988, 0
        %v2032 = vsel %vm337, %v1989, 0
        %v2035 = vsel %vm337, %v1990, 0
        %v2038 = vsel %vm337, %v1991, 0
        %v2041 = vsel %vm337, %v1992, 0
        %v2044 = vsel %vm386, %v1994, 0
        %2046 = vmatprep.subr.bf16.mxu0 0
        %2047 = vmatpush1.bf16.msra.mxu0 %v2044
        %2048 = vmatprep.subr.bf16.mxu0 0
        %2049 = vmatpush1.bf16.msra.mxu0 0
        %2050 = vmatprep.subr.bf16.mxu0 0
        %2051 = vmatpush1.bf16.msra.mxu0 0
        %2052 = vmatprep.subr.bf16.mxu0 0
        %2053 = vmatpush1.bf16.msra.mxu0 0
        %2054 = vmatprep.subr.bf16.mxu0 0
        %2055 = vmatpush1.bf16.msra.mxu0 0
        %2056 = vmatprep.subr.bf16.mxu0 0
        %2057 = vmatpush1.bf16.msra.mxu0 0
        %2058 = vmatprep.subr.bf16.mxu0 0
        %2059 = vmatpush1.bf16.msra.mxu0 0
        %2060 = vmatprep.subr.bf16.mxu0 0
        %2061 = vmatpush1.bf16.msra.mxu0 0
        %2062 = vmatprep.subr.bf16.mxu0 0
        %2063 = vmatpush1.bf16.msra.mxu0 0
        %2064 = vmatprep.subr.bf16.mxu0 0
        %2065 = vmatpush1.bf16.msra.mxu0 0
        %2066 = vmatprep.subr.bf16.mxu0 0
        %2067 = vmatpush1.bf16.msra.mxu0 0
        %2068 = vmatprep.subr.bf16.mxu0 0
        %2069 = vmatpush1.bf16.msra.mxu0 0
        %2070 = vmatprep.subr.bf16.mxu0 0
        %2071 = vmatpush1.bf16.msra.mxu0 0
        %2072 = vmatprep.subr.bf16.mxu0 0
        %2073 = vmatpush1.bf16.msra.mxu0 0
        %2074 = vmatprep.subr.bf16.mxu0 0
        %2075 = vmatpush1.bf16.msra.mxu0 0
        %2076 = vmatprep.subr.bf16.mxu0 0
        %2077 = vmatpush1.bf16.msra.mxu0 0
        %2078 = vmatprep.mubr.bf16.mxu0 0
        %2079 = vmatmul.mubr.bf16.gmra.mrb[0].mxu0 %v1996
        %v2080 = vpop.f32.mrb[0].mxu0
        %v2081 = vadd.f32 0.0, %v2080
        %v2082 = vpop.f32.mrb[0].mxu0
        %v2083 = vpop.f32.mrb[0].mxu0
        %v2084 = vadd.f32 0.0, %v2083
        %v2085 = vpop.f32.mrb[0].mxu0
        %2086 = vmatprep.mubr.bf16.mxu0 0
        %2087 = vmatmul.mubr.bf16.gmra.mrb[0].mxu0 %v1999
        %v2088 = vpop.f32.mrb[0].mxu0
        %v2089 = vadd.f32 0.0, %v2088
        %v2090 = vpop.f32.mrb[0].mxu0
        %v2091 = vpop.f32.mrb[0].mxu0
        %v2092 = vadd.f32 0.0, %v2091
        %v2093 = vpop.f32.mrb[0].mxu0
        %2094 = vmatprep.mubr.bf16.mxu0 0
        %2095 = vmatmul.mubr.bf16.gmra.mrb[0].mxu0 %v2002
        %v2096 = vpop.f32.mrb[0].mxu0
        %v2097 = vadd.f32 0.0, %v2096
        %v2098 = vpop.f32.mrb[0].mxu0
        %v2099 = vpop.f32.mrb[0].mxu0
        %v2100 = vadd.f32 0.0, %v2099
        %v2101 = vpop.f32.mrb[0].mxu0
        %2102 = vmatprep.mubr.bf16.mxu0 0
        %2103 = vmatmul.mubr.bf16.gmra.mrb[0].mxu0 %v2005
        %v2104 = vpop.f32.mrb[0].mxu0
        %v2105 = vadd.f32 0.0, %v2104
        %v2106 = vpop.f32.mrb[0].mxu0
        %v2107 = vpop.f32.mrb[0].mxu0
        %v2108 = vadd.f32 0.0, %v2107
        %v2109 = vpop.f32.mrb[0].mxu0
        %2110 = vmatprep.mubr.bf16.mxu0 0
        %2111 = vmatmul.mubr.bf16.gmra.mrb[0].mxu0 %v2008
        %v2112 = vpop.f32.mrb[0].mxu0
        %v2113 = vadd.f32 0.0, %v2112
        %v2114 = vpop.f32.mrb[0].mxu0
        %v2115 = vpop.f32.mrb[0].mxu0
        %v2116 = vadd.f32 0.0, %v2115
        %v2117 = vpop.f32.mrb[0].mxu0
        %2118 = vmatprep.mubr.bf16.mxu0 0
        %2119 = vmatmul.mubr.bf16.gmra.mrb[0].mxu0 %v2011
        %v2120 = vpop.f32.mrb[0].mxu0
        %v2121 = vadd.f32 0.0, %v2120
        %v2122 = vpop.f32.mrb[0].mxu0
        %v2123 = vpop.f32.mrb[0].mxu0
        %v2124 = vadd.f32 0.0, %v2123
        %v2125 = vpop.f32.mrb[0].mxu0
        %2126 = vmatprep.mubr.bf16.mxu0 0
        %2127 = vmatmul.mubr.bf16.gmra.mrb[0].mxu0 %v2014
        %v2128 = vpop.f32.mrb[0].mxu0
        %v2129 = vadd.f32 0.0, %v2128
        %v2130 = vpop.f32.mrb[0].mxu0
        %v2131 = vpop.f32.mrb[0].mxu0
        %v2132 = vadd.f32 0.0, %v2131
        %v2133 = vpop.f32.mrb[0].mxu0
        %2134 = vmatprep.mubr.bf16.mxu0 0
        %2135 = vmatmul.mubr.bf16.gmra.mrb[0].mxu0 %v2017
        %v2136 = vpop.f32.mrb[0].mxu0
        %v2137 = vadd.f32 0.0, %v2136
        %v2138 = vpop.f32.mrb[0].mxu0
        %v2139 = vpop.f32.mrb[0].mxu0
        %v2140 = vadd.f32 0.0, %v2139
        %v2141 = vpop.f32.mrb[0].mxu0
        %2142 = vmatprep.mubr.bf16.mxu0 0
        %2143 = vmatmul.mubr.bf16.gmra.mrb[0].mxu0 %v2020
        %v2144 = vpop.f32.mrb[0].mxu0
        %v2145 = vadd.f32 0.0, %v2144
        %v2146 = vpop.f32.mrb[0].mxu0
        %v2147 = vpop.f32.mrb[0].mxu0
        %v2148 = vadd.f32 0.0, %v2147
        %v2149 = vpop.f32.mrb[0].mxu0
        %2150 = vmatprep.mubr.bf16.mxu0 0
        %2151 = vmatmul.mubr.bf16.gmra.mrb[0].mxu0 %v2023
        %v2152 = vpop.f32.mrb[0].mxu0
        %v2153 = vadd.f32 0.0, %v2152
        %v2154 = vpop.f32.mrb[0].mxu0
        %v2155 = vpop.f32.mrb[0].mxu0
        %v2156 = vadd.f32 0.0, %v2155
        %v2157 = vpop.f32.mrb[0].mxu0
        %2158 = vmatprep.mubr.bf16.mxu0 0
        %2159 = vmatmul.mubr.bf16.gmra.mrb[0].mxu0 %v2026
        %v2160 = vpop.f32.mrb[0].mxu0
        %v2161 = vadd.f32 0.0, %v2160
        %v2162 = vpop.f32.mrb[0].mxu0
        %v2163 = vpop.f32.mrb[0].mxu0
        %v2164 = vadd.f32 0.0, %v2163
        %v2165 = vpop.f32.mrb[0].mxu0
        %2166 = vmatprep.mubr.bf16.mxu0 0
        %2167 = vmatmul.mubr.bf16.gmra.mrb[0].mxu0 %v2029
        %v2168 = vpop.f32.mrb[0].mxu0
        %v2169 = vadd.f32 0.0, %v2168
        %v2170 = vpop.f32.mrb[0].mxu0
        %v2171 = vpop.f32.mrb[0].mxu0
        %v2172 = vadd.f32 0.0, %v2171
        %v2173 = vpop.f32.mrb[0].mxu0
        %2174 = vmatprep.mubr.bf16.mxu0 0
        %2175 = vmatmul.mubr.bf16.gmra.mrb[0].mxu0 %v2032
        %v2176 = vpop.f32.mrb[0].mxu0
        %v2177 = vadd.f32 0.0, %v2176
        %v2178 = vpop.f32.mrb[0].mxu0
        %v2179 = vpop.f32.mrb[0].mxu0
        %v2180 = vadd.f32 0.0, %v2179
        %v2181 = vpop.f32.mrb[0].mxu0
        %2182 = vmatprep.mubr.bf16.mxu0 0
        %2183 = vmatmul.mubr.bf16.gmra.mrb[0].mxu0 %v2035
        %v2184 = vpop.f32.mrb[0].mxu0
        %v2185 = vadd.f32 0.0, %v2184
        %v2186 = vpop.f32.mrb[0].mxu0
        %v2187 = vpop.f32.mrb[0].mxu0
        %v2188 = vadd.f32 0.0, %v2187
        %v2189 = vpop.f32.mrb[0].mxu0
        %2190 = vmatprep.mubr.bf16.mxu0 0
        %2191 = vmatmul.mubr.bf16.gmra.mrb[0].mxu0 %v2038
        %v2192 = vpop.f32.mrb[0].mxu0
        %v2193 = vadd.f32 0.0, %v2192
        %v2194 = vpop.f32.mrb[0].mxu0
        %v2195 = vpop.f32.mrb[0].mxu0
        %v2196 = vadd.f32 0.0, %v2195
        %v2197 = vpop.f32.mrb[0].mxu0
        %2198 = vmatprep.mubr.bf16.mxu0 0
        %2199 = vmatmul.mubr.bf16.gmra.mrb[0].mxu0 %v2041
        %v2200 = vpop.f32.mrb[0].mxu0
        %v2201 = vadd.f32 0.0, %v2200
        %v2202 = vpop.f32.mrb[0].mxu0
        %v2203 = vpop.f32.mrb[0].mxu0
        %v2204 = vadd.f32 0.0, %v2203
        %v2205 = vpop.f32.mrb[0].mxu0
        %2206 = vdwg.mxu0
        %v2207 = vadd.f32 %v1910, %v2081
        %v2208 = vadd.f32 %v1911, %v2084
        %v2209 = vadd.f32 %v1912, %v2089
        %v2210 = vadd.f32 %v1913, %v2092
        %v2211 = vadd.f32 %v1914, %v2097
        %v2212 = vadd.f32 %v1915, %v2100
        %v2213 = vadd.f32 %v1916, %v2105
        %v2214 = vadd.f32 %v1917, %v2108
        %v2215 = vadd.f32 %v1918, %v2113
        %v2216 = vadd.f32 %v1919, %v2116
        %v2217 = vadd.f32 %v1920, %v2121
        %v2218 = vadd.f32 %v1921, %v2124
        %v2219 = vadd.f32 %v1922, %v2129
        %v2220 = vadd.f32 %v1923, %v2132
        %v2221 = vadd.f32 %v1924, %v2137
        %v2222 = vadd.f32 %v1925, %v2140
        %v2223 = vadd.f32 %v1926, %v2145
        %v2224 = vadd.f32 %v1927, %v2148
        %v2225 = vadd.f32 %v1928, %v2153
        %v2226 = vadd.f32 %v1929, %v2156
        %v2227 = vadd.f32 %v1930, %v2161
        %v2228 = vadd.f32 %v1931, %v2164
        %v2229 = vadd.f32 %v1932, %v2169
        %v2230 = vadd.f32 %v1933, %v2172
        %v2231 = vadd.f32 %v1934, %v2177
        %v2232 = vadd.f32 %v1935, %v2180
        %v2233 = vadd.f32 %v1936, %v2185
        %v2234 = vadd.f32 %v1937, %v2188
        %v2235 = vadd.f32 %v1938, %v2193
        %v2236 = vadd.f32 %v1939, %v2196
        %v2237 = vadd.f32 %v1940, %v2201
        %v2238 = vadd.f32 %v1941, %v2204
        %v2239 = vld [vmem:[%s1944 + $0x1] sm:$0xff]
        %v2240 = vld [vmem:[%s1944 + $0x9] sm:$0xff]
        %v2241 = vld [vmem:[%s1944 + $0x19] sm:$0xff]
        %v2242 = vld [vmem:[%s1944 + $0x21] sm:$0xff]
        %v2243 = vld [vmem:[%s1944 + $0x31] sm:$0xff]
        %v2244 = vld [vmem:[%s1944 + $0x39] sm:$0xff]
        %v2245 = vld [vmem:[%s1944 + $0x49] sm:$0xff]
        %v2246 = vld [vmem:[%s1944 + $0x51] sm:$0xff]
        %v2247 = vld [vmem:[%s1944 + $0x61] sm:$0xff]
        %v2248 = vld [vmem:[%s1944 + $0x69] sm:$0xff]
        %v2249 = vld [vmem:[%s1944 + $0x79] sm:$0xff]
        %v2250 = vld [vmem:[%s1944 + $0x81] sm:$0xff]
        %v2251 = vld [vmem:[%s1944 + $0x91] sm:$0xff]
        %v2252 = vld [vmem:[%s1944 + $0x99] sm:$0xff]
        %v2253 = vld [vmem:[%s1944 + $0xa9] sm:$0xff]
        %v2254 = vld [vmem:[%s1944 + $0xb1] sm:$0xff]
        %v2255 = vld [vmem:[%s1944 + $0xc1] sm:$0xff]
        %v2256 = vld [vmem:[%s1944 + $0xc9] sm:$0xff]
        %v2257 = vld [vmem:[%s1944 + $0xd9] sm:$0xff]
        %v2258 = vld [vmem:[%s1944 + $0xe1] sm:$0xff]
        %v2259 = vld [vmem:[%s1944 + $0xf1] sm:$0xff]
        %v2260 = vld [vmem:[%s1944 + $0xf9] sm:$0xff]
        %v2261 = vld [vmem:[%s1944 + $0x109] sm:$0xff]
        %v2262 = vld [vmem:[%s1944 + $0x111] sm:$0xff]
        %v2263 = vld [vmem:[%s1944 + $0x121] sm:$0xff]
        %v2264 = vld [vmem:[%s1944 + $0x129] sm:$0xff]
        %v2265 = vld [vmem:[%s1944 + $0x139] sm:$0xff]
        %v2266 = vld [vmem:[%s1944 + $0x141] sm:$0xff]
        %v2267 = vld [vmem:[%s1944 + $0x151] sm:$0xff]
        %v2268 = vld [vmem:[%s1944 + $0x159] sm:$0xff]
        %v2269 = vld [vmem:[%s1944 + $0x169] sm:$0xff]
        %v2270 = vld [vmem:[%s1944 + $0x171] sm:$0xff]
        %v2271 = vpack.c.bf16 %v2240, %v2239
        %v2272 = vpack.c.bf16 %v2242, %v2241
        %v2273 = vpack.c.bf16 %v2244, %v2243
        %v2274 = vpack.c.bf16 %v2246, %v2245
        %v2275 = vpack.c.bf16 %v2248, %v2247
        %v2276 = vpack.c.bf16 %v2250, %v2249
        %v2277 = vpack.c.bf16 %v2252, %v2251
        %v2278 = vpack.c.bf16 %v2254, %v2253
        %v2279 = vpack.c.bf16 %v2256, %v2255
        %v2280 = vpack.c.bf16 %v2258, %v2257
        %v2281 = vpack.c.bf16 %v2260, %v2259
        %v2282 = vpack.c.bf16 %v2262, %v2261
        %v2283 = vpack.c.bf16 %v2264, %v2263
        %v2284 = vpack.c.bf16 %v2266, %v2265
        %v2285 = vpack.c.bf16 %v2268, %v2267
        %v2286 = vpack.c.bf16 %v2270, %v2269
        %s2287 = scalar_lea.vmem [#allocation5], 14
        %v2288 = vld [vmem:[%s2287] sm:$0x3]
        %v2290 = vsel %vm337, %v2271, 0
        %v2293 = vsel %vm337, %v2272, 0
        %v2296 = vsel %vm337, %v2273, 0
        %v2299 = vsel %vm337, %v2274, 0
        %v2302 = vsel %vm337, %v2275, 0
        %v2305 = vsel %vm337, %v2276, 0
        %v2308 = vsel %vm337, %v2277, 0
        %v2311 = vsel %vm337, %v2278, 0
        %v2314 = vsel %vm337, %v2279, 0
        %v2317 = vsel %vm337, %v2280, 0
        %v2320 = vsel %vm337, %v2281, 0
        %v2323 = vsel %vm337, %v2282, 0
        %v2326 = vsel %vm337, %v2283, 0
        %v2329 = vsel %vm337, %v2284, 0
        %v2332 = vsel %vm337, %v2285, 0
        %v2335 = vsel %vm337, %v2286, 0
        %v2338 = vsel %vm386, %v2288, 0
        %2340 = vmatprep.subr.bf16.mxu0 0
        %2341 = vmatpush1.bf16.msra.mxu0 %v2338
        %2342 = vmatprep.subr.bf16.mxu0 0
        %2343 = vmatpush1.bf16.msra.mxu0 0
        %2344 = vmatprep.subr.bf16.mxu0 0
        %2345 = vmatpush1.bf16.msra.mxu0 0
        %2346 = vmatprep.subr.bf16.mxu0 0
        %2347 = vmatpush1.bf16.msra.mxu0 0
        %2348 = vmatprep.subr.bf16.mxu0 0
        %2349 = vmatpush1.bf16.msra.mxu0 0
        %2350 = vmatprep.subr.bf16.mxu0 0
        %2351 = vmatpush1.bf16.msra.mxu0 0
        %2352 = vmatprep.subr.bf16.mxu0 0
        %2353 = vmatpush1.bf16.msra.mxu0 0
        %2354 = vmatprep.subr.bf16.mxu0 0
        %2355 = vmatpush1.bf16.msra.mxu0 0
        %2356 = vmatprep.subr.bf16.mxu0 0
        %2357 = vmatpush1.bf16.msra.mxu0 0
        %2358 = vmatprep.subr.bf16.mxu0 0
        %2359 = vmatpush1.bf16.msra.mxu0 0
        %2360 = vmatprep.subr.bf16.mxu0 0
        %2361 = vmatpush1.bf16.msra.mxu0 0
        %2362 = vmatprep.subr.bf16.mxu0 0
        %2363 = vmatpush1.bf16.msra.mxu0 0
        %2364 = vmatprep.subr.bf16.mxu0 0
        %2365 = vmatpush1.bf16.msra.mxu0 0
        %2366 = vmatprep.subr.bf16.mxu0 0
        %2367 = vmatpush1.bf16.msra.mxu0 0
        %2368 = vmatprep.subr.bf16.mxu0 0
        %2369 = vmatpush1.bf16.msra.mxu0 0
        %2370 = vmatprep.subr.bf16.mxu0 0
        %2371 = vmatpush1.bf16.msra.mxu0 0
        %2372 = vmatprep.mubr.bf16.mxu0 0
        %2373 = vmatmul.mubr.bf16.gmra.mrb[0].mxu0 %v2290
        %v2374 = vpop.f32.mrb[0].mxu0
        %v2375 = vadd.f32 0.0, %v2374
        %v2376 = vpop.f32.mrb[0].mxu0
        %v2377 = vpop.f32.mrb[0].mxu0
        %v2378 = vadd.f32 0.0, %v2377
        %v2379 = vpop.f32.mrb[0].mxu0
        %2380 = vmatprep.mubr.bf16.mxu0 0
        %2381 = vmatmul.mubr.bf16.gmra.mrb[0].mxu0 %v2293
        %v2382 = vpop.f32.mrb[0].mxu0
        %v2383 = vadd.f32 0.0, %v2382
        %v2384 = vpop.f32.mrb[0].mxu0
        %v2385 = vpop.f32.mrb[0].mxu0
        %v2386 = vadd.f32 0.0, %v2385
        %v2387 = vpop.f32.mrb[0].mxu0
        %2388 = vmatprep.mubr.bf16.mxu0 0
        %2389 = vmatmul.mubr.bf16.gmra.mrb[0].mxu0 %v2296
        %v2390 = vpop.f32.mrb[0].mxu0
        %v2391 = vadd.f32 0.0, %v2390
        %v2392 = vpop.f32.mrb[0].mxu0
        %v2393 = vpop.f32.mrb[0].mxu0
        %v2394 = vadd.f32 0.0, %v2393
        %v2395 = vpop.f32.mrb[0].mxu0
        %2396 = vmatprep.mubr.bf16.mxu0 0
        %2397 = vmatmul.mubr.bf16.gmra.mrb[0].mxu0 %v2299
        %v2398 = vpop.f32.mrb[0].mxu0
        %v2399 = vadd.f32 0.0, %v2398
        %v2400 = vpop.f32.mrb[0].mxu0
        %v2401 = vpop.f32.mrb[0].mxu0
        %v2402 = vadd.f32 0.0, %v2401
        %v2403 = vpop.f32.mrb[0].mxu0
        %2404 = vmatprep.mubr.bf16.mxu0 0
        %2405 = vmatmul.mubr.bf16.gmra.mrb[0].mxu0 %v2302
        %v2406 = vpop.f32.mrb[0].mxu0
        %v2407 = vadd.f32 0.0, %v2406
        %v2408 = vpop.f32.mrb[0].mxu0
        %v2409 = vpop.f32.mrb[0].mxu0
        %v2410 = vadd.f32 0.0, %v2409
        %v2411 = vpop.f32.mrb[0].mxu0
        %2412 = vmatprep.mubr.bf16.mxu0 0
        %2413 = vmatmul.mubr.bf16.gmra.mrb[0].mxu0 %v2305
        %v2414 = vpop.f32.mrb[0].mxu0
        %v2415 = vadd.f32 0.0, %v2414
        %v2416 = vpop.f32.mrb[0].mxu0
        %v2417 = vpop.f32.mrb[0].mxu0
        %v2418 = vadd.f32 0.0, %v2417
        %v2419 = vpop.f32.mrb[0].mxu0
        %2420 = vmatprep.mubr.bf16.mxu0 0
        %2421 = vmatmul.mubr.bf16.gmra.mrb[0].mxu0 %v2308
        %v2422 = vpop.f32.mrb[0].mxu0
        %v2423 = vadd.f32 0.0, %v2422
        %v2424 = vpop.f32.mrb[0].mxu0
        %v2425 = vpop.f32.mrb[0].mxu0
        %v2426 = vadd.f32 0.0, %v2425
        %v2427 = vpop.f32.mrb[0].mxu0
        %2428 = vmatprep.mubr.bf16.mxu0 0
        %2429 = vmatmul.mubr.bf16.gmra.mrb[0].mxu0 %v2311
        %v2430 = vpop.f32.mrb[0].mxu0
        %v2431 = vadd.f32 0.0, %v2430
        %v2432 = vpop.f32.mrb[0].mxu0
        %v2433 = vpop.f32.mrb[0].mxu0
        %v2434 = vadd.f32 0.0, %v2433
        %v2435 = vpop.f32.mrb[0].mxu0
        %2436 = vmatprep.mubr.bf16.mxu0 0
        %2437 = vmatmul.mubr.bf16.gmra.mrb[0].mxu0 %v2314
        %v2438 = vpop.f32.mrb[0].mxu0
        %v2439 = vadd.f32 0.0, %v2438
        %v2440 = vpop.f32.mrb[0].mxu0
        %v2441 = vpop.f32.mrb[0].mxu0
        %v2442 = vadd.f32 0.0, %v2441
        %v2443 = vpop.f32.mrb[0].mxu0
        %2444 = vmatprep.mubr.bf16.mxu0 0
        %2445 = vmatmul.mubr.bf16.gmra.mrb[0].mxu0 %v2317
        %v2446 = vpop.f32.mrb[0].mxu0
        %v2447 = vadd.f32 0.0, %v2446
        %v2448 = vpop.f32.mrb[0].mxu0
        %v2449 = vpop.f32.mrb[0].mxu0
        %v2450 = vadd.f32 0.0, %v2449
        %v2451 = vpop.f32.mrb[0].mxu0
        %2452 = vmatprep.mubr.bf16.mxu0 0
        %2453 = vmatmul.mubr.bf16.gmra.mrb[0].mxu0 %v2320
        %v2454 = vpop.f32.mrb[0].mxu0
        %v2455 = vadd.f32 0.0, %v2454
        %v2456 = vpop.f32.mrb[0].mxu0
        %v2457 = vpop.f32.mrb[0].mxu0
        %v2458 = vadd.f32 0.0, %v2457
        %v2459 = vpop.f32.mrb[0].mxu0
        %2460 = vmatprep.mubr.bf16.mxu0 0
        %2461 = vmatmul.mubr.bf16.gmra.mrb[0].mxu0 %v2323
        %v2462 = vpop.f32.mrb[0].mxu0
        %v2463 = vadd.f32 0.0, %v2462
        %v2464 = vpop.f32.mrb[0].mxu0
        %v2465 = vpop.f32.mrb[0].mxu0
        %v2466 = vadd.f32 0.0, %v2465
        %v2467 = vpop.f32.mrb[0].mxu0
        %2468 = vmatprep.mubr.bf16.mxu0 0
        %2469 = vmatmul.mubr.bf16.gmra.mrb[0].mxu0 %v2326
        %v2470 = vpop.f32.mrb[0].mxu0
        %v2471 = vadd.f32 0.0, %v2470
        %v2472 = vpop.f32.mrb[0].mxu0
        %v2473 = vpop.f32.mrb[0].mxu0
        %v2474 = vadd.f32 0.0, %v2473
        %v2475 = vpop.f32.mrb[0].mxu0
        %2476 = vmatprep.mubr.bf16.mxu0 0
        %2477 = vmatmul.mubr.bf16.gmra.mrb[0].mxu0 %v2329
        %v2478 = vpop.f32.mrb[0].mxu0
        %v2479 = vadd.f32 0.0, %v2478
        %v2480 = vpop.f32.mrb[0].mxu0
        %v2481 = vpop.f32.mrb[0].mxu0
        %v2482 = vadd.f32 0.0, %v2481
        %v2483 = vpop.f32.mrb[0].mxu0
        %2484 = vmatprep.mubr.bf16.mxu0 0
        %2485 = vmatmul.mubr.bf16.gmra.mrb[0].mxu0 %v2332
        %v2486 = vpop.f32.mrb[0].mxu0
        %v2487 = vadd.f32 0.0, %v2486
        %v2488 = vpop.f32.mrb[0].mxu0
        %v2489 = vpop.f32.mrb[0].mxu0
        %v2490 = vadd.f32 0.0, %v2489
        %v2491 = vpop.f32.mrb[0].mxu0
        %2492 = vmatprep.mubr.bf16.mxu0 0
        %2493 = vmatmul.mubr.bf16.gmra.mrb[0].mxu0 %v2335
        %v2494 = vpop.f32.mrb[0].mxu0
        %v2495 = vadd.f32 0.0, %v2494
        %v2496 = vpop.f32.mrb[0].mxu0
        %v2497 = vpop.f32.mrb[0].mxu0
        %v2498 = vadd.f32 0.0, %v2497
        %v2499 = vpop.f32.mrb[0].mxu0
        %2500 = vdwg.mxu0
        %v2501 = vadd.f32 %v2207, %v2375
        %v2502 = vadd.f32 %v2208, %v2378
        %v2503 = vadd.f32 %v2209, %v2383
        %v2504 = vadd.f32 %v2210, %v2386
        %v2505 = vadd.f32 %v2211, %v2391
        %v2506 = vadd.f32 %v2212, %v2394
        %v2507 = vadd.f32 %v2213, %v2399
        %v2508 = vadd.f32 %v2214, %v2402
        %v2509 = vadd.f32 %v2215, %v2407
        %v2510 = vadd.f32 %v2216, %v2410
        %v2511 = vadd.f32 %v2217, %v2415
        %v2512 = vadd.f32 %v2218, %v2418
        %v2513 = vadd.f32 %v2219, %v2423
        %v2514 = vadd.f32 %v2220, %v2426
        %v2515 = vadd.f32 %v2221, %v2431
        %v2516 = vadd.f32 %v2222, %v2434
        %v2517 = vadd.f32 %v2223, %v2439
        %v2518 = vadd.f32 %v2224, %v2442
        %v2519 = vadd.f32 %v2225, %v2447
        %v2520 = vadd.f32 %v2226, %v2450
        %v2521 = vadd.f32 %v2227, %v2455
        %v2522 = vadd.f32 %v2228, %v2458
        %v2523 = vadd.f32 %v2229, %v2463
        %v2524 = vadd.f32 %v2230, %v2466
        %v2525 = vadd.f32 %v2231, %v2471
        %v2526 = vadd.f32 %v2232, %v2474
        %v2527 = vadd.f32 %v2233, %v2479
        %v2528 = vadd.f32 %v2234, %v2482
        %v2529 = vadd.f32 %v2235, %v2487
        %v2530 = vadd.f32 %v2236, %v2490
        %v2531 = vadd.f32 %v2237, %v2495
        %v2532 = vadd.f32 %v2238, %v2498
        %v2533 = vld [vmem:[%s1944 + $0x2] sm:$0xff]
        %v2534 = vld [vmem:[%s1944 + $0xa] sm:$0xff]
        %v2535 = vld [vmem:[%s1944 + $0x1a] sm:$0xff]
        %v2536 = vld [vmem:[%s1944 + $0x22] sm:$0xff]
        %v2537 = vld [vmem:[%s1944 + $0x32] sm:$0xff]
        %v2538 = vld [vmem:[%s1944 + $0x3a] sm:$0xff]
        %v2539 = vld [vmem:[%s1944 + $0x4a] sm:$0xff]
        %v2540 = vld [vmem:[%s1944 + $0x52] sm:$0xff]
        %v2541 = vld [vmem:[%s1944 + $0x62] sm:$0xff]
        %v2542 = vld [vmem:[%s1944 + $0x6a] sm:$0xff]
        %v2543 = vld [vmem:[%s1944 + $0x7a] sm:$0xff]
        %v2544 = vld [vmem:[%s1944 + $0x82] sm:$0xff]
        %v2545 = vld [vmem:[%s1944 + $0x92] sm:$0xff]
        %v2546 = vld [vmem:[%s1944 + $0x9a] sm:$0xff]
        %v2547 = vld [vmem:[%s1944 + $0xaa] sm:$0xff]
        %v2548 = vld [vmem:[%s1944 + $0xb2] sm:$0xff]
        %v2549 = vld [vmem:[%s1944 + $0xc2] sm:$0xff]
        %v2550 = vld [vmem:[%s1944 + $0xca] sm:$0xff]
        %v2551 = vld [vmem:[%s1944 + $0xda] sm:$0xff]
        %v2552 = vld [vmem:[%s1944 + $0xe2] sm:$0xff]
        %v2553 = vld [vmem:[%s1944 + $0xf2] sm:$0xff]
        %v2554 = vld [vmem:[%s1944 + $0xfa] sm:$0xff]
        %v2555 = vld [vmem:[%s1944 + $0x10a] sm:$0xff]
        %v2556 = vld [vmem:[%s1944 + $0x112] sm:$0xff]
        %v2557 = vld [vmem:[%s1944 + $0x122] sm:$0xff]
        %v2558 = vld [vmem:[%s1944 + $0x12a] sm:$0xff]
        %v2559 = vld [vmem:[%s1944 + $0x13a] sm:$0xff]
        %v2560 = vld [vmem:[%s1944 + $0x142] sm:$0xff]
        %v2561 = vld [vmem:[%s1944 + $0x152] sm:$0xff]
        %v2562 = vld [vmem:[%s1944 + $0x15a] sm:$0xff]
        %v2563 = vld [vmem:[%s1944 + $0x16a] sm:$0xff]
        %v2564 = vld [vmem:[%s1944 + $0x172] sm:$0xff]
        %v2565 = vpack.c.bf16 %v2534, %v2533
        %v2566 = vpack.c.bf16 %v2536, %v2535
        %v2567 = vpack.c.bf16 %v2538, %v2537
        %v2568 = vpack.c.bf16 %v2540, %v2539
        %v2569 = vpack.c.bf16 %v2542, %v2541
        %v2570 = vpack.c.bf16 %v2544, %v2543
        %v2571 = vpack.c.bf16 %v2546, %v2545
        %v2572 = vpack.c.bf16 %v2548, %v2547
        %v2573 = vpack.c.bf16 %v2550, %v2549
        %v2574 = vpack.c.bf16 %v2552, %v2551
        %v2575 = vpack.c.bf16 %v2554, %v2553
        %v2576 = vpack.c.bf16 %v2556, %v2555
        %v2577 = vpack.c.bf16 %v2558, %v2557
        %v2578 = vpack.c.bf16 %v2560, %v2559
        %v2579 = vpack.c.bf16 %v2562, %v2561
        %v2580 = vpack.c.bf16 %v2564, %v2563
        %s2581 = scalar_lea.vmem [#allocation5], 16
        %v2582 = vld [vmem:[%s2581] sm:$0x3]
        %v2584 = vsel %vm337, %v2565, 0
        %v2587 = vsel %vm337, %v2566, 0
        %v2590 = vsel %vm337, %v2567, 0
        %v2593 = vsel %vm337, %v2568, 0
        %v2596 = vsel %vm337, %v2569, 0
        %v2599 = vsel %vm337, %v2570, 0
        %v2602 = vsel %vm337, %v2571, 0
        %v2605 = vsel %vm337, %v2572, 0
        %v2608 = vsel %vm337, %v2573, 0
        %v2611 = vsel %vm337, %v2574, 0
        %v2614 = vsel %vm337, %v2575, 0
        %v2617 = vsel %vm337, %v2576, 0
        %v2620 = vsel %vm337, %v2577, 0
        %v2623 = vsel %vm337, %v2578, 0
        %v2626 = vsel %vm337, %v2579, 0
        %v2629 = vsel %vm337, %v2580, 0
        %v2632 = vsel %vm386, %v2582, 0
        %2634 = vmatprep.subr.bf16.mxu0 0
        %2635 = vmatpush1.bf16.msra.mxu0 %v2632
        %2636 = vmatprep.subr.bf16.mxu0 0
        %2637 = vmatpush1.bf16.msra.mxu0 0
        %2638 = vmatprep.subr.bf16.mxu0 0
        %2639 = vmatpush1.bf16.msra.mxu0 0
        %2640 = vmatprep.subr.bf16.mxu0 0
        %2641 = vmatpush1.bf16.msra.mxu0 0
        %2642 = vmatprep.subr.bf16.mxu0 0
        %2643 = vmatpush1.bf16.msra.mxu0 0
        %2644 = vmatprep.subr.bf16.mxu0 0
        %2645 = vmatpush1.bf16.msra.mxu0 0
        %2646 = vmatprep.subr.bf16.mxu0 0
        %2647 = vmatpush1.bf16.msra.mxu0 0
        %2648 = vmatprep.subr.bf16.mxu0 0
        %2649 = vmatpush1.bf16.msra.mxu0 0
        %2650 = vmatprep.subr.bf16.mxu0 0
        %2651 = vmatpush1.bf16.msra.mxu0 0
        %2652 = vmatprep.subr.bf16.mxu0 0
        %2653 = vmatpush1.bf16.msra.mxu0 0
        %2654 = vmatprep.subr.bf16.mxu0 0
        %2655 = vmatpush1.bf16.msra.mxu0 0
        %2656 = vmatprep.subr.bf16.mxu0 0
        %2657 = vmatpush1.bf16.msra.mxu0 0
        %2658 = vmatprep.subr.bf16.mxu0 0
        %2659 = vmatpush1.bf16.msra.mxu0 0
        %2660 = vmatprep.subr.bf16.mxu0 0
        %2661 = vmatpush1.bf16.msra.mxu0 0
        %2662 = vmatprep.subr.bf16.mxu0 0
        %2663 = vmatpush1.bf16.msra.mxu0 0
        %2664 = vmatprep.subr.bf16.mxu0 0
        %2665 = vmatpush1.bf16.msra.mxu0 0
        %2666 = vmatprep.mubr.bf16.mxu0 0
        %2667 = vmatmul.mubr.bf16.gmra.mrb[0].mxu0 %v2584
        %v2668 = vpop.f32.mrb[0].mxu0
        %v2669 = vadd.f32 0.0, %v2668
        %v2670 = vpop.f32.mrb[0].mxu0
        %v2671 = vpop.f32.mrb[0].mxu0
        %v2672 = vadd.f32 0.0, %v2671
        %v2673 = vpop.f32.mrb[0].mxu0
        %2674 = vmatprep.mubr.bf16.mxu0 0
        %2675 = vmatmul.mubr.bf16.gmra.mrb[0].mxu0 %v2587
        %v2676 = vpop.f32.mrb[0].mxu0
        %v2677 = vadd.f32 0.0, %v2676
        %v2678 = vpop.f32.mrb[0].mxu0
        %v2679 = vpop.f32.mrb[0].mxu0
        %v2680 = vadd.f32 0.0, %v2679
        %v2681 = vpop.f32.mrb[0].mxu0
        %2682 = vmatprep.mubr.bf16.mxu0 0
        %2683 = vmatmul.mubr.bf16.gmra.mrb[0].mxu0 %v2590
        %v2684 = vpop.f32.mrb[0].mxu0
        %v2685 = vadd.f32 0.0, %v2684
        %v2686 = vpop.f32.mrb[0].mxu0
        %v2687 = vpop.f32.mrb[0].mxu0
        %v2688 = vadd.f32 0.0, %v2687
        %v2689 = vpop.f32.mrb[0].mxu0
        %2690 = vmatprep.mubr.bf16.mxu0 0
        %2691 = vmatmul.mubr.bf16.gmra.mrb[0].mxu0 %v2593
        %v2692 = vpop.f32.mrb[0].mxu0
        %v2693 = vadd.f32 0.0, %v2692
        %v2694 = vpop.f32.mrb[0].mxu0
        %v2695 = vpop.f32.mrb[0].mxu0
        %v2696 = vadd.f32 0.0, %v2695
        %v2697 = vpop.f32.mrb[0].mxu0
        %2698 = vmatprep.mubr.bf16.mxu0 0
        %2699 = vmatmul.mubr.bf16.gmra.mrb[0].mxu0 %v2596
        %v2700 = vpop.f32.mrb[0].mxu0
        %v2701 = vadd.f32 0.0, %v2700
        %v2702 = vpop.f32.mrb[0].mxu0
        %v2703 = vpop.f32.mrb[0].mxu0
        %v2704 = vadd.f32 0.0, %v2703
        %v2705 = vpop.f32.mrb[0].mxu0
        %2706 = vmatprep.mubr.bf16.mxu0 0
        %2707 = vmatmul.mubr.bf16.gmra.mrb[0].mxu0 %v2599
        %v2708 = vpop.f32.mrb[0].mxu0
        %v2709 = vadd.f32 0.0, %v2708
        %v2710 = vpop.f32.mrb[0].mxu0
        %v2711 = vpop.f32.mrb[0].mxu0
        %v2712 = vadd.f32 0.0, %v2711
        %v2713 = vpop.f32.mrb[0].mxu0
        %2714 = vmatprep.mubr.bf16.mxu0 0
        %2715 = vmatmul.mubr.bf16.gmra.mrb[0].mxu0 %v2602
        %v2716 = vpop.f32.mrb[0].mxu0
        %v2717 = vadd.f32 0.0, %v2716
        %v2718 = vpop.f32.mrb[0].mxu0
        %v2719 = vpop.f32.mrb[0].mxu0
        %v2720 = vadd.f32 0.0, %v2719
        %v2721 = vpop.f32.mrb[0].mxu0
        %2722 = vmatprep.mubr.bf16.mxu0 0
        %2723 = vmatmul.mubr.bf16.gmra.mrb[0].mxu0 %v2605
        %v2724 = vpop.f32.mrb[0].mxu0
        %v2725 = vadd.f32 0.0, %v2724
        %v2726 = vpop.f32.mrb[0].mxu0
        %v2727 = vpop.f32.mrb[0].mxu0
        %v2728 = vadd.f32 0.0, %v2727
        %v2729 = vpop.f32.mrb[0].mxu0
        %2730 = vmatprep.mubr.bf16.mxu0 0
        %2731 = vmatmul.mubr.bf16.gmra.mrb[0].mxu0 %v2608
        %v2732 = vpop.f32.mrb[0].mxu0
        %v2733 = vadd.f32 0.0, %v2732
        %v2734 = vpop.f32.mrb[0].mxu0
        %v2735 = vpop.f32.mrb[0].mxu0
        %v2736 = vadd.f32 0.0, %v2735
        %v2737 = vpop.f32.mrb[0].mxu0
        %2738 = vmatprep.mubr.bf16.mxu0 0
        %2739 = vmatmul.mubr.bf16.gmra.mrb[0].mxu0 %v2611
        %v2740 = vpop.f32.mrb[0].mxu0
        %v2741 = vadd.f32 0.0, %v2740
        %v2742 = vpop.f32.mrb[0].mxu0
        %v2743 = vpop.f32.mrb[0].mxu0
        %v2744 = vadd.f32 0.0, %v2743
        %v2745 = vpop.f32.mrb[0].mxu0
        %2746 = vmatprep.mubr.bf16.mxu0 0
        %2747 = vmatmul.mubr.bf16.gmra.mrb[0].mxu0 %v2614
        %v2748 = vpop.f32.mrb[0].mxu0
        %v2749 = vadd.f32 0.0, %v2748
        %v2750 = vpop.f32.mrb[0].mxu0
        %v2751 = vpop.f32.mrb[0].mxu0
        %v2752 = vadd.f32 0.0, %v2751
        %v2753 = vpop.f32.mrb[0].mxu0
        %2754 = vmatprep.mubr.bf16.mxu0 0
        %2755 = vmatmul.mubr.bf16.gmra.mrb[0].mxu0 %v2617
        %v2756 = vpop.f32.mrb[0].mxu0
        %v2757 = vadd.f32 0.0, %v2756
        %v2758 = vpop.f32.mrb[0].mxu0
        %v2759 = vpop.f32.mrb[0].mxu0
        %v2760 = vadd.f32 0.0, %v2759
        %v2761 = vpop.f32.mrb[0].mxu0
        %2762 = vmatprep.mubr.bf16.mxu0 0
        %2763 = vmatmul.mubr.bf16.gmra.mrb[0].mxu0 %v2620
        %v2764 = vpop.f32.mrb[0].mxu0
        %v2765 = vadd.f32 0.0, %v2764
        %v2766 = vpop.f32.mrb[0].mxu0
        %v2767 = vpop.f32.mrb[0].mxu0
        %v2768 = vadd.f32 0.0, %v2767
        %v2769 = vpop.f32.mrb[0].mxu0
        %2770 = vmatprep.mubr.bf16.mxu0 0
        %2771 = vmatmul.mubr.bf16.gmra.mrb[0].mxu0 %v2623
        %v2772 = vpop.f32.mrb[0].mxu0
        %v2773 = vadd.f32 0.0, %v2772
        %v2774 = vpop.f32.mrb[0].mxu0
        %v2775 = vpop.f32.mrb[0].mxu0
        %v2776 = vadd.f32 0.0, %v2775
        %v2777 = vpop.f32.mrb[0].mxu0
        %2778 = vmatprep.mubr.bf16.mxu0 0
        %2779 = vmatmul.mubr.bf16.gmra.mrb[0].mxu0 %v2626
        %v2780 = vpop.f32.mrb[0].mxu0
        %v2781 = vadd.f32 0.0, %v2780
        %v2782 = vpop.f32.mrb[0].mxu0
        %v2783 = vpop.f32.mrb[0].mxu0
        %v2784 = vadd.f32 0.0, %v2783
        %v2785 = vpop.f32.mrb[0].mxu0
        %2786 = vmatprep.mubr.bf16.mxu0 0
        %2787 = vmatmul.mubr.bf16.gmra.mrb[0].mxu0 %v2629
        %v2788 = vpop.f32.mrb[0].mxu0
        %v2789 = vadd.f32 0.0, %v2788
        %v2790 = vpop.f32.mrb[0].mxu0
        %v2791 = vpop.f32.mrb[0].mxu0
        %v2792 = vadd.f32 0.0, %v2791
        %v2793 = vpop.f32.mrb[0].mxu0
        %2794 = vdwg.mxu0
        %v2795 = vadd.f32 %v2501, %v2669
        %v2796 = vadd.f32 %v2502, %v2672
        %v2797 = vadd.f32 %v2503, %v2677
        %v2798 = vadd.f32 %v2504, %v2680
        %v2799 = vadd.f32 %v2505, %v2685
        %v2800 = vadd.f32 %v2506, %v2688
        %v2801 = vadd.f32 %v2507, %v2693
        %v2802 = vadd.f32 %v2508, %v2696
        %v2803 = vadd.f32 %v2509, %v2701
        %v2804 = vadd.f32 %v2510, %v2704
        %v2805 = vadd.f32 %v2511, %v2709
        %v2806 = vadd.f32 %v2512, %v2712
        %v2807 = vadd.f32 %v2513, %v2717
        %v2808 = vadd.f32 %v2514, %v2720
        %v2809 = vadd.f32 %v2515, %v2725
        %v2810 = vadd.f32 %v2516, %v2728
        %v2811 = vadd.f32 %v2517, %v2733
        %v2812 = vadd.f32 %v2518, %v2736
        %v2813 = vadd.f32 %v2519, %v2741
        %v2814 = vadd.f32 %v2520, %v2744
        %v2815 = vadd.f32 %v2521, %v2749
        %v2816 = vadd.f32 %v2522, %v2752
        %v2817 = vadd.f32 %v2523, %v2757
        %v2818 = vadd.f32 %v2524, %v2760
        %v2819 = vadd.f32 %v2525, %v2765
        %v2820 = vadd.f32 %v2526, %v2768
        %v2821 = vadd.f32 %v2527, %v2773
        %v2822 = vadd.f32 %v2528, %v2776
        %v2823 = vadd.f32 %v2529, %v2781
        %v2824 = vadd.f32 %v2530, %v2784
        %v2825 = vadd.f32 %v2531, %v2789
        %v2826 = vadd.f32 %v2532, %v2792
        %v2827 = vpack.c.bf16 %v2796, %v2795
        %v2828 = vpack.c.bf16 %v2798, %v2797
        %v2829 = vpack.c.bf16 %v2800, %v2799
        %v2830 = vpack.c.bf16 %v2802, %v2801
        %v2831 = vpack.c.bf16 %v2804, %v2803
        %v2832 = vpack.c.bf16 %v2806, %v2805
        %v2833 = vpack.c.bf16 %v2808, %v2807
        %v2834 = vpack.c.bf16 %v2810, %v2809
        %v2835 = vpack.c.bf16 %v2812, %v2811
        %v2836 = vpack.c.bf16 %v2814, %v2813
        %v2837 = vpack.c.bf16 %v2816, %v2815
        %v2838 = vpack.c.bf16 %v2818, %v2817
        %v2839 = vpack.c.bf16 %v2820, %v2819
        %v2840 = vpack.c.bf16 %v2822, %v2821
        %v2841 = vpack.c.bf16 %v2824, %v2823
        %v2842 = vpack.c.bf16 %v2826, %v2825
        %v2859 = vunpack.c.l.b16 %v2827
        %v2860 = vunpack.c.h.b16 %v2827
        %v2861 = vunpack.c.l.b16 %v2828
        %v2862 = vunpack.c.h.b16 %v2828
        %v2863 = vunpack.c.l.b16 %v2829
        %v2864 = vunpack.c.h.b16 %v2829
        %v2865 = vunpack.c.l.b16 %v2830
        %v2866 = vunpack.c.h.b16 %v2830
        %v2867 = vunpack.c.l.b16 %v2831
        %v2868 = vunpack.c.h.b16 %v2831
        %v2869 = vunpack.c.l.b16 %v2832
        %v2870 = vunpack.c.h.b16 %v2832
        %v2871 = vunpack.c.l.b16 %v2833
        %v2872 = vunpack.c.h.b16 %v2833
        %v2873 = vunpack.c.l.b16 %v2834
        %v2874 = vunpack.c.h.b16 %v2834
        %v2875 = vunpack.c.l.b16 %v2835
        %v2876 = vunpack.c.h.b16 %v2835
        %v2877 = vunpack.c.l.b16 %v2836
        %v2878 = vunpack.c.h.b16 %v2836
        %v2879 = vunpack.c.l.b16 %v2837
        %v2880 = vunpack.c.h.b16 %v2837
        %v2881 = vunpack.c.l.b16 %v2838
        %v2882 = vunpack.c.h.b16 %v2838
        %v2883 = vunpack.c.l.b16 %v2839
        %v2884 = vunpack.c.h.b16 %v2839
        %v2885 = vunpack.c.l.b16 %v2840
        %v2886 = vunpack.c.h.b16 %v2840
        %v2887 = vunpack.c.l.b16 %v2841
        %v2888 = vunpack.c.h.b16 %v2841
        %v2889 = vunpack.c.l.b16 %v2842
        %v2890 = vunpack.c.h.b16 %v2842
        %v2891 = vpack.c.b16 %v2859, %v2859
        %v2892 = vpack.c.b16 %v2860, %v2860
        %v2893 = vpack.c.b16 %v2861, %v2861
        %v2894 = vpack.c.b16 %v2862, %v2862
        %v2895 = vpack.c.b16 %v2863, %v2863
        %v2896 = vpack.c.b16 %v2864, %v2864
        %v2897 = vpack.c.b16 %v2865, %v2865
        %v2898 = vpack.c.b16 %v2866, %v2866
        %v2899 = vpack.c.b16 %v2867, %v2867
        %v2900 = vpack.c.b16 %v2868, %v2868
        %v2901 = vpack.c.b16 %v2869, %v2869
        %v2902 = vpack.c.b16 %v2870, %v2870
        %v2903 = vpack.c.b16 %v2871, %v2871
        %v2904 = vpack.c.b16 %v2872, %v2872
        %v2905 = vpack.c.b16 %v2873, %v2873
        %v2906 = vpack.c.b16 %v2874, %v2874
        %v2907 = vpack.c.b16 %v2875, %v2875
        %v2908 = vpack.c.b16 %v2876, %v2876
        %v2909 = vpack.c.b16 %v2877, %v2877
        %v2910 = vpack.c.b16 %v2878, %v2878
        %v2911 = vpack.c.b16 %v2879, %v2879
        %v2912 = vpack.c.b16 %v2880, %v2880
        %v2913 = vpack.c.b16 %v2881, %v2881
        %v2914 = vpack.c.b16 %v2882, %v2882
        %v2915 = vpack.c.b16 %v2883, %v2883
        %v2916 = vpack.c.b16 %v2884, %v2884
        %v2917 = vpack.c.b16 %v2885, %v2885
        %v2918 = vpack.c.b16 %v2886, %v2886
        %v2919 = vpack.c.b16 %v2887, %v2887
        %v2920 = vpack.c.b16 %v2888, %v2888
        %v2921 = vpack.c.b16 %v2889, %v2889
        %v2922 = vpack.c.b16 %v2890, %v2890
        %2955 = vst [vmem:[%s223] sm:$0xf] %v2891
        %2956 = vst [vmem:[%s223 + $0x4] sm:$0xf] %v2892
        %2957 = vst [vmem:[%s223 + $0x8] sm:$0xf] %v2893
        %2958 = vst [vmem:[%s223 + $0xc] sm:$0xf] %v2894
        %2959 = vst [vmem:[%s223 + $0x10] sm:$0xf] %v2895
        %2960 = vst [vmem:[%s223 + $0x14] sm:$0xf] %v2896
        %2961 = vst [vmem:[%s223 + $0x18] sm:$0xf] %v2897
        %2962 = vst [vmem:[%s223 + $0x1c] sm:$0xf] %v2898
        %2963 = vst [vmem:[%s223 + $0x20] sm:$0xf] %v2899
        %2964 = vst [vmem:[%s223 + $0x24] sm:$0xf] %v2900
        %2965 = vst [vmem:[%s223 + $0x28] sm:$0xf] %v2901
        %2966 = vst [vmem:[%s223 + $0x2c] sm:$0xf] %v2902
        %2967 = vst [vmem:[%s223 + $0x30] sm:$0xf] %v2903
        %2968 = vst [vmem:[%s223 + $0x34] sm:$0xf] %v2904
        %2969 = vst [vmem:[%s223 + $0x38] sm:$0xf] %v2905
        %2970 = vst [vmem:[%s223 + $0x3c] sm:$0xf] %v2906
        %2971 = vst [vmem:[%s223 + $0x40] sm:$0xf] %v2907
        %2972 = vst [vmem:[%s223 + $0x44] sm:$0xf] %v2908
        %2973 = vst [vmem:[%s223 + $0x48] sm:$0xf] %v2909
        %2974 = vst [vmem:[%s223 + $0x4c] sm:$0xf] %v2910
        %2975 = vst [vmem:[%s223 + $0x50] sm:$0xf] %v2911
        %2976 = vst [vmem:[%s223 + $0x54] sm:$0xf] %v2912
        %2977 = vst [vmem:[%s223 + $0x58] sm:$0xf] %v2913
        %2978 = vst [vmem:[%s223 + $0x5c] sm:$0xf] %v2914
        %2979 = vst [vmem:[%s223 + $0x60] sm:$0xf] %v2915
        %2980 = vst [vmem:[%s223 + $0x64] sm:$0xf] %v2916
        %2981 = vst [vmem:[%s223 + $0x68] sm:$0xf] %v2917
        %2982 = vst [vmem:[%s223 + $0x6c] sm:$0xf] %v2918
        %2983 = vst [vmem:[%s223 + $0x70] sm:$0xf] %v2919
        %2984 = vst [vmem:[%s223 + $0x74] sm:$0xf] %v2920
        %2985 = vst [vmem:[%s223 + $0x78] sm:$0xf] %v2921
        %2986 = vst [vmem:[%s223 + $0x7c] sm:$0xf] %v2922
        %v2987 = vadd.f32 %v2795, %v2796
        %v2988 = vadd.f32 %v2987, %v2797
        %v2989 = vadd.f32 %v2988, %v2798
        %v2990 = vadd.f32 %v2989, %v2799
        %v2991 = vadd.f32 %v2990, %v2800
        %v2992 = vadd.f32 %v2991, %v2801
        %v2993 = vadd.f32 %v2992, %v2802
        %v2994 = vadd.f32 %v2993, %v2803
        %v2995 = vadd.f32 %v2994, %v2804
        %v2996 = vadd.f32 %v2995, %v2805
        %v2997 = vadd.f32 %v2996, %v2806
        %v2998 = vadd.f32 %v2997, %v2807
        %v2999 = vadd.f32 %v2998, %v2808
        %v3000 = vadd.f32 %v2999, %v2809
        %v3001 = vadd.f32 %v3000, %v2810
        %v3002 = vadd.f32 %v3001, %v2811
        %v3003 = vadd.f32 %v3002, %v2812
        %v3004 = vadd.f32 %v3003, %v2813
        %v3005 = vadd.f32 %v3004, %v2814
        %v3006 = vadd.f32 %v3005, %v2815
        %v3007 = vadd.f32 %v3006, %v2816
        %v3008 = vadd.f32 %v3007, %v2817
        %v3009 = vadd.f32 %v3008, %v2818
        %v3010 = vadd.f32 %v3009, %v2819
        %v3011 = vadd.f32 %v3010, %v2820
        %v3012 = vadd.f32 %v3011, %v2821
        %v3013 = vadd.f32 %v3012, %v2822
        %v3014 = vadd.f32 %v3013, %v2823
        %v3015 = vadd.f32 %v3014, %v2824
        %v3016 = vadd.f32 %v3015, %v2825
        %v3017 = vadd.f32 %v3016, %v2826
        %v3018 = vrot.slane %v3017, 4
        %v3019 = vadd.f32 %v3017, %v3018
        %v3020 = vrot.slane %v3019, 2
        %v3021 = vadd.f32 %v3019, %v3020
        %v3022 = vrot.slane %v3021, 1
        %v3023 = vadd.f32 %v3021, %v3022
        %3024 = vst [vmem:[%s230] sm:$0x1] %v3023
        %v3025 = vmul.f32 %v2795, %v2795
        %v3026 = vmul.f32 %v2796, %v2796
        %v3027 = vmul.f32 %v2797, %v2797
        %v3028 = vmul.f32 %v2798, %v2798
        %v3029 = vmul.f32 %v2799, %v2799
        %v3030 = vmul.f32 %v2800, %v2800
        %v3031 = vmul.f32 %v2801, %v2801
        %v3032 = vmul.f32 %v2802, %v2802
        %v3033 = vmul.f32 %v2803, %v2803
        %v3034 = vmul.f32 %v2804, %v2804
        %v3035 = vmul.f32 %v2805, %v2805
        %v3036 = vmul.f32 %v2806, %v2806
        %v3037 = vmul.f32 %v2807, %v2807
        %v3038 = vmul.f32 %v2808, %v2808
        %v3039 = vmul.f32 %v2809, %v2809
        %v3040 = vmul.f32 %v2810, %v2810
        %v3041 = vmul.f32 %v2811, %v2811
        %v3042 = vmul.f32 %v2812, %v2812
        %v3043 = vmul.f32 %v2813, %v2813
        %v3044 = vmul.f32 %v2814, %v2814
        %v3045 = vmul.f32 %v2815, %v2815
        %v3046 = vmul.f32 %v2816, %v2816
        %v3047 = vmul.f32 %v2817, %v2817
        %v3048 = vmul.f32 %v2818, %v2818
        %v3049 = vmul.f32 %v2819, %v2819
        %v3050 = vmul.f32 %v2820, %v2820
        %v3051 = vmul.f32 %v2821, %v2821
        %v3052 = vmul.f32 %v2822, %v2822
        %v3053 = vmul.f32 %v2823, %v2823
        %v3054 = vmul.f32 %v2824, %v2824
        %v3055 = vmul.f32 %v2825, %v2825
        %v3056 = vmul.f32 %v2826, %v2826
        %v3057 = vadd.f32 %v3025, %v3026
        %v3058 = vadd.f32 %v3057, %v3027
        %v3059 = vadd.f32 %v3058, %v3028
        %v3060 = vadd.f32 %v3059, %v3029
        %v3061 = vadd.f32 %v3060, %v3030
        %v3062 = vadd.f32 %v3061, %v3031
        %v3063 = vadd.f32 %v3062, %v3032
        %v3064 = vadd.f32 %v3063, %v3033
        %v3065 = vadd.f32 %v3064, %v3034
        %v3066 = vadd.f32 %v3065, %v3035
        %v3067 = vadd.f32 %v3066, %v3036
        %v3068 = vadd.f32 %v3067, %v3037
        %v3069 = vadd.f32 %v3068, %v3038
        %v3070 = vadd.f32 %v3069, %v3039
        %v3071 = vadd.f32 %v3070, %v3040
        %v3072 = vadd.f32 %v3071, %v3041
        %v3073 = vadd.f32 %v3072, %v3042
        %v3074 = vadd.f32 %v3073, %v3043
        %v3075 = vadd.f32 %v3074, %v3044
        %v3076 = vadd.f32 %v3075, %v3045
        %v3077 = vadd.f32 %v3076, %v3046
        %v3078 = vadd.f32 %v3077, %v3047
        %v3079 = vadd.f32 %v3078, %v3048
        %v3080 = vadd.f32 %v3079, %v3049
        %v3081 = vadd.f32 %v3080, %v3050
        %v3082 = vadd.f32 %v3081, %v3051
        %v3083 = vadd.f32 %v3082, %v3052
        %v3084 = vadd.f32 %v3083, %v3053
        %v3085 = vadd.f32 %v3084, %v3054
        %v3086 = vadd.f32 %v3085, %v3055
        %v3087 = vadd.f32 %v3086, %v3056
        %v3088 = vrot.slane %v3087, 4
        %v3089 = vadd.f32 %v3087, %v3088
        %v3090 = vrot.slane %v3089, 2
        %v3091 = vadd.f32 %v3089, %v3090
        %v3092 = vrot.slane %v3091, 1
        %v3093 = vadd.f32 %v3091, %v3092
        %3094 = vst [vmem:[%s230 + $0x1] sm:$0x1] %v3093
        %s3095 = sand.u32 %s94, 1
        %s3096 = scalar_lea.sflag [#allocation4], %s3095
        %s3097 = sand.u32 %s94, 1
        %s3098 = smul.addr %s3097, 128
        %s3099 = scalar_lea.vmem [#allocation7], %s3098
        %s3100 = sand.u32 %s122, 1
        %s3101 = scalar_lea.sflag [#allocation9], %s3100
        %s3102 = sand.u32 %s122, 1
        %s3103 = smul.addr %s3102, 2
        %s3104 = scalar_lea.vmem [#allocation8], %s3103
        // Predicated region
        $region37: #{tpu_custom_call.1} parent=27 // pred_check
          %p3105 = pneg %p104
        $region38: #{tpu_custom_call.1} parent=27 // pred_check_branch
          %3107 = sbr.rel (%p3105) target = $region40
        $region39: #{tpu_custom_call.1} parent=27 // pred_region
          %s3108 = sadd.s32 %s29, %s30
          %s3109 = smul.u32 32, %s3108
          %s3111 = ssub.s32 2048, 2048
          %3112 = vsyncadd %s3096, %s3111
          %s3113 = smul.addr %s3109, 64
          %s3114 = scalar_lea.hbm %s2, %s3113
          %s3115 = sshll.u32 %s3099, 4
          %s3116 = int_to_ptr.vmem [resolvable:$true] %s3115
          %3121 = dma.vmem_to_hbm [thread:$0]  %s3116, 2048, %s3114, %s3096, 64, 64, 4
        $region40: #{tpu_custom_call.1} parent=27 // pred_fallthru
          _
        // Predicated region
        $region41: #{tpu_custom_call.1} parent=27 // pred_check
          %p3122 = pneg %p132
        $region42: #{tpu_custom_call.1} parent=27 // pred_check_branch
          %3124 = sbr.rel (%p3122) target = $region44
        $region43: #{tpu_custom_call.1} parent=27 // pred_region
          %s3125 = sadd.s32 %s29, %s30
          %s3127 = ssub.s32 32, 32
          %3128 = vsyncadd %s3101, %s3127
          %s3129 = smul.addr %s3125, 32
          %s3130 = scalar_lea.hbm %s3, %s3129
          %s3132 = sshll.u32 %s3104, 4
          %s3133 = int_to_ptr.vmem [resolvable:$true] %s3132
          %3135 = dma.vmem_to_hbm [thread:$0]  %s3133, 32, %s3130, %s3101
        $region44: #{tpu_custom_call.1} parent=27 // pred_fallthru
          _
      $region28: #{tpu_custom_call.1} parent=5 // pred_fallthru
        _
      %p3136 = scmp.le.s32.totalorder 2, %s20
      // Predicated region
      $region45: #{tpu_custom_call.1} parent=5 // pred_check
        %p3137 = pneg %p3136
      $region46: #{tpu_custom_call.1} parent=5 // pred_check_branch
        %3139 = sbr.rel (%p3137) target = $region48
      $region47: #{tpu_custom_call.1} parent=5 // pred_region
        %s3140 = ssub.s32 %s20, 2
        // Predicated region
        $region49: #{tpu_custom_call.1} parent=47 // pred_check
          %p3141 = pneg %p110
        $region50: #{tpu_custom_call.1} parent=47 // pred_check_branch
          %3143 = sbr.rel (%p3141) target = $region52
        $region51: #{tpu_custom_call.1} parent=47 // pred_region
          %s3144 = sand.u32 %s95, 1
          %s3145 = scalar_lea.sflag [#allocation4], %s3144
          %s3146 = sand.u32 %s95, 1
          %s3147 = smul.addr %s3146, 128
          %s3148 = scalar_lea.vmem [#allocation7], %s3147
          %3149 = dma.done %s3145, 2048
        $region52: #{tpu_custom_call.1} parent=47 // pred_fallthru
          _
        // Predicated region
        $region53: #{tpu_custom_call.1} parent=47 // pred_check
          %p3150 = pneg %p138
        $region54: #{tpu_custom_call.1} parent=47 // pred_check_branch
          %3152 = sbr.rel (%p3150) target = $region56
        $region55: #{tpu_custom_call.1} parent=47 // pred_region
          %s3153 = sand.u32 %s123, 1
          %s3154 = scalar_lea.sflag [#allocation9], %s3153
          %s3155 = sand.u32 %s123, 1
          %s3156 = smul.addr %s3155, 2
          %s3157 = scalar_lea.vmem [#allocation8], %s3156
          %3158 = dma.done %s3154, 32
        $region56: #{tpu_custom_call.1} parent=47 // pred_fallthru
          _
      $region48: #{tpu_custom_call.1} parent=5 // pred_fallthru
        _
    $region6: #{tpu_custom_call.1} parent=1 // loop_footer
      %s24 = sadd.s32 1, %s20
    $region7: #{tpu_custom_call.1} parent=1 // loop_footer_branch
      %19 = sbr.rel target = $region3
    $region8: #{tpu_custom_call.1} parent=1 // loop_exit
      _
    %3159 = vsyncpa [#allocation3], 1
    %s3160 = scalar_lea.sflag [#allocation3], 1
    %3161 = vsyncpa %s3160, 1
    %3162 = vsyncpa [#allocation6], 1
    %3163 = vsyncpa [#allocation4], 1
    %s3164 = scalar_lea.sflag [#allocation4], 1
    %3165 = vsyncpa %s3164, 1
    %3166 = vsyncpa [#allocation9], 1
    %s3167 = scalar_lea.sflag [#allocation9], 1
    %3168 = vsyncpa %s3167, 1

</llo_original>
